<compile_context>
chip_gen: v7x
topology: tpu7x:2x2x1
jax: 0.10.0
libtpu: 0.0.40
codegen_flags: <defaults>
</compile_context>

<pallas_src>
import functools

import jax
import jax.numpy as jnp
from jax import lax
from jax.experimental import pallas as pl
from jax.experimental.pallas import tpu as pltpu


_VMEM = pl.BlockSpec(memory_space=pltpu.MemorySpace.VMEM)
_BN_EPS = 1e-3


# ----------------------------------------------------------------------------
# In-kernel helpers
# ----------------------------------------------------------------------------
def _bn_relu(acc, gamma, beta, eps):
    """Training-mode BatchNorm (biased variance over rows), folded FMA, ReLU.

    acc:   (rows, C) float32 conv output
    gamma: (1, C) float32,  beta: (1, C) float32
    """
    mean = jnp.mean(acc, axis=0, keepdims=True)
    var = jnp.mean(jnp.square(acc - mean), axis=0, keepdims=True)
    scale = gamma * lax.rsqrt(var + eps)          # rsqrt -> EUP (free slot)
    bias = beta - mean * scale
    return jnp.maximum(acc * scale + bias, 0.0)   # single FMA + max epilogue


def _conv_kxk_acc(x_ref, w_ref, pad_ref, acc_ref, *, K, H, W):
    """KxK stride-1 'same' conv: in-kernel zero pad + per-ky im2col matmuls.

    x_ref:   (N, H, W, Cin) fp32
    w_ref:   (K, K*Cin, Cout) bf16
    pad_ref: (N, H+K-1, W+K-1, Cin) fp32 VMEM scratch
    acc_ref: (N*H*W, Cout) fp32 VMEM scratch accumulator
    """
    N, _, _, Cin = x_ref.shape
    rows = N * H * W
    P = (K - 1) // 2

    pad_ref[...] = jnp.zeros_like(pad_ref)
    pad_ref[:, P:P + H, P:P + W, :] = x_ref[...]
    acc_ref[...] = jnp.zeros_like(acc_ref)

    for ky in range(K):
        # im2col row for this ky: (rows, K*Cin) bf16 -> contraction depth K*Cin.
        patch = jnp.concatenate(
            [pad_ref[:, ky:ky + H, kx:kx + W, :]
                 .reshape(rows, Cin).astype(jnp.bfloat16)
             for kx in range(K)],
            axis=-1)
        acc_ref[...] += jnp.dot(patch, w_ref[ky],
                                preferred_element_type=jnp.float32)
    return acc_ref[...]


# ----------------------------------------------------------------------------
# Pallas kernels
# ----------------------------------------------------------------------------
def _fused_1x1_pool_kernel(x_ref, w123_ref, g123_ref, be123_ref,
                           wpool_ref, gpool_ref, bepool_ref,
                           b1_ref, b5_ref, b3_ref, bpool_ref,
                           pad_ref, *, H, W, eps):
    """Fused: [branch1x1 | branch5x5_1 | branch3x3dbl_1] 1x1 convs as one
    lane-dense matmul + (avg_pool3x3 -> branch_pool 1x1 conv), all BN+ReLU."""
    N, _, _, Cin = x_ref.shape
    rows = N * H * W
    c1 = b1_ref.shape[-1]
    c5 = b5_ref.shape[-1]
    c3 = b3_ref.shape[-1]

    x = x_ref[...]                                             # fp32
    xf = x.reshape(rows, Cin).astype(jnp.bfloat16)

    # One matmul for the three 1x1 branches that share x (Cout = 64+48+64).
    y = jnp.dot(xf, w123_ref[...], preferred_element_type=jnp.float32)
    # BN is per-channel, so stats on the fused tensor == per-branch stats.
    y = _bn_relu(y, g123_ref[...], be123_ref[...], eps)
    b1_ref[...] = y[:, :c1].reshape(N, H, W, c1)
    b5_ref[...] = y[:, c1:c1 + c5].reshape(N, H, W, c5)
    b3_ref[...] = y[:, c1 + c5:c1 + c5 + c3].reshape(N, H, W, c3)

    # 3x3 avg pool (stride 1, pad 1, count_include_pad=True -> divisor 9),
    # padded in VMEM scratch, fused with the branch_pool 1x1 conv.
    pad_ref[...] = jnp.zeros_like(pad_ref)
    pad_ref[:, 1:1 + H, 1:1 + W, :] = x
    pooled = jnp.zeros((rows, Cin), jnp.float32)
    for ky in range(3):
        for kx in range(3):
            pooled = pooled + pad_ref[:, ky:ky + H, kx:kx + W, :].reshape(rows, Cin)
    pooled = pooled * (1.0 / 9.0)

    yp = jnp.dot(pooled.astype(jnp.bfloat16), wpool_ref[...],
                 preferred_element_type=jnp.float32)
    yp = _bn_relu(yp, gpool_ref[...], bepool_ref[...], eps)
    bpool_ref[...] = yp.reshape(N, H, W, bpool_ref.shape[-1])


def _conv_bn_relu_kernel(x_ref, w_ref, g_ref, be_ref, o_ref, pad_ref, acc_ref,
                         *, K, H, W, eps):
    """KxK conv (stride 1, same padding) + BN + ReLU."""
    N = x_ref.shape[0]
    Cout = o_ref.shape[-1]
    acc = _conv_kxk_acc(x_ref, w_ref, pad_ref, acc_ref, K=K, H=H, W=W)
    y = _bn_relu(acc, g_ref[...], be_ref[...], eps)
    o_ref[...] = y.reshape(N, H, W, Cout)


def _conv_bn_relu_concat_kernel(x_ref, w_ref, g_ref, be_ref,
                                b1_ref, b5_ref, bpool_ref,
                                o_ref, pad_ref, acc_ref, *, K, H, W, eps):
    """Last 3x3 conv + BN + ReLU, then assemble the final channel concat
    [b1 | b5 | b3 | pool] with one lane-dense full-width store."""
    N = x_ref.shape[0]
    c3 = acc_ref.shape[-1]
    acc = _conv_kxk_acc(x_ref, w_ref, pad_ref, acc_ref, K=K, H=H, W=W)
    y = _bn_relu(acc, g_ref[...], be_ref[...], eps).reshape(N, H, W, c3)
    o_ref[...] = jnp.concatenate(
        [b1_ref[...], b5_ref[...], y, bpool_ref[...]], axis=-1)


# ----------------------------------------------------------------------------
# Wrappers (pallas_call plumbing; weight repacking is trace-time constant work)
# ----------------------------------------------------------------------------
def fused_input_branches(x, p1, p5, p3, pp):
    N, H, W, Cin = x.shape
    c1 = p1["w"].shape[-1]
    c5 = p5["w"].shape[-1]
    c3 = p3["w"].shape[-1]
    cp = pp["w"].shape[-1]

    w123 = jnp.concatenate(
        [p1["w"].reshape(Cin, c1), p5["w"].reshape(Cin, c5),
         p3["w"].reshape(Cin, c3)], axis=-1).astype(jnp.bfloat16)
    g123 = jnp.concatenate([p1["gamma"], p5["gamma"], p3["gamma"]]).reshape(1, -1)
    be123 = jnp.concatenate([p1["beta"], p5["beta"], p3["beta"]]).reshape(1, -1)
    wpool = pp["w"].reshape(Cin, cp).astype(jnp.bfloat16)
    gpool = pp["gamma"].reshape(1, cp)
    bepool = pp["beta"].reshape(1, cp)

    kern = functools.partial(_fused_1x1_pool_kernel, H=H, W=W, eps=_BN_EPS)
    out_shape = (
        jax.ShapeDtypeStruct((N, H, W, c1), jnp.float32),
        jax.ShapeDtypeStruct((N, H, W, c5), jnp.float32),
        jax.ShapeDtypeStruct((N, H, W, c3), jnp.float32),
        jax.ShapeDtypeStruct((N, H, W, cp), jnp.float32),
    )
    return pl.pallas_call(
        kern,
        out_shape=out_shape,
        in_specs=[_VMEM] * 7,
        out_specs=(_VMEM,) * 4,
        scratch_shapes=[pltpu.VMEM((N, H + 2, W + 2, Cin), jnp.float32)],
    )(x, w123, g123, be123, wpool, gpool, bepool)


def conv_bn_relu(x, p):
    N, H, W, Cin = x.shape
    K = p["k"]
    Cout = p["w"].shape[-1]
    w = p["w"].reshape(K, K * Cin, Cout).astype(jnp.bfloat16)
    kern = functools.partial(_conv_bn_relu_kernel, K=K, H=H, W=W, eps=_BN_EPS)
    return pl.pallas_call(
        kern,
        out_shape=jax.ShapeDtypeStruct((N, H, W, Cout), jnp.float32),
        in_specs=[_VMEM] * 4,
        out_specs=_VMEM,
        scratch_shapes=[
            pltpu.VMEM((N, H + K - 1, W + K - 1, Cin), jnp.float32),
            pltpu.VMEM((N * H * W, Cout), jnp.float32),
        ],
    )(x, w, p["gamma"].reshape(1, Cout), p["beta"].reshape(1, Cout))


def conv_bn_relu_concat(x, p, b1, b5, bpool):
    N, H, W, Cin = x.shape
    K = p["k"]
    Cout = p["w"].shape[-1]
    c_total = b1.shape[-1] + b5.shape[-1] + Cout + bpool.shape[-1]
    w = p["w"].reshape(K, K * Cin, Cout).astype(jnp.bfloat16)
    kern = functools.partial(_conv_bn_relu_concat_kernel, K=K, H=H, W=W,
                             eps=_BN_EPS)
    return pl.pallas_call(
        kern,
        out_shape=jax.ShapeDtypeStruct((N, H, W, c_total), jnp.float32),
        in_specs=[_VMEM] * 7,
        out_specs=_VMEM,
        scratch_shapes=[
            pltpu.VMEM((N, H + K - 1, W + K - 1, Cin), jnp.float32),
            pltpu.VMEM((N * H * W, Cout), jnp.float32),
        ],
    )(x, w, p["gamma"].reshape(1, Cout), p["beta"].reshape(1, Cout),
      b1, b5, bpool)


# ----------------------------------------------------------------------------
# InceptionA module (deterministic synthetic parameters)
# ----------------------------------------------------------------------------
def _init_basic_conv(key, in_ch, out_ch, k):
    kw, kg, kb = jax.random.split(key, 3)
    w = 0.1 * jax.random.normal(kw, (k, k, in_ch, out_ch), jnp.float32)  # HWIO
    gamma = 1.0 + 0.1 * jax.random.normal(kg, (out_ch,), jnp.float32)
    beta = 0.1 * jax.random.normal(kb, (out_ch,), jnp.float32)
    return dict(w=w, gamma=gamma, beta=beta, k=k, pad=(k - 1) // 2)


def init_inception_a(key, in_channels, pool_features):
    keys = jax.random.split(key, 7)
    return dict(
        branch1x1=_init_basic_conv(keys[0], in_channels, 64, 1),
        branch5x5_1=_init_basic_conv(keys[1], in_channels, 48, 1),
        branch5x5_2=_init_basic_conv(keys[2], 48, 64, 5),
        branch3x3dbl_1=_init_basic_conv(keys[3], in_channels, 64, 1),
        branch3x3dbl_2=_init_basic_conv(keys[4], 64, 96, 3),
        branch3x3dbl_3=_init_basic_conv(keys[5], 96, 96, 3),
        branch_pool=_init_basic_conv(keys[6], in_channels, pool_features, 1),
    )


def inception_a_forward(params, x_nchw):
    # NCHW in/out (PyTorch convention); NHWC inside the kernels.
    x = jnp.transpose(x_nchw, (0, 2, 3, 1)).astype(jnp.float32)

    # Kernel 1: fused 1x1s + avg-pool + pool 1x1 (reads x once).
    b1, b5, b3, bpool = fused_input_branches(
        x, params["branch1x1"], params["branch5x5_1"],
        params["branch3x3dbl_1"], params["branch_pool"])

    # Kernel 2: 5x5 conv.   Kernel 3: first 3x3 conv.
    b5 = conv_bn_relu(b5, params["branch5x5_2"])
    b3 = conv_bn_relu(b3, params["branch3x3dbl_2"])

    # Kernel 4: second 3x3 conv + final channel concat [b1|b5|b3|pool].
    out = conv_bn_relu_concat(b3, params["branch3x3dbl_3"], b1, b5, bpool)

    return jnp.transpose(out, (0, 3, 1, 2))  # back to NCHW


# ----------------------------------------------------------------------------
# Pure-JAX references for numerical sanity checks
# ----------------------------------------------------------------------------
def _ref_basic(p, x, *, quantize):
    w = p["w"]
    if quantize:  # mirror the kernel's bf16 MXU operands + fp32 accumulation
        x = x.astype(jnp.bfloat16).astype(jnp.float32)
        w = w.astype(jnp.bfloat16).astype(jnp.float32)
    y = lax.conv_general_dilated(
        x, w, window_strides=(1, 1), padding=[(p["pad"], p["pad"])] * 2,
        dimension_numbers=("NHWC", "HWIO", "NHWC"),
        preferred_element_type=jnp.float32, precision=lax.Precision.HIGHEST)
    mean = jnp.mean(y, axis=(0, 1, 2))
    var = jnp.mean(jnp.square(y - mean), axis=(0, 1, 2))
    yhat = (y - mean) * lax.rsqrt(var + _BN_EPS)
    return jnp.maximum(yhat * p["gamma"] + p["beta"], 0.0)


def _ref_forward(params, x_nchw, *, quantize):
    x = jnp.transpose(x_nchw, (0, 2, 3, 1)).astype(jnp.float32)
    rb = functools.partial(_ref_basic, quantize=quantize)
    b1 = rb(params["branch1x1"], x)
    b5 = rb(params["branch5x5_2"], rb(params["branch5x5_1"], x))
    b3 = rb(params["branch3x3dbl_3"],
            rb(params["branch3x3dbl_2"], rb(params["branch3x3dbl_1"], x)))
    bp = lax.reduce_window(x, 0.0, lax.add, (1, 3, 3, 1), (1, 1, 1, 1),
                           [(0, 0), (1, 1), (1, 1), (0, 0)]) / 9.0
    bp = rb(params["branch_pool"], bp)
    out = jnp.concatenate([b1, b5, b3, bp], axis=-1)
    return jnp.transpose(out, (0, 3, 1, 2))


# ----------------------------------------------------------------------------
if __name__ == "__main__":
    key = jax.random.PRNGKey(0)
    k_params, k_x = jax.random.split(key)

    in_channels, pool_features = 4, 8
    N, H, W = 2, 16, 16

    params = init_inception_a(k_params, in_channels, pool_features)
    x = jax.random.normal(k_x, (N, in_channels, H, W), jnp.float32)  # NCHW

    out = jax.block_until_ready(inception_a_forward(params, x))
    assert out.shape == (N, 64 + 64 + 96 + pool_features, H, W), out.shape
    assert bool(jnp.all(jnp.isfinite(out)))

    # Matched-precision reference (bf16 matmul operands, fp32 accumulation):
    # mirrors the kernel's MXU path, so the tolerance can be tight.
    ref_bf16 = jax.block_until_ready(_ref_forward(params, x, quantize=True))
    err_b = float(jnp.max(jnp.abs(out - ref_bf16)))
    assert jnp.allclose(out, ref_bf16, rtol=5e-3, atol=5e-3), err_b

    # Strict fp32 reference (PyTorch semantics): the bf16 MXU operands
    # introduce a small, bounded deviation.
    ref_f32 = jax.block_until_ready(_ref_forward(params, x, quantize=False))
    err_f = float(jnp.max(jnp.abs(out - ref_f32)))
    assert jnp.allclose(out, ref_f32, rtol=6e-2, atol=6e-2), err_f

    print("KERNEL_OK")
</pallas_src>

<mosaic_0001>
module attributes {stable_mosaic.version = 11 : i64} {
  func.func @_fused_1x1_pool_kernel(%arg0: memref<2x16x16x4xf32, #tpu.memory_space<vmem>>, %arg1: memref<4x176xbf16, #tpu.memory_space<vmem>>, %arg2: memref<1x176xf32, #tpu.memory_space<vmem>>, %arg3: memref<1x176xf32, #tpu.memory_space<vmem>>, %arg4: memref<4x8xbf16, #tpu.memory_space<vmem>>, %arg5: memref<1x8xf32, #tpu.memory_space<vmem>>, %arg6: memref<1x8xf32, #tpu.memory_space<vmem>>, %arg7: memref<2x16x16x64xf32, #tpu.memory_space<vmem>>, %arg8: memref<2x16x16x48xf32, #tpu.memory_space<vmem>>, %arg9: memref<2x16x16x64xf32, #tpu.memory_space<vmem>>, %arg10: memref<2x16x16x8xf32, #tpu.memory_space<vmem>>, %arg11: memref<2x18x18x4xf32, #tpu.memory_space<vmem>>) attributes {dimension_semantics = [], scalar_prefetch = 0 : i64, scratch_operands = 1 : i64, tpu.core_type = #tpu.core_type<tc>} {
    %c0 = arith.constant 0 : index
    %c0_0 = arith.constant 0 : index
    %c0_1 = arith.constant 0 : index
    %c0_2 = arith.constant 0 : index
    %0 = vector.load %arg0[%c0, %c0_0, %c0_1, %c0_2] : memref<2x16x16x4xf32, #tpu.memory_space<vmem>>, vector<2x16x16x4xf32>
    %1 = vector.shape_cast %0 : vector<2x16x16x4xf32> to vector<512x4xf32>
    %2 = arith.truncf %1 : vector<512x4xf32> to vector<512x4xbf16>
    %c0_3 = arith.constant 0 : index
    %c0_4 = arith.constant 0 : index
    %3 = vector.load %arg1[%c0_3, %c0_4] : memref<4x176xbf16, #tpu.memory_space<vmem>>, vector<4x176xbf16>
    %cst = arith.constant dense<0.000000e+00> : vector<512x176xf32>
    %4 = tpu.matmul %2, %3, %cst {dimension_numbers = #tpu.dot_dimension_numbers<[1], [0], [0], [1], [0, 0, 1, 1], [], []>} : vector<512x4xbf16>, vector<4x176xbf16>, vector<512x176xf32> -> vector<512x176xf32>
    %c0_5 = arith.constant 0 : index
    %c0_6 = arith.constant 0 : index
    %5 = vector.load %arg2[%c0_5, %c0_6] : memref<1x176xf32, #tpu.memory_space<vmem>>, vector<1x176xf32>
    %c0_7 = arith.constant 0 : index
    %c0_8 = arith.constant 0 : index
    %6 = vector.load %arg3[%c0_7, %c0_8] : memref<1x176xf32, #tpu.memory_space<vmem>>, vector<1x176xf32>
    %cst_9 = arith.constant dense<0.000000e+00> : vector<176xf32>
    %7 = vector.multi_reduction <add>, %4, %cst_9 [0] : vector<512x176xf32> to vector<176xf32>
    %8 = vector.shape_cast %7 : vector<176xf32> to vector<1x176xf32>
    %cst_10 = arith.constant 5.120000e+02 : f32
    %9 = vector.broadcast %cst_10 : f32 to vector<1x176xf32>
    %10 = arith.divf %8, %9 : vector<1x176xf32>
    %11 = vector.broadcast %10 : vector<1x176xf32> to vector<512x176xf32>
    %12 = arith.subf %4, %11 : vector<512x176xf32>
    %13 = arith.mulf %12, %12 : vector<512x176xf32>
    %cst_11 = arith.constant dense<0.000000e+00> : vector<176xf32>
    %14 = vector.multi_reduction <add>, %13, %cst_11 [0] : vector<512x176xf32> to vector<176xf32>
    %15 = vector.shape_cast %14 : vector<176xf32> to vector<1x176xf32>
    %cst_12 = arith.constant 5.120000e+02 : f32
    %16 = vector.broadcast %cst_12 : f32 to vector<1x176xf32>
    %17 = arith.divf %15, %16 : vector<1x176xf32>
    %cst_13 = arith.constant 1.000000e-03 : f32
    %18 = vector.broadcast %cst_13 : f32 to vector<1x176xf32>
    %19 = arith.addf %17, %18 : vector<1x176xf32>
    %20 = math.rsqrt %19 : vector<1x176xf32>
    %21 = arith.mulf %5, %20 : vector<1x176xf32>
    %22 = arith.mulf %10, %21 : vector<1x176xf32>
    %23 = arith.subf %6, %22 : vector<1x176xf32>
    %24 = vector.broadcast %21 : vector<1x176xf32> to vector<512x176xf32>
    %25 = arith.mulf %4, %24 : vector<512x176xf32>
    %26 = vector.broadcast %23 : vector<1x176xf32> to vector<512x176xf32>
    %27 = arith.addf %25, %26 : vector<512x176xf32>
    %cst_14 = arith.constant 0.000000e+00 : f32
    %28 = vector.broadcast %cst_14 : f32 to vector<512x176xf32>
    %29 = arith.maximumf %27, %28 : vector<512x176xf32>
    %30 = vector.extract_strided_slice %29 {offsets = [0, 0], sizes = [512, 64], strides = [1, 1]} : vector<512x176xf32> to vector<512x64xf32>
    %31 = vector.shape_cast %30 : vector<512x64xf32> to vector<2x16x16x64xf32>
    %c0_15 = arith.constant 0 : index
    %c0_16 = arith.constant 0 : index
    %c0_17 = arith.constant 0 : index
    %c0_18 = arith.constant 0 : index
    %32 = vector.load %arg7[%c0_15, %c0_16, %c0_17, %c0_18] : memref<2x16x16x64xf32, #tpu.memory_space<vmem>>, vector<2x16x16x64xf32>
    tpu.vector_store %arg7[%c0_15, %c0_16, %c0_17, %c0_18], %31 {strides = array<i32>} : memref<2x16x16x64xf32, #tpu.memory_space<vmem>>, vector<2x16x16x64xf32>,
    %33 = vector.extract_strided_slice %29 {offsets = [0, 64], sizes = [512, 48], strides = [1, 1]} : vector<512x176xf32> to vector<512x48xf32>
    %34 = vector.shape_cast %33 : vector<512x48xf32> to vector<2x16x16x48xf32>
    %c0_19 = arith.constant 0 : index
    %c0_20 = arith.constant 0 : index
    %c0_21 = arith.constant 0 : index
    %c0_22 = arith.constant 0 : index
    %35 = vector.load %arg8[%c0_19, %c0_20, %c0_21, %c0_22] : memref<2x16x16x48xf32, #tpu.memory_space<vmem>>, vector<2x16x16x48xf32>
    tpu.vector_store %arg8[%c0_19, %c0_20, %c0_21, %c0_22], %34 {strides = array<i32>} : memref<2x16x16x48xf32, #tpu.memory_space<vmem>>, vector<2x16x16x48xf32>,
    %36 = vector.extract_strided_slice %29 {offsets = [0, 112], sizes = [512, 64], strides = [1, 1]} : vector<512x176xf32> to vector<512x64xf32>
    %37 = vector.shape_cast %36 : vector<512x64xf32> to vector<2x16x16x64xf32>
    %c0_23 = arith.constant 0 : index
    %c0_24 = arith.constant 0 : index
    %c0_25 = arith.constant 0 : index
    %c0_26 = arith.constant 0 : index
    %38 = vector.load %arg9[%c0_23, %c0_24, %c0_25, %c0_26] : memref<2x16x16x64xf32, #tpu.memory_space<vmem>>, vector<2x16x16x64xf32>
    tpu.vector_store %arg9[%c0_23, %c0_24, %c0_25, %c0_26], %37 {strides = array<i32>} : memref<2x16x16x64xf32, #tpu.memory_space<vmem>>, vector<2x16x16x64xf32>,
    %cst_27 = arith.constant 0.000000e+00 : f32
    %39 = vector.broadcast %cst_27 : f32 to vector<2x18x18x4xf32>
    %c0_28 = arith.constant 0 : index
    %c0_29 = arith.constant 0 : index
    %c0_30 = arith.constant 0 : index
    %c0_31 = arith.constant 0 : index
    %40 = vector.load %arg11[%c0_28, %c0_29, %c0_30, %c0_31] : memref<2x18x18x4xf32, #tpu.memory_space<vmem>>, vector<2x18x18x4xf32>
    tpu.vector_store %arg11[%c0_28, %c0_29, %c0_30, %c0_31], %39 {strides = array<i32>} : memref<2x18x18x4xf32, #tpu.memory_space<vmem>>, vector<2x18x18x4xf32>,
    %c0_32 = arith.constant 0 : index
    %c1 = arith.constant 1 : index
    %c1_33 = arith.constant 1 : index
    %c0_34 = arith.constant 0 : index
    %41 = vector.load %arg11[%c0_32, %c1, %c1_33, %c0_34] : memref<2x18x18x4xf32, #tpu.memory_space<vmem>>, vector<2x16x16x4xf32>
    tpu.vector_store %arg11[%c0_32, %c1, %c1_33, %c0_34], %0 {strides = array<i32>} : memref<2x18x18x4xf32, #tpu.memory_space<vmem>>, vector<2x16x16x4xf32>,
    %cst_35 = arith.constant 0.000000e+00 : f32
    %42 = vector.broadcast %cst_35 : f32 to vector<512x4xf32>
    %c0_36 = arith.constant 0 : index
    %c0_37 = arith.constant 0 : index
    %c0_38 = arith.constant 0 : index
    %c0_39 = arith.constant 0 : index
    %43 = vector.load %arg11[%c0_36, %c0_37, %c0_38, %c0_39] : memref<2x18x18x4xf32, #tpu.memory_space<vmem>>, vector<2x16x16x4xf32>
    %44 = vector.shape_cast %43 : vector<2x16x16x4xf32> to vector<512x4xf32>
    %45 = arith.addf %42, %44 : vector<512x4xf32>
    %c0_40 = arith.constant 0 : index
    %c0_41 = arith.constant 0 : index
    %c1_42 = arith.constant 1 : index
    %c0_43 = arith.constant 0 : index
    %46 = vector.load %arg11[%c0_40, %c0_41, %c1_42, %c0_43] : memref<2x18x18x4xf32, #tpu.memory_space<vmem>>, vector<2x16x16x4xf32>
    %47 = vector.shape_cast %46 : vector<2x16x16x4xf32> to vector<512x4xf32>
    %48 = arith.addf %45, %47 : vector<512x4xf32>
    %c0_44 = arith.constant 0 : index
    %c0_45 = arith.constant 0 : index
    %c2 = arith.constant 2 : index
    %c0_46 = arith.constant 0 : index
    %49 = vector.load %arg11[%c0_44, %c0_45, %c2, %c0_46] : memref<2x18x18x4xf32, #tpu.memory_space<vmem>>, vector<2x16x16x4xf32>
    %50 = vector.shape_cast %49 : vector<2x16x16x4xf32> to vector<512x4xf32>
    %51 = arith.addf %48, %50 : vector<512x4xf32>
    %c0_47 = arith.constant 0 : index
    %c1_48 = arith.constant 1 : index
    %c0_49 = arith.constant 0 : index
    %c0_50 = arith.constant 0 : index
    %52 = vector.load %arg11[%c0_47, %c1_48, %c0_49, %c0_50] : memref<2x18x18x4xf32, #tpu.memory_space<vmem>>, vector<2x16x16x4xf32>
    %53 = vector.shape_cast %52 : vector<2x16x16x4xf32> to vector<512x4xf32>
    %54 = arith.addf %51, %53 : vector<512x4xf32>
    %c0_51 = arith.constant 0 : index
    %c1_52 = arith.constant 1 : index
    %c1_53 = arith.constant 1 : index
    %c0_54 = arith.constant 0 : index
    %55 = vector.load %arg11[%c0_51, %c1_52, %c1_53, %c0_54] : memref<2x18x18x4xf32, #tpu.memory_space<vmem>>, vector<2x16x16x4xf32>
    %56 = vector.shape_cast %55 : vector<2x16x16x4xf32> to vector<512x4xf32>
    %57 = arith.addf %54, %56 : vector<512x4xf32>
    %c0_55 = arith.constant 0 : index
    %c1_56 = arith.constant 1 : index
    %c2_57 = arith.constant 2 : index
    %c0_58 = arith.constant 0 : index
    %58 = vector.load %arg11[%c0_55, %c1_56, %c2_57, %c0_58] : memref<2x18x18x4xf32, #tpu.memory_space<vmem>>, vector<2x16x16x4xf32>
    %59 = vector.shape_cast %58 : vector<2x16x16x4xf32> to vector<512x4xf32>
    %60 = arith.addf %57, %59 : vector<512x4xf32>
    %c0_59 = arith.constant 0 : index
    %c2_60 = arith.constant 2 : index
    %c0_61 = arith.constant 0 : index
    %c0_62 = arith.constant 0 : index
    %61 = vector.load %arg11[%c0_59, %c2_60, %c0_61, %c0_62] : memref<2x18x18x4xf32, #tpu.memory_space<vmem>>, vector<2x16x16x4xf32>
    %62 = vector.shape_cast %61 : vector<2x16x16x4xf32> to vector<512x4xf32>
    %63 = arith.addf %60, %62 : vector<512x4xf32>
    %c0_63 = arith.constant 0 : index
    %c2_64 = arith.constant 2 : index
    %c1_65 = arith.constant 1 : index
    %c0_66 = arith.constant 0 : index
    %64 = vector.load %arg11[%c0_63, %c2_64, %c1_65, %c0_66] : memref<2x18x18x4xf32, #tpu.memory_space<vmem>>, vector<2x16x16x4xf32>
    %65 = vector.shape_cast %64 : vector<2x16x16x4xf32> to vector<512x4xf32>
    %66 = arith.addf %63, %65 : vector<512x4xf32>
    %c0_67 = arith.constant 0 : index
    %c2_68 = arith.constant 2 : index
    %c2_69 = arith.constant 2 : index
    %c0_70 = arith.constant 0 : index
    %67 = vector.load %arg11[%c0_67, %c2_68, %c2_69, %c0_70] : memref<2x18x18x4xf32, #tpu.memory_space<vmem>>, vector<2x16x16x4xf32>
    %68 = vector.shape_cast %67 : vector<2x16x16x4xf32> to vector<512x4xf32>
    %69 = arith.addf %66, %68 : vector<512x4xf32>
    %cst_71 = arith.constant 0.111111112 : f32
    %70 = vector.broadcast %cst_71 : f32 to vector<512x4xf32>
    %71 = arith.mulf %69, %70 : vector<512x4xf32>
    %72 = arith.truncf %71 : vector<512x4xf32> to vector<512x4xbf16>
    %c0_72 = arith.constant 0 : index
    %c0_73 = arith.constant 0 : index
    %73 = vector.load %arg4[%c0_72, %c0_73] : memref<4x8xbf16, #tpu.memory_space<vmem>>, vector<4x8xbf16>
    %cst_74 = arith.constant dense<0.000000e+00> : vector<512x8xf32>
    %74 = tpu.matmul %72, %73, %cst_74 {dimension_numbers = #tpu.dot_dimension_numbers<[1], [0], [0], [1], [0, 0, 1, 1], [], []>} : vector<512x4xbf16>, vector<4x8xbf16>, vector<512x8xf32> -> vector<512x8xf32>
    %c0_75 = arith.constant 0 : index
    %c0_76 = arith.constant 0 : index
    %75 = vector.load %arg5[%c0_75, %c0_76] : memref<1x8xf32, #tpu.memory_space<vmem>>, vector<1x8xf32>
    %c0_77 = arith.constant 0 : index
    %c0_78 = arith.constant 0 : index
    %76 = vector.load %arg6[%c0_77, %c0_78] : memref<1x8xf32, #tpu.memory_space<vmem>>, vector<1x8xf32>
    %cst_79 = arith.constant dense<0.000000e+00> : vector<8xf32>
    %77 = vector.multi_reduction <add>, %74, %cst_79 [0] : vector<512x8xf32> to vector<8xf32>
    %78 = vector.shape_cast %77 : vector<8xf32> to vector<1x8xf32>
    %cst_80 = arith.constant 5.120000e+02 : f32
    %79 = vector.broadcast %cst_80 : f32 to vector<1x8xf32>
    %80 = arith.divf %78, %79 : vector<1x8xf32>
    %81 = vector.broadcast %80 : vector<1x8xf32> to vector<512x8xf32>
    %82 = arith.subf %74, %81 : vector<512x8xf32>
    %83 = arith.mulf %82, %82 : vector<512x8xf32>
    %cst_81 = arith.constant dense<0.000000e+00> : vector<8xf32>
    %84 = vector.multi_reduction <add>, %83, %cst_81 [0] : vector<512x8xf32> to vector<8xf32>
    %85 = vector.shape_cast %84 : vector<8xf32> to vector<1x8xf32>
    %cst_82 = arith.constant 5.120000e+02 : f32
    %86 = vector.broadcast %cst_82 : f32 to vector<1x8xf32>
    %87 = arith.divf %85, %86 : vector<1x8xf32>
    %cst_83 = arith.constant 1.000000e-03 : f32
    %88 = vector.broadcast %cst_83 : f32 to vector<1x8xf32>
    %89 = arith.addf %87, %88 : vector<1x8xf32>
    %90 = math.rsqrt %89 : vector<1x8xf32>
    %91 = arith.mulf %75, %90 : vector<1x8xf32>
    %92 = arith.mulf %80, %91 : vector<1x8xf32>
    %93 = arith.subf %76, %92 : vector<1x8xf32>
    %94 = vector.broadcast %91 : vector<1x8xf32> to vector<512x8xf32>
    %95 = arith.mulf %74, %94 : vector<512x8xf32>
    %96 = vector.broadcast %93 : vector<1x8xf32> to vector<512x8xf32>
    %97 = arith.addf %95, %96 : vector<512x8xf32>
    %cst_84 = arith.constant 0.000000e+00 : f32
    %98 = vector.broadcast %cst_84 : f32 to vector<512x8xf32>
    %99 = arith.maximumf %97, %98 : vector<512x8xf32>
    %100 = vector.shape_cast %99 : vector<512x8xf32> to vector<2x16x16x8xf32>
    %c0_85 = arith.constant 0 : index
    %c0_86 = arith.constant 0 : index
    %c0_87 = arith.constant 0 : index
    %c0_88 = arith.constant 0 : index
    %101 = vector.load %arg10[%c0_85, %c0_86, %c0_87, %c0_88] : memref<2x16x16x8xf32, #tpu.memory_space<vmem>>, vector<2x16x16x8xf32>
    tpu.vector_store %arg10[%c0_85, %c0_86, %c0_87, %c0_88], %100 {strides = array<i32>} : memref<2x16x16x8xf32, #tpu.memory_space<vmem>>, vector<2x16x16x8xf32>,
    return
  }
}

</mosaic_0001>

<llo_original>
// kernel: tpu_custom_call.1
$region0: #{tpu_custom_call.1}
  #allocation0 [shape = 'u32[]', space=smem, size = 0x4, offset = 0x4, fixed_abs, tag = 'smem constant byte address 0x4 - core index']
  #allocation1 [shape = 'u32[144,128]{1,0:T(1,128)}', space=vmem, size = 0x12000, scoped, tag = 'internal scratch']
  #allocation2 [shape = 'f32[2,18,18,4]{3,2,1,0:T(8,128)}', space=vmem, size = 0x6c000, scoped, tag = 'scratch operand']
  %s0 = inlined_call_operand.vmem [shape: f32[2,16,16,4], index: 0, kind: input, shape index: {}]
  %s1 = inlined_call_operand.vmem [shape: bf16[4,176], index: 1, kind: input, shape index: {}]
  %s2 = inlined_call_operand.vmem [shape: f32[1,176], index: 2, kind: input, shape index: {}]
  %s3 = inlined_call_operand.vmem [shape: f32[1,176], index: 3, kind: input, shape index: {}]
  %s4 = inlined_call_operand.vmem [shape: bf16[4,8], index: 4, kind: input, shape index: {}]
  %s5 = inlined_call_operand.vmem [shape: f32[1,8], index: 5, kind: input, shape index: {}]
  %s6 = inlined_call_operand.vmem [shape: f32[1,8], index: 6, kind: input, shape index: {}]
  %s7 = inlined_call_operand.hbm [shape: f32[2,16,16,64], index: 7, kind: output, shape index: {0}]
  %s8 = inlined_call_operand.hbm [shape: f32[2,16,16,48], index: 8, kind: output, shape index: {1}]
  %s9 = inlined_call_operand.hbm [shape: f32[2,16,16,64], index: 9, kind: output, shape index: {2}]
  %s10 = inlined_call_operand.vmem [shape: f32[2,16,16,8], index: 10, kind: output, shape index: {3}]
  %11 = xla_tuple %s7, %s8, %s9, %s10
  %s12 = sld [smem:[#allocation0]]
  $region62: #{tpu_custom_call.1} parent=0
    _
  %s14 = ssub.s32 1, %s12
  %s15 = scalar_select 0, %s14, %s12
  $region1: #{tpu_custom_call.1} parent=0
    #allocation3 [shape = 'u8[262144]{0}', space=vmem, size = 0x40000, scoped, tag = 'output window, operand 0, single buffered']
    #allocation4 [shape = 's32[1]{0}', space=sflag, size = 0x4, scoped, tag = 'scoped memory for tpu_custom_call.1']
    #allocation5 [shape = 'u8[262144]{0}', space=vmem, size = 0x40000, scoped, tag = 'output window, operand 1, single buffered']
    #allocation6 [shape = 's32[1]{0}', space=sflag, size = 0x4, scoped, tag = 'scoped memory for tpu_custom_call.1']
    #allocation7 [shape = 'u8[262144]{0}', space=vmem, size = 0x40000, scoped, tag = 'output window, operand 2, single buffered']
    %16 = vsyncpa [#allocation4], 0
    %17 = vsyncpa [#allocation6], 0
    // Predicated region
    $region2: #{tpu_custom_call.1} parent=1 // pred_check
      _
    $region3: #{tpu_custom_call.1} parent=1 // pred_check_branch
      %19 = sbr.rel (0) target = $region5
    $region4: #{tpu_custom_call.1} parent=1 // pred_region
      _
    $region5: #{tpu_custom_call.1} parent=1 // pred_fallthru
      _
    // Predicated region
    $region6: #{tpu_custom_call.1} parent=1 // pred_check
      _
    $region7: #{tpu_custom_call.1} parent=1 // pred_check_branch
      %21 = sbr.rel (0) target = $region9
    $region8: #{tpu_custom_call.1} parent=1 // pred_region
      _
    $region9: #{tpu_custom_call.1} parent=1 // pred_fallthru
      _
    // Predicated region
    $region10: #{tpu_custom_call.1} parent=1 // pred_check
      _
    $region11: #{tpu_custom_call.1} parent=1 // pred_check_branch
      %23 = sbr.rel (0) target = $region13
    $region12: #{tpu_custom_call.1} parent=1 // pred_region
      _
    $region13: #{tpu_custom_call.1} parent=1 // pred_fallthru
      _
    // Predicated region
    $region14: #{tpu_custom_call.1} parent=1 // pred_check
      _
    $region15: #{tpu_custom_call.1} parent=1 // pred_check_branch
      %25 = sbr.rel (0) target = $region17
    $region16: #{tpu_custom_call.1} parent=1 // pred_region
      _
    $region17: #{tpu_custom_call.1} parent=1 // pred_fallthru
      _
    // Predicated region
    $region18: #{tpu_custom_call.1} parent=1 // pred_check
      _
    $region19: #{tpu_custom_call.1} parent=1 // pred_check_branch
      %27 = sbr.rel (0) target = $region21
    $region20: #{tpu_custom_call.1} parent=1 // pred_region
      _
    $region21: #{tpu_custom_call.1} parent=1 // pred_fallthru
      _
    // Predicated region
    $region22: #{tpu_custom_call.1} parent=1 // pred_check
      _
    $region23: #{tpu_custom_call.1} parent=1 // pred_check_branch
      %29 = sbr.rel (0) target = $region25
    $region24: #{tpu_custom_call.1} parent=1 // pred_region
      _
    $region25: #{tpu_custom_call.1} parent=1 // pred_fallthru
      _
    // Predicated region
    $region26: #{tpu_custom_call.1} parent=1 // pred_check
      _
    $region27: #{tpu_custom_call.1} parent=1 // pred_check_branch
      %31 = sbr.rel (0) target = $region29
    $region28: #{tpu_custom_call.1} parent=1 // pred_region
      _
    $region29: #{tpu_custom_call.1} parent=1 // pred_fallthru
      _
    %v33 = vld [vmem:[%s0] sm:$0xff]
    %v34 = vld [vmem:[%s0 + $0x8] sm:$0xff]
    %v35 = vld [vmem:[%s0 + $0x10] sm:$0xff]
    %v36 = vld [vmem:[%s0 + $0x18] sm:$0xff]
    %v37 = vld [vmem:[%s0 + $0x20] sm:$0xff]
    %v38 = vld [vmem:[%s0 + $0x28] sm:$0xff]
    %v39 = vld [vmem:[%s0 + $0x30] sm:$0xff]
    %v40 = vld [vmem:[%s0 + $0x38] sm:$0xff]
    %v41 = vld [vmem:[%s0 + $0x40] sm:$0xff]
    %v42 = vld [vmem:[%s0 + $0x48] sm:$0xff]
    %v43 = vld [vmem:[%s0 + $0x50] sm:$0xff]
    %v44 = vld [vmem:[%s0 + $0x58] sm:$0xff]
    %v45 = vld [vmem:[%s0 + $0x60] sm:$0xff]
    %v46 = vld [vmem:[%s0 + $0x68] sm:$0xff]
    %v47 = vld [vmem:[%s0 + $0x70] sm:$0xff]
    %v48 = vld [vmem:[%s0 + $0x78] sm:$0xff]
    %v49 = vld [vmem:[%s0 + $0x80] sm:$0xff]
    %v50 = vld [vmem:[%s0 + $0x88] sm:$0xff]
    %v51 = vld [vmem:[%s0 + $0x90] sm:$0xff]
    %v52 = vld [vmem:[%s0 + $0x98] sm:$0xff]
    %v53 = vld [vmem:[%s0 + $0xa0] sm:$0xff]
    %v54 = vld [vmem:[%s0 + $0xa8] sm:$0xff]
    %v55 = vld [vmem:[%s0 + $0xb0] sm:$0xff]
    %v56 = vld [vmem:[%s0 + $0xb8] sm:$0xff]
    %v57 = vld [vmem:[%s0 + $0xc0] sm:$0xff]
    %v58 = vld [vmem:[%s0 + $0xc8] sm:$0xff]
    %v59 = vld [vmem:[%s0 + $0xd0] sm:$0xff]
    %v60 = vld [vmem:[%s0 + $0xd8] sm:$0xff]
    %v61 = vld [vmem:[%s0 + $0xe0] sm:$0xff]
    %v62 = vld [vmem:[%s0 + $0xe8] sm:$0xff]
    %v63 = vld [vmem:[%s0 + $0xf0] sm:$0xff]
    %v64 = vld [vmem:[%s0 + $0xf8] sm:$0xff]
    %v65 = vld [vmem:[%s0 + $0x100] sm:$0xff]
    %v66 = vld [vmem:[%s0 + $0x108] sm:$0xff]
    %v67 = vld [vmem:[%s0 + $0x110] sm:$0xff]
    %v68 = vld [vmem:[%s0 + $0x118] sm:$0xff]
    %v69 = vld [vmem:[%s0 + $0x120] sm:$0xff]
    %v70 = vld [vmem:[%s0 + $0x128] sm:$0xff]
    %v71 = vld [vmem:[%s0 + $0x130] sm:$0xff]
    %v72 = vld [vmem:[%s0 + $0x138] sm:$0xff]
    %v73 = vld [vmem:[%s0 + $0x140] sm:$0xff]
    %v74 = vld [vmem:[%s0 + $0x148] sm:$0xff]
    %v75 = vld [vmem:[%s0 + $0x150] sm:$0xff]
    %v76 = vld [vmem:[%s0 + $0x158] sm:$0xff]
    %v77 = vld [vmem:[%s0 + $0x160] sm:$0xff]
    %v78 = vld [vmem:[%s0 + $0x168] sm:$0xff]
    %v79 = vld [vmem:[%s0 + $0x170] sm:$0xff]
    %v80 = vld [vmem:[%s0 + $0x178] sm:$0xff]
    %v81 = vld [vmem:[%s0 + $0x180] sm:$0xff]
    %v82 = vld [vmem:[%s0 + $0x188] sm:$0xff]
    %v83 = vld [vmem:[%s0 + $0x190] sm:$0xff]
    %v84 = vld [vmem:[%s0 + $0x198] sm:$0xff]
    %v85 = vld [vmem:[%s0 + $0x1a0] sm:$0xff]
    %v86 = vld [vmem:[%s0 + $0x1a8] sm:$0xff]
    %v87 = vld [vmem:[%s0 + $0x1b0] sm:$0xff]
    %v88 = vld [vmem:[%s0 + $0x1b8] sm:$0xff]
    %v89 = vld [vmem:[%s0 + $0x1c0] sm:$0xff]
    %v90 = vld [vmem:[%s0 + $0x1c8] sm:$0xff]
    %v91 = vld [vmem:[%s0 + $0x1d0] sm:$0xff]
    %v92 = vld [vmem:[%s0 + $0x1d8] sm:$0xff]
    %v93 = vld [vmem:[%s0 + $0x1e0] sm:$0xff]
    %v94 = vld [vmem:[%s0 + $0x1e8] sm:$0xff]
    %v95 = vld [vmem:[%s0 + $0x1f0] sm:$0xff]
    %v96 = vld [vmem:[%s0 + $0x1f8] sm:$0xff]
    %v97 = vpack.c.bf16 %v34, %v33
    %v98 = vpack.c.bf16 %v36, %v35
    %v99 = vpack.c.bf16 %v38, %v37
    %v100 = vpack.c.bf16 %v40, %v39
    %v101 = vpack.c.bf16 %v42, %v41
    %v102 = vpack.c.bf16 %v44, %v43
    %v103 = vpack.c.bf16 %v46, %v45
    %v104 = vpack.c.bf16 %v48, %v47
    %v105 = vpack.c.bf16 %v50, %v49
    %v106 = vpack.c.bf16 %v52, %v51
    %v107 = vpack.c.bf16 %v54, %v53
    %v108 = vpack.c.bf16 %v56, %v55
    %v109 = vpack.c.bf16 %v58, %v57
    %v110 = vpack.c.bf16 %v60, %v59
    %v111 = vpack.c.bf16 %v62, %v61
    %v112 = vpack.c.bf16 %v64, %v63
    %v113 = vpack.c.bf16 %v66, %v65
    %v114 = vpack.c.bf16 %v68, %v67
    %v115 = vpack.c.bf16 %v70, %v69
    %v116 = vpack.c.bf16 %v72, %v71
    %v117 = vpack.c.bf16 %v74, %v73
    %v118 = vpack.c.bf16 %v76, %v75
    %v119 = vpack.c.bf16 %v78, %v77
    %v120 = vpack.c.bf16 %v80, %v79
    %v121 = vpack.c.bf16 %v82, %v81
    %v122 = vpack.c.bf16 %v84, %v83
    %v123 = vpack.c.bf16 %v86, %v85
    %v124 = vpack.c.bf16 %v88, %v87
    %v125 = vpack.c.bf16 %v90, %v89
    %v126 = vpack.c.bf16 %v92, %v91
    %v127 = vpack.c.bf16 %v94, %v93
    %v128 = vpack.c.bf16 %v96, %v95
    %v129 = vld [vmem:[%s1] sm:$0xf]
    %v132 = vunpack.c.l.s4 1983009808
    %v133 = vunpack.c.0.s8 %v132
    %v134 = vlaneseq
    %v135 = vshrl.u32 %v134, 7
    %v136 = vsub.s32 %v133, %v135
    %v137 = vrot.slane %v129, %v136
    %v138 = vcombine.high %v137, %v137
    %vm139 = vcmask 31744
    %v141 = vsel %vm139, %v97, 0
    %v144 = vsel %vm139, %v98, 0
    %v147 = vsel %vm139, %v99, 0
    %v150 = vsel %vm139, %v100, 0
    %v153 = vsel %vm139, %v101, 0
    %v156 = vsel %vm139, %v102, 0
    %v159 = vsel %vm139, %v103, 0
    %v162 = vsel %vm139, %v104, 0
    %v165 = vsel %vm139, %v105, 0
    %v168 = vsel %vm139, %v106, 0
    %v171 = vsel %vm139, %v107, 0
    %v174 = vsel %vm139, %v108, 0
    %v177 = vsel %vm139, %v109, 0
    %v180 = vsel %vm139, %v110, 0
    %v183 = vsel %vm139, %v111, 0
    %v186 = vsel %vm139, %v112, 0
    %v189 = vsel %vm139, %v113, 0
    %v192 = vsel %vm139, %v114, 0
    %v195 = vsel %vm139, %v115, 0
    %v198 = vsel %vm139, %v116, 0
    %v201 = vsel %vm139, %v117, 0
    %v204 = vsel %vm139, %v118, 0
    %v207 = vsel %vm139, %v119, 0
    %v210 = vsel %vm139, %v120, 0
    %v213 = vsel %vm139, %v121, 0
    %v216 = vsel %vm139, %v122, 0
    %v219 = vsel %vm139, %v123, 0
    %v222 = vsel %vm139, %v124, 0
    %v225 = vsel %vm139, %v125, 0
    %v228 = vsel %vm139, %v126, 0
    %v231 = vsel %vm139, %v127, 0
    %v234 = vsel %vm139, %v128, 0
    %vm236 = vcmask 1041408
    %v238 = vsel %vm236, %v137, 0
    %v241 = vsel %vm236, %v138, 0
    %243 = vmatprep.subr.bf16.mxu0 %v241
    %244 = vmatpush1.bf16.msra.mxu0 %v238
    %245 = vmatprep.subr.bf16.mxu0 0
    %246 = vmatpush1.bf16.msra.mxu0 0
    %247 = vmatprep.subr.bf16.mxu0 0
    %248 = vmatpush1.bf16.msra.mxu0 0
    %249 = vmatprep.subr.bf16.mxu0 0
    %250 = vmatpush1.bf16.msra.mxu0 0
    %251 = vmatprep.subr.bf16.mxu0 0
    %252 = vmatpush1.bf16.msra.mxu0 0
    %253 = vmatprep.subr.bf16.mxu0 0
    %254 = vmatpush1.bf16.msra.mxu0 0
    %255 = vmatprep.subr.bf16.mxu0 0
    %256 = vmatpush1.bf16.msra.mxu0 0
    %257 = vmatprep.subr.bf16.mxu0 0
    %258 = vmatpush1.bf16.msra.mxu0 0
    %259 = vmatprep.subr.bf16.mxu0 0
    %260 = vmatpush1.bf16.msra.mxu0 0
    %261 = vmatprep.subr.bf16.mxu0 0
    %262 = vmatpush1.bf16.msra.mxu0 0
    %263 = vmatprep.subr.bf16.mxu0 0
    %264 = vmatpush1.bf16.msra.mxu0 0
    %265 = vmatprep.subr.bf16.mxu0 0
    %266 = vmatpush1.bf16.msra.mxu0 0
    %267 = vmatprep.subr.bf16.mxu0 0
    %268 = vmatpush1.bf16.msra.mxu0 0
    %269 = vmatprep.subr.bf16.mxu0 0
    %270 = vmatpush1.bf16.msra.mxu0 0
    %271 = vmatprep.subr.bf16.mxu0 0
    %272 = vmatpush1.bf16.msra.mxu0 0
    %273 = vmatprep.subr.bf16.mxu0 0
    %274 = vmatpush1.bf16.msra.mxu0 0
    %275 = vmatprep.mubr.bf16.mxu0 0
    %276 = vmatmul.mubr.bf16.gmra.mrb[0].mxu0 %v141
    %v277 = vpop.f32.mrb[0].mxu0
    %v278 = vadd.f32 0.0, %v277
    %v279 = vpop.f32.mrb[0].mxu0
    %v280 = vadd.f32 0.0, %v279
    %v281 = vpop.f32.mrb[0].mxu0
    %v282 = vadd.f32 0.0, %v281
    %v283 = vpop.f32.mrb[0].mxu0
    %v284 = vadd.f32 0.0, %v283
    %285 = vmatprep.mubr.bf16.mxu0 0
    %286 = vmatmul.mubr.bf16.gmra.mrb[0].mxu0 %v144
    %v287 = vpop.f32.mrb[0].mxu0
    %v288 = vadd.f32 0.0, %v287
    %v289 = vpop.f32.mrb[0].mxu0
    %v290 = vadd.f32 0.0, %v289
    %v291 = vpop.f32.mrb[0].mxu0
    %v292 = vadd.f32 0.0, %v291
    %v293 = vpop.f32.mrb[0].mxu0
    %v294 = vadd.f32 0.0, %v293
    %295 = vmatprep.mubr.bf16.mxu0 0
    %296 = vmatmul.mubr.bf16.gmra.mrb[0].mxu0 %v147
    %v297 = vpop.f32.mrb[0].mxu0
    %v298 = vadd.f32 0.0, %v297
    %v299 = vpop.f32.mrb[0].mxu0
    %v300 = vadd.f32 0.0, %v299
    %v301 = vpop.f32.mrb[0].mxu0
    %v302 = vadd.f32 0.0, %v301
    %v303 = vpop.f32.mrb[0].mxu0
    %v304 = vadd.f32 0.0, %v303
    %305 = vmatprep.mubr.bf16.mxu0 0
    %306 = vmatmul.mubr.bf16.gmra.mrb[0].mxu0 %v150
    %v307 = vpop.f32.mrb[0].mxu0
    %v308 = vadd.f32 0.0, %v307
    %v309 = vpop.f32.mrb[0].mxu0
    %v310 = vadd.f32 0.0, %v309
    %v311 = vpop.f32.mrb[0].mxu0
    %v312 = vadd.f32 0.0, %v311
    %v313 = vpop.f32.mrb[0].mxu0
    %v314 = vadd.f32 0.0, %v313
    %315 = vmatprep.mubr.bf16.mxu0 0
    %316 = vmatmul.mubr.bf16.gmra.mrb[0].mxu0 %v153
    %v317 = vpop.f32.mrb[0].mxu0
    %v318 = vadd.f32 0.0, %v317
    %v319 = vpop.f32.mrb[0].mxu0
    %v320 = vadd.f32 0.0, %v319
    %v321 = vpop.f32.mrb[0].mxu0
    %v322 = vadd.f32 0.0, %v321
    %v323 = vpop.f32.mrb[0].mxu0
    %v324 = vadd.f32 0.0, %v323
    %325 = vmatprep.mubr.bf16.mxu0 0
    %326 = vmatmul.mubr.bf16.gmra.mrb[0].mxu0 %v156
    %v327 = vpop.f32.mrb[0].mxu0
    %v328 = vadd.f32 0.0, %v327
    %v329 = vpop.f32.mrb[0].mxu0
    %v330 = vadd.f32 0.0, %v329
    %v331 = vpop.f32.mrb[0].mxu0
    %v332 = vadd.f32 0.0, %v331
    %v333 = vpop.f32.mrb[0].mxu0
    %v334 = vadd.f32 0.0, %v333
    %335 = vmatprep.mubr.bf16.mxu0 0
    %336 = vmatmul.mubr.bf16.gmra.mrb[0].mxu0 %v159
    %v337 = vpop.f32.mrb[0].mxu0
    %v338 = vadd.f32 0.0, %v337
    %v339 = vpop.f32.mrb[0].mxu0
    %v340 = vadd.f32 0.0, %v339
    %v341 = vpop.f32.mrb[0].mxu0
    %v342 = vadd.f32 0.0, %v341
    %v343 = vpop.f32.mrb[0].mxu0
    %v344 = vadd.f32 0.0, %v343
    %345 = vmatprep.mubr.bf16.mxu0 0
    %346 = vmatmul.mubr.bf16.gmra.mrb[0].mxu0 %v162
    %v347 = vpop.f32.mrb[0].mxu0
    %v348 = vadd.f32 0.0, %v347
    %v349 = vpop.f32.mrb[0].mxu0
    %v350 = vadd.f32 0.0, %v349
    %v351 = vpop.f32.mrb[0].mxu0
    %v352 = vadd.f32 0.0, %v351
    %v353 = vpop.f32.mrb[0].mxu0
    %v354 = vadd.f32 0.0, %v353
    %355 = vmatprep.mubr.bf16.mxu0 0
    %356 = vmatmul.mubr.bf16.gmra.mrb[0].mxu0 %v165
    %v357 = vpop.f32.mrb[0].mxu0
    %v358 = vadd.f32 0.0, %v357
    %v359 = vpop.f32.mrb[0].mxu0
    %v360 = vadd.f32 0.0, %v359
    %v361 = vpop.f32.mrb[0].mxu0
    %v362 = vadd.f32 0.0, %v361
    %v363 = vpop.f32.mrb[0].mxu0
    %v364 = vadd.f32 0.0, %v363
    %365 = vmatprep.mubr.bf16.mxu0 0
    %366 = vmatmul.mubr.bf16.gmra.mrb[0].mxu0 %v168
    %v367 = vpop.f32.mrb[0].mxu0
    %v368 = vadd.f32 0.0, %v367
    %v369 = vpop.f32.mrb[0].mxu0
    %v370 = vadd.f32 0.0, %v369
    %v371 = vpop.f32.mrb[0].mxu0
    %v372 = vadd.f32 0.0, %v371
    %v373 = vpop.f32.mrb[0].mxu0
    %v374 = vadd.f32 0.0, %v373
    %375 = vmatprep.mubr.bf16.mxu0 0
    %376 = vmatmul.mubr.bf16.gmra.mrb[0].mxu0 %v171
    %v377 = vpop.f32.mrb[0].mxu0
    %v378 = vadd.f32 0.0, %v377
    %v379 = vpop.f32.mrb[0].mxu0
    %v380 = vadd.f32 0.0, %v379
    %v381 = vpop.f32.mrb[0].mxu0
    %v382 = vadd.f32 0.0, %v381
    %v383 = vpop.f32.mrb[0].mxu0
    %v384 = vadd.f32 0.0, %v383
    %385 = vmatprep.mubr.bf16.mxu0 0
    %386 = vmatmul.mubr.bf16.gmra.mrb[0].mxu0 %v174
    %v387 = vpop.f32.mrb[0].mxu0
    %v388 = vadd.f32 0.0, %v387
    %v389 = vpop.f32.mrb[0].mxu0
    %v390 = vadd.f32 0.0, %v389
    %v391 = vpop.f32.mrb[0].mxu0
    %v392 = vadd.f32 0.0, %v391
    %v393 = vpop.f32.mrb[0].mxu0
    %v394 = vadd.f32 0.0, %v393
    %395 = vmatprep.mubr.bf16.mxu0 0
    %396 = vmatmul.mubr.bf16.gmra.mrb[0].mxu0 %v177
    %v397 = vpop.f32.mrb[0].mxu0
    %v398 = vadd.f32 0.0, %v397
    %v399 = vpop.f32.mrb[0].mxu0
    %v400 = vadd.f32 0.0, %v399
    %v401 = vpop.f32.mrb[0].mxu0
    %v402 = vadd.f32 0.0, %v401
    %v403 = vpop.f32.mrb[0].mxu0
    %v404 = vadd.f32 0.0, %v403
    %405 = vmatprep.mubr.bf16.mxu0 0
    %406 = vmatmul.mubr.bf16.gmra.mrb[0].mxu0 %v180
    %v407 = vpop.f32.mrb[0].mxu0
    %v408 = vadd.f32 0.0, %v407
    %v409 = vpop.f32.mrb[0].mxu0
    %v410 = vadd.f32 0.0, %v409
    %v411 = vpop.f32.mrb[0].mxu0
    %v412 = vadd.f32 0.0, %v411
    %v413 = vpop.f32.mrb[0].mxu0
    %v414 = vadd.f32 0.0, %v413
    %415 = vmatprep.mubr.bf16.mxu0 0
    %416 = vmatmul.mubr.bf16.gmra.mrb[0].mxu0 %v183
    %v417 = vpop.f32.mrb[0].mxu0
    %v418 = vadd.f32 0.0, %v417
    %v419 = vpop.f32.mrb[0].mxu0
    %v420 = vadd.f32 0.0, %v419
    %v421 = vpop.f32.mrb[0].mxu0
    %v422 = vadd.f32 0.0, %v421
    %v423 = vpop.f32.mrb[0].mxu0
    %v424 = vadd.f32 0.0, %v423
    %425 = vmatprep.mubr.bf16.mxu0 0
    %426 = vmatmul.mubr.bf16.gmra.mrb[0].mxu0 %v186
    %v427 = vpop.f32.mrb[0].mxu0
    %v428 = vadd.f32 0.0, %v427
    %v429 = vpop.f32.mrb[0].mxu0
    %v430 = vadd.f32 0.0, %v429
    %v431 = vpop.f32.mrb[0].mxu0
    %v432 = vadd.f32 0.0, %v431
    %v433 = vpop.f32.mrb[0].mxu0
    %v434 = vadd.f32 0.0, %v433
    %435 = vmatprep.mubr.bf16.mxu0 0
    %436 = vmatmul.mubr.bf16.gmra.mrb[0].mxu0 %v189
    %v437 = vpop.f32.mrb[0].mxu0
    %v438 = vadd.f32 0.0, %v437
    %v439 = vpop.f32.mrb[0].mxu0
    %v440 = vadd.f32 0.0, %v439
    %v441 = vpop.f32.mrb[0].mxu0
    %v442 = vadd.f32 0.0, %v441
    %v443 = vpop.f32.mrb[0].mxu0
    %v444 = vadd.f32 0.0, %v443
    %445 = vmatprep.mubr.bf16.mxu0 0
    %446 = vmatmul.mubr.bf16.gmra.mrb[0].mxu0 %v192
    %v447 = vpop.f32.mrb[0].mxu0
    %v448 = vadd.f32 0.0, %v447
    %v449 = vpop.f32.mrb[0].mxu0
    %v450 = vadd.f32 0.0, %v449
    %v451 = vpop.f32.mrb[0].mxu0
    %v452 = vadd.f32 0.0, %v451
    %v453 = vpop.f32.mrb[0].mxu0
    %v454 = vadd.f32 0.0, %v453
    %455 = vmatprep.mubr.bf16.mxu0 0
    %456 = vmatmul.mubr.bf16.gmra.mrb[0].mxu0 %v195
    %v457 = vpop.f32.mrb[0].mxu0
    %v458 = vadd.f32 0.0, %v457
    %v459 = vpop.f32.mrb[0].mxu0
    %v460 = vadd.f32 0.0, %v459
    %v461 = vpop.f32.mrb[0].mxu0
    %v462 = vadd.f32 0.0, %v461
    %v463 = vpop.f32.mrb[0].mxu0
    %v464 = vadd.f32 0.0, %v463
    %465 = vmatprep.mubr.bf16.mxu0 0
    %466 = vmatmul.mubr.bf16.gmra.mrb[0].mxu0 %v198
    %v467 = vpop.f32.mrb[0].mxu0
    %v468 = vadd.f32 0.0, %v467
    %v469 = vpop.f32.mrb[0].mxu0
    %v470 = vadd.f32 0.0, %v469
    %v471 = vpop.f32.mrb[0].mxu0
    %v472 = vadd.f32 0.0, %v471
    %v473 = vpop.f32.mrb[0].mxu0
    %v474 = vadd.f32 0.0, %v473
    %475 = vmatprep.mubr.bf16.mxu0 0
    %476 = vmatmul.mubr.bf16.gmra.mrb[0].mxu0 %v201
    %v477 = vpop.f32.mrb[0].mxu0
    %v478 = vadd.f32 0.0, %v477
    %v479 = vpop.f32.mrb[0].mxu0
    %v480 = vadd.f32 0.0, %v479
    %v481 = vpop.f32.mrb[0].mxu0
    %v482 = vadd.f32 0.0, %v481
    %v483 = vpop.f32.mrb[0].mxu0
    %v484 = vadd.f32 0.0, %v483
    %485 = vmatprep.mubr.bf16.mxu0 0
    %486 = vmatmul.mubr.bf16.gmra.mrb[0].mxu0 %v204
    %v487 = vpop.f32.mrb[0].mxu0
    %v488 = vadd.f32 0.0, %v487
    %v489 = vpop.f32.mrb[0].mxu0
    %v490 = vadd.f32 0.0, %v489
    %v491 = vpop.f32.mrb[0].mxu0
    %v492 = vadd.f32 0.0, %v491
    %v493 = vpop.f32.mrb[0].mxu0
    %v494 = vadd.f32 0.0, %v493
    %495 = vmatprep.mubr.bf16.mxu0 0
    %496 = vmatmul.mubr.bf16.gmra.mrb[0].mxu0 %v207
    %v497 = vpop.f32.mrb[0].mxu0
    %v498 = vadd.f32 0.0, %v497
    %v499 = vpop.f32.mrb[0].mxu0
    %v500 = vadd.f32 0.0, %v499
    %v501 = vpop.f32.mrb[0].mxu0
    %v502 = vadd.f32 0.0, %v501
    %v503 = vpop.f32.mrb[0].mxu0
    %v504 = vadd.f32 0.0, %v503
    %505 = vmatprep.mubr.bf16.mxu0 0
    %506 = vmatmul.mubr.bf16.gmra.mrb[0].mxu0 %v210
    %v507 = vpop.f32.mrb[0].mxu0
    %v508 = vadd.f32 0.0, %v507
    %v509 = vpop.f32.mrb[0].mxu0
    %v510 = vadd.f32 0.0, %v509
    %v511 = vpop.f32.mrb[0].mxu0
    %v512 = vadd.f32 0.0, %v511
    %v513 = vpop.f32.mrb[0].mxu0
    %v514 = vadd.f32 0.0, %v513
    %515 = vmatprep.mubr.bf16.mxu0 0
    %516 = vmatmul.mubr.bf16.gmra.mrb[0].mxu0 %v213
    %v517 = vpop.f32.mrb[0].mxu0
    %v518 = vadd.f32 0.0, %v517
    %v519 = vpop.f32.mrb[0].mxu0
    %v520 = vadd.f32 0.0, %v519
    %v521 = vpop.f32.mrb[0].mxu0
    %v522 = vadd.f32 0.0, %v521
    %v523 = vpop.f32.mrb[0].mxu0
    %v524 = vadd.f32 0.0, %v523
    %525 = vmatprep.mubr.bf16.mxu0 0
    %526 = vmatmul.mubr.bf16.gmra.mrb[0].mxu0 %v216
    %v527 = vpop.f32.mrb[0].mxu0
    %v528 = vadd.f32 0.0, %v527
    %v529 = vpop.f32.mrb[0].mxu0
    %v530 = vadd.f32 0.0, %v529
    %v531 = vpop.f32.mrb[0].mxu0
    %v532 = vadd.f32 0.0, %v531
    %v533 = vpop.f32.mrb[0].mxu0
    %v534 = vadd.f32 0.0, %v533
    %535 = vmatprep.mubr.bf16.mxu0 0
    %536 = vmatmul.mubr.bf16.gmra.mrb[0].mxu0 %v219
    %v537 = vpop.f32.mrb[0].mxu0
    %v538 = vadd.f32 0.0, %v537
    %v539 = vpop.f32.mrb[0].mxu0
    %v540 = vadd.f32 0.0, %v539
    %v541 = vpop.f32.mrb[0].mxu0
    %v542 = vadd.f32 0.0, %v541
    %v543 = vpop.f32.mrb[0].mxu0
    %v544 = vadd.f32 0.0, %v543
    %545 = vmatprep.mubr.bf16.mxu0 0
    %546 = vmatmul.mubr.bf16.gmra.mrb[0].mxu0 %v222
    %v547 = vpop.f32.mrb[0].mxu0
    %v548 = vadd.f32 0.0, %v547
    %v549 = vpop.f32.mrb[0].mxu0
    %v550 = vadd.f32 0.0, %v549
    %v551 = vpop.f32.mrb[0].mxu0
    %v552 = vadd.f32 0.0, %v551
    %v553 = vpop.f32.mrb[0].mxu0
    %v554 = vadd.f32 0.0, %v553
    %555 = vmatprep.mubr.bf16.mxu0 0
    %556 = vmatmul.mubr.bf16.gmra.mrb[0].mxu0 %v225
    %v557 = vpop.f32.mrb[0].mxu0
    %v558 = vadd.f32 0.0, %v557
    %v559 = vpop.f32.mrb[0].mxu0
    %v560 = vadd.f32 0.0, %v559
    %v561 = vpop.f32.mrb[0].mxu0
    %v562 = vadd.f32 0.0, %v561
    %v563 = vpop.f32.mrb[0].mxu0
    %v564 = vadd.f32 0.0, %v563
    %565 = vmatprep.mubr.bf16.mxu0 0
    %566 = vmatmul.mubr.bf16.gmra.mrb[0].mxu0 %v228
    %v567 = vpop.f32.mrb[0].mxu0
    %v568 = vadd.f32 0.0, %v567
    %v569 = vpop.f32.mrb[0].mxu0
    %v570 = vadd.f32 0.0, %v569
    %v571 = vpop.f32.mrb[0].mxu0
    %v572 = vadd.f32 0.0, %v571
    %v573 = vpop.f32.mrb[0].mxu0
    %v574 = vadd.f32 0.0, %v573
    %575 = vmatprep.mubr.bf16.mxu0 0
    %576 = vmatmul.mubr.bf16.gmra.mrb[0].mxu0 %v231
    %v577 = vpop.f32.mrb[0].mxu0
    %v578 = vadd.f32 0.0, %v577
    %v579 = vpop.f32.mrb[0].mxu0
    %v580 = vadd.f32 0.0, %v579
    %v581 = vpop.f32.mrb[0].mxu0
    %v582 = vadd.f32 0.0, %v581
    %v583 = vpop.f32.mrb[0].mxu0
    %v584 = vadd.f32 0.0, %v583
    %585 = vmatprep.mubr.bf16.mxu0 0
    %586 = vmatmul.mubr.bf16.gmra.mrb[0].mxu0 %v234
    %v587 = vpop.f32.mrb[0].mxu0
    %v588 = vadd.f32 0.0, %v587
    %v589 = vpop.f32.mrb[0].mxu0
    %v590 = vadd.f32 0.0, %v589
    %v591 = vpop.f32.mrb[0].mxu0
    %v592 = vadd.f32 0.0, %v591
    %v593 = vpop.f32.mrb[0].mxu0
    %v594 = vadd.f32 0.0, %v593
    %595 = vdwg.mxu0
    %v596 = vld [vmem:[%s2] sm:$0x3]
    %v597 = vld [vmem:[%s3] sm:$0x3]
    %v598 = vadd.f32 %v278, %v282
    %v599 = vadd.f32 %v598, %v288
    %v600 = vadd.f32 %v599, %v292
    %v601 = vadd.f32 %v600, %v298
    %v602 = vadd.f32 %v601, %v302
    %v603 = vadd.f32 %v602, %v308
    %v604 = vadd.f32 %v603, %v312
    %v605 = vadd.f32 %v604, %v318
    %v606 = vadd.f32 %v605, %v322
    %v607 = vadd.f32 %v606, %v328
    %v608 = vadd.f32 %v607, %v332
    %v609 = vadd.f32 %v608, %v338
    %v610 = vadd.f32 %v609, %v342
    %v611 = vadd.f32 %v610, %v348
    %v612 = vadd.f32 %v611, %v352
    %v613 = vadd.f32 %v612, %v358
    %v614 = vadd.f32 %v613, %v362
    %v615 = vadd.f32 %v614, %v368
    %v616 = vadd.f32 %v615, %v372
    %v617 = vadd.f32 %v616, %v378
    %v618 = vadd.f32 %v617, %v382
    %v619 = vadd.f32 %v618, %v388
    %v620 = vadd.f32 %v619, %v392
    %v621 = vadd.f32 %v620, %v398
    %v622 = vadd.f32 %v621, %v402
    %v623 = vadd.f32 %v622, %v408
    %v624 = vadd.f32 %v623, %v412
    %v625 = vadd.f32 %v624, %v418
    %v626 = vadd.f32 %v625, %v422
    %v627 = vadd.f32 %v626, %v428
    %v628 = vadd.f32 %v627, %v432
    %v629 = vadd.f32 %v628, %v438
    %v630 = vadd.f32 %v629, %v442
    %v631 = vadd.f32 %v630, %v448
    %v632 = vadd.f32 %v631, %v452
    %v633 = vadd.f32 %v632, %v458
    %v634 = vadd.f32 %v633, %v462
    %v635 = vadd.f32 %v634, %v468
    %v636 = vadd.f32 %v635, %v472
    %v637 = vadd.f32 %v636, %v478
    %v638 = vadd.f32 %v637, %v482
    %v639 = vadd.f32 %v638, %v488
    %v640 = vadd.f32 %v639, %v492
    %v641 = vadd.f32 %v640, %v498
    %v642 = vadd.f32 %v641, %v502
    %v643 = vadd.f32 %v642, %v508
    %v644 = vadd.f32 %v643, %v512
    %v645 = vadd.f32 %v644, %v518
    %v646 = vadd.f32 %v645, %v522
    %v647 = vadd.f32 %v646, %v528
    %v648 = vadd.f32 %v647, %v532
    %v649 = vadd.f32 %v648, %v538
    %v650 = vadd.f32 %v649, %v542
    %v651 = vadd.f32 %v650, %v548
    %v652 = vadd.f32 %v651, %v552
    %v653 = vadd.f32 %v652, %v558
    %v654 = vadd.f32 %v653, %v562
    %v655 = vadd.f32 %v654, %v568
    %v656 = vadd.f32 %v655, %v572
    %v657 = vadd.f32 %v656, %v578
    %v658 = vadd.f32 %v657, %v582
    %v659 = vadd.f32 %v658, %v588
    %v660 = vadd.f32 %v659, %v592
    %v661 = vrot.slane %v660, 4
    %v662 = vadd.f32 %v660, %v661
    %v663 = vrot.slane %v662, 2
    %v664 = vadd.f32 %v662, %v663
    %v665 = vrot.slane %v664, 1
    %v666 = vadd.f32 %v664, %v665
    %vm667 = vcmask 392192
    %v668 = vsel %vm667, %v280, 0.0
    %v669 = vsel %vm667, %v284, 0.0
    %v670 = vadd.f32 %v668, %v669
    %v671 = vsel %vm667, %v290, 0.0
    %v672 = vadd.f32 %v670, %v671
    %v673 = vsel %vm667, %v294, 0.0
    %v674 = vadd.f32 %v672, %v673
    %v675 = vsel %vm667, %v300, 0.0
    %v676 = vadd.f32 %v674, %v675
    %v677 = vsel %vm667, %v304, 0.0
    %v678 = vadd.f32 %v676, %v677
    %v679 = vsel %vm667, %v310, 0.0
    %v680 = vadd.f32 %v678, %v679
    %v681 = vsel %vm667, %v314, 0.0
    %v682 = vadd.f32 %v680, %v681
    %v683 = vsel %vm667, %v320, 0.0
    %v684 = vadd.f32 %v682, %v683
    %v685 = vsel %vm667, %v324, 0.0
    %v686 = vadd.f32 %v684, %v685
    %v687 = vsel %vm667, %v330, 0.0
    %v688 = vadd.f32 %v686, %v687
    %v689 = vsel %vm667, %v334, 0.0
    %v690 = vadd.f32 %v688, %v689
    %v691 = vsel %vm667, %v340, 0.0
    %v692 = vadd.f32 %v690, %v691
    %v693 = vsel %vm667, %v344, 0.0
    %v694 = vadd.f32 %v692, %v693
    %v695 = vsel %vm667, %v350, 0.0
    %v696 = vadd.f32 %v694, %v695
    %v697 = vsel %vm667, %v354, 0.0
    %v698 = vadd.f32 %v696, %v697
    %v699 = vsel %vm667, %v360, 0.0
    %v700 = vadd.f32 %v698, %v699
    %v701 = vsel %vm667, %v364, 0.0
    %v702 = vadd.f32 %v700, %v701
    %v703 = vsel %vm667, %v370, 0.0
    %v704 = vadd.f32 %v702, %v703
    %v705 = vsel %vm667, %v374, 0.0
    %v706 = vadd.f32 %v704, %v705
    %v707 = vsel %vm667, %v380, 0.0
    %v708 = vadd.f32 %v706, %v707
    %v709 = vsel %vm667, %v384, 0.0
    %v710 = vadd.f32 %v708, %v709
    %v711 = vsel %vm667, %v390, 0.0
    %v712 = vadd.f32 %v710, %v711
    %v713 = vsel %vm667, %v394, 0.0
    %v714 = vadd.f32 %v712, %v713
    %v715 = vsel %vm667, %v400, 0.0
    %v716 = vadd.f32 %v714, %v715
    %v717 = vsel %vm667, %v404, 0.0
    %v718 = vadd.f32 %v716, %v717
    %v719 = vsel %vm667, %v410, 0.0
    %v720 = vadd.f32 %v718, %v719
    %v721 = vsel %vm667, %v414, 0.0
    %v722 = vadd.f32 %v720, %v721
    %v723 = vsel %vm667, %v420, 0.0
    %v724 = vadd.f32 %v722, %v723
    %v725 = vsel %vm667, %v424, 0.0
    %v726 = vadd.f32 %v724, %v725
    %v727 = vsel %vm667, %v430, 0.0
    %v728 = vadd.f32 %v726, %v727
    %v729 = vsel %vm667, %v434, 0.0
    %v730 = vadd.f32 %v728, %v729
    %v731 = vsel %vm667, %v440, 0.0
    %v732 = vadd.f32 %v730, %v731
    %v733 = vsel %vm667, %v444, 0.0
    %v734 = vadd.f32 %v732, %v733
    %v735 = vsel %vm667, %v450, 0.0
    %v736 = vadd.f32 %v734, %v735
    %v737 = vsel %vm667, %v454, 0.0
    %v738 = vadd.f32 %v736, %v737
    %v739 = vsel %vm667, %v460, 0.0
    %v740 = vadd.f32 %v738, %v739
    %v741 = vsel %vm667, %v464, 0.0
    %v742 = vadd.f32 %v740, %v741
    %v743 = vsel %vm667, %v470, 0.0
    %v744 = vadd.f32 %v742, %v743
    %v745 = vsel %vm667, %v474, 0.0
    %v746 = vadd.f32 %v744, %v745
    %v747 = vsel %vm667, %v480, 0.0
    %v748 = vadd.f32 %v746, %v747
    %v749 = vsel %vm667, %v484, 0.0
    %v750 = vadd.f32 %v748, %v749
    %v751 = vsel %vm667, %v490, 0.0
    %v752 = vadd.f32 %v750, %v751
    %v753 = vsel %vm667, %v494, 0.0
    %v754 = vadd.f32 %v752, %v753
    %v755 = vsel %vm667, %v500, 0.0
    %v756 = vadd.f32 %v754, %v755
    %v757 = vsel %vm667, %v504, 0.0
    %v758 = vadd.f32 %v756, %v757
    %v759 = vsel %vm667, %v510, 0.0
    %v760 = vadd.f32 %v758, %v759
    %v761 = vsel %vm667, %v514, 0.0
    %v762 = vadd.f32 %v760, %v761
    %v763 = vsel %vm667, %v520, 0.0
    %v764 = vadd.f32 %v762, %v763
    %v765 = vsel %vm667, %v524, 0.0
    %v766 = vadd.f32 %v764, %v765
    %v767 = vsel %vm667, %v530, 0.0
    %v768 = vadd.f32 %v766, %v767
    %v769 = vsel %vm667, %v534, 0.0
    %v770 = vadd.f32 %v768, %v769
    %v771 = vsel %vm667, %v540, 0.0
    %v772 = vadd.f32 %v770, %v771
    %v773 = vsel %vm667, %v544, 0.0
    %v774 = vadd.f32 %v772, %v773
    %v775 = vsel %vm667, %v550, 0.0
    %v776 = vadd.f32 %v774, %v775
    %v777 = vsel %vm667, %v554, 0.0
    %v778 = vadd.f32 %v776, %v777
    %v779 = vsel %vm667, %v560, 0.0
    %v780 = vadd.f32 %v778, %v779
    %v781 = vsel %vm667, %v564, 0.0
    %v782 = vadd.f32 %v780, %v781
    %v783 = vsel %vm667, %v570, 0.0
    %v784 = vadd.f32 %v782, %v783
    %v785 = vsel %vm667, %v574, 0.0
    %v786 = vadd.f32 %v784, %v785
    %v787 = vsel %vm667, %v580, 0.0
    %v788 = vadd.f32 %v786, %v787
    %v789 = vsel %vm667, %v584, 0.0
    %v790 = vadd.f32 %v788, %v789
    %v791 = vsel %vm667, %v590, 0.0
    %v792 = vadd.f32 %v790, %v791
    %v793 = vsel %vm667, %v594, 0.0
    %v794 = vadd.f32 %v792, %v793
    %v795 = vrot.slane %v794, 4
    %v796 = vadd.f32 %v794, %v795
    %v797 = vrot.slane %v796, 2
    %v798 = vadd.f32 %v796, %v797
    %v799 = vrot.slane %v798, 1
    %v800 = vadd.f32 %v798, %v799
    %v801 = vrcp.pop 512.0
    %v802 = vmul.f32 %v666, %v801
    %v803 = vmul.f32 %v800, %v801
    %v804 = vsub.f32 %v278, %v802
    %v805 = vsub.f32 %v280, %v803
    %v806 = vsub.f32 %v282, %v802
    %v807 = vsub.f32 %v284, %v803
    %v808 = vsub.f32 %v288, %v802
    %v809 = vsub.f32 %v290, %v803
    %v810 = vsub.f32 %v292, %v802
    %v811 = vsub.f32 %v294, %v803
    %v812 = vsub.f32 %v298, %v802
    %v813 = vsub.f32 %v300, %v803
    %v814 = vsub.f32 %v302, %v802
    %v815 = vsub.f32 %v304, %v803
    %v816 = vsub.f32 %v308, %v802
    %v817 = vsub.f32 %v310, %v803
    %v818 = vsub.f32 %v312, %v802
    %v819 = vsub.f32 %v314, %v803
    %v820 = vsub.f32 %v318, %v802
    %v821 = vsub.f32 %v320, %v803
    %v822 = vsub.f32 %v322, %v802
    %v823 = vsub.f32 %v324, %v803
    %v824 = vsub.f32 %v328, %v802
    %v825 = vsub.f32 %v330, %v803
    %v826 = vsub.f32 %v332, %v802
    %v827 = vsub.f32 %v334, %v803
    %v828 = vsub.f32 %v338, %v802
    %v829 = vsub.f32 %v340, %v803
    %v830 = vsub.f32 %v342, %v802
    %v831 = vsub.f32 %v344, %v803
    %v832 = vsub.f32 %v348, %v802
    %v833 = vsub.f32 %v350, %v803
    %v834 = vsub.f32 %v352, %v802
    %v835 = vsub.f32 %v354, %v803
    %v836 = vsub.f32 %v358, %v802
    %v837 = vsub.f32 %v360, %v803
    %v838 = vsub.f32 %v362, %v802
    %v839 = vsub.f32 %v364, %v803
    %v840 = vsub.f32 %v368, %v802
    %v841 = vsub.f32 %v370, %v803
    %v842 = vsub.f32 %v372, %v802
    %v843 = vsub.f32 %v374, %v803
    %v844 = vsub.f32 %v378, %v802
    %v845 = vsub.f32 %v380, %v803
    %v846 = vsub.f32 %v382, %v802
    %v847 = vsub.f32 %v384, %v803
    %v848 = vsub.f32 %v388, %v802
    %v849 = vsub.f32 %v390, %v803
    %v850 = vsub.f32 %v392, %v802
    %v851 = vsub.f32 %v394, %v803
    %v852 = vsub.f32 %v398, %v802
    %v853 = vsub.f32 %v400, %v803
    %v854 = vsub.f32 %v402, %v802
    %v855 = vsub.f32 %v404, %v803
    %v856 = vsub.f32 %v408, %v802
    %v857 = vsub.f32 %v410, %v803
    %v858 = vsub.f32 %v412, %v802
    %v859 = vsub.f32 %v414, %v803
    %v860 = vsub.f32 %v418, %v802
    %v861 = vsub.f32 %v420, %v803
    %v862 = vsub.f32 %v422, %v802
    %v863 = vsub.f32 %v424, %v803
    %v864 = vsub.f32 %v428, %v802
    %v865 = vsub.f32 %v430, %v803
    %v866 = vsub.f32 %v432, %v802
    %v867 = vsub.f32 %v434, %v803
    %v868 = vsub.f32 %v438, %v802
    %v869 = vsub.f32 %v440, %v803
    %v870 = vsub.f32 %v442, %v802
    %v871 = vsub.f32 %v444, %v803
    %v872 = vsub.f32 %v448, %v802
    %v873 = vsub.f32 %v450, %v803
    %v874 = vsub.f32 %v452, %v802
    %v875 = vsub.f32 %v454, %v803
    %v876 = vsub.f32 %v458, %v802
    %v877 = vsub.f32 %v460, %v803
    %v878 = vsub.f32 %v462, %v802
    %v879 = vsub.f32 %v464, %v803
    %v880 = vsub.f32 %v468, %v802
    %v881 = vsub.f32 %v470, %v803
    %v882 = vsub.f32 %v472, %v802
    %v883 = vsub.f32 %v474, %v803
    %v884 = vsub.f32 %v478, %v802
    %v885 = vsub.f32 %v480, %v803
    %v886 = vsub.f32 %v482, %v802
    %v887 = vsub.f32 %v484, %v803
    %v888 = vsub.f32 %v488, %v802
    %v889 = vsub.f32 %v490, %v803
    %v890 = vsub.f32 %v492, %v802
    %v891 = vsub.f32 %v494, %v803
    %v892 = vsub.f32 %v498, %v802
    %v893 = vsub.f32 %v500, %v803
    %v894 = vsub.f32 %v502, %v802
    %v895 = vsub.f32 %v504, %v803
    %v896 = vsub.f32 %v508, %v802
    %v897 = vsub.f32 %v510, %v803
    %v898 = vsub.f32 %v512, %v802
    %v899 = vsub.f32 %v514, %v803
    %v900 = vsub.f32 %v518, %v802
    %v901 = vsub.f32 %v520, %v803
    %v902 = vsub.f32 %v522, %v802
    %v903 = vsub.f32 %v524, %v803
    %v904 = vsub.f32 %v528, %v802
    %v905 = vsub.f32 %v530, %v803
    %v906 = vsub.f32 %v532, %v802
    %v907 = vsub.f32 %v534, %v803
    %v908 = vsub.f32 %v538, %v802
    %v909 = vsub.f32 %v540, %v803
    %v910 = vsub.f32 %v542, %v802
    %v911 = vsub.f32 %v544, %v803
    %v912 = vsub.f32 %v548, %v802
    %v913 = vsub.f32 %v550, %v803
    %v914 = vsub.f32 %v552, %v802
    %v915 = vsub.f32 %v554, %v803
    %v916 = vsub.f32 %v558, %v802
    %v917 = vsub.f32 %v560, %v803
    %v918 = vsub.f32 %v562, %v802
    %v919 = vsub.f32 %v564, %v803
    %v920 = vsub.f32 %v568, %v802
    %v921 = vsub.f32 %v570, %v803
    %v922 = vsub.f32 %v572, %v802
    %v923 = vsub.f32 %v574, %v803
    %v924 = vsub.f32 %v578, %v802
    %v925 = vsub.f32 %v580, %v803
    %v926 = vsub.f32 %v582, %v802
    %v927 = vsub.f32 %v584, %v803
    %v928 = vsub.f32 %v588, %v802
    %v929 = vsub.f32 %v590, %v803
    %v930 = vsub.f32 %v592, %v802
    %v931 = vsub.f32 %v594, %v803
    %v932 = vmul.f32 %v804, %v804
    %v933 = vmul.f32 %v805, %v805
    %v934 = vmul.f32 %v806, %v806
    %v935 = vmul.f32 %v807, %v807
    %v936 = vmul.f32 %v808, %v808
    %v937 = vmul.f32 %v809, %v809
    %v938 = vmul.f32 %v810, %v810
    %v939 = vmul.f32 %v811, %v811
    %v940 = vmul.f32 %v812, %v812
    %v941 = vmul.f32 %v813, %v813
    %v942 = vmul.f32 %v814, %v814
    %v943 = vmul.f32 %v815, %v815
    %v944 = vmul.f32 %v816, %v816
    %v945 = vmul.f32 %v817, %v817
    %v946 = vmul.f32 %v818, %v818
    %v947 = vmul.f32 %v819, %v819
    %v948 = vmul.f32 %v820, %v820
    %v949 = vmul.f32 %v821, %v821
    %v950 = vmul.f32 %v822, %v822
    %v951 = vmul.f32 %v823, %v823
    %v952 = vmul.f32 %v824, %v824
    %v953 = vmul.f32 %v825, %v825
    %v954 = vmul.f32 %v826, %v826
    %v955 = vmul.f32 %v827, %v827
    %v956 = vmul.f32 %v828, %v828
    %v957 = vmul.f32 %v829, %v829
    %v958 = vmul.f32 %v830, %v830
    %v959 = vmul.f32 %v831, %v831
    %v960 = vmul.f32 %v832, %v832
    %v961 = vmul.f32 %v833, %v833
    %v962 = vmul.f32 %v834, %v834
    %v963 = vmul.f32 %v835, %v835
    %v964 = vmul.f32 %v836, %v836
    %v965 = vmul.f32 %v837, %v837
    %v966 = vmul.f32 %v838, %v838
    %v967 = vmul.f32 %v839, %v839
    %v968 = vmul.f32 %v840, %v840
    %v969 = vmul.f32 %v841, %v841
    %v970 = vmul.f32 %v842, %v842
    %v971 = vmul.f32 %v843, %v843
    %v972 = vmul.f32 %v844, %v844
    %v973 = vmul.f32 %v845, %v845
    %v974 = vmul.f32 %v846, %v846
    %v975 = vmul.f32 %v847, %v847
    %v976 = vmul.f32 %v848, %v848
    %v977 = vmul.f32 %v849, %v849
    %v978 = vmul.f32 %v850, %v850
    %v979 = vmul.f32 %v851, %v851
    %v980 = vmul.f32 %v852, %v852
    %v981 = vmul.f32 %v853, %v853
    %v982 = vmul.f32 %v854, %v854
    %v983 = vmul.f32 %v855, %v855
    %v984 = vmul.f32 %v856, %v856
    %v985 = vmul.f32 %v857, %v857
    %v986 = vmul.f32 %v858, %v858
    %v987 = vmul.f32 %v859, %v859
    %v988 = vmul.f32 %v860, %v860
    %v989 = vmul.f32 %v861, %v861
    %v990 = vmul.f32 %v862, %v862
    %v991 = vmul.f32 %v863, %v863
    %v992 = vmul.f32 %v864, %v864
    %v993 = vmul.f32 %v865, %v865
    %v994 = vmul.f32 %v866, %v866
    %v995 = vmul.f32 %v867, %v867
    %v996 = vmul.f32 %v868, %v868
    %v997 = vmul.f32 %v869, %v869
    %v998 = vmul.f32 %v870, %v870
    %v999 = vmul.f32 %v871, %v871
    %v1000 = vmul.f32 %v872, %v872
    %v1001 = vmul.f32 %v873, %v873
    %v1002 = vmul.f32 %v874, %v874
    %v1003 = vmul.f32 %v875, %v875
    %v1004 = vmul.f32 %v876, %v876
    %v1005 = vmul.f32 %v877, %v877
    %v1006 = vmul.f32 %v878, %v878
    %v1007 = vmul.f32 %v879, %v879
    %v1008 = vmul.f32 %v880, %v880
    %v1009 = vmul.f32 %v881, %v881
    %v1010 = vmul.f32 %v882, %v882
    %v1011 = vmul.f32 %v883, %v883
    %v1012 = vmul.f32 %v884, %v884
    %v1013 = vmul.f32 %v885, %v885
    %v1014 = vmul.f32 %v886, %v886
    %v1015 = vmul.f32 %v887, %v887
    %v1016 = vmul.f32 %v888, %v888
    %v1017 = vmul.f32 %v889, %v889
    %v1018 = vmul.f32 %v890, %v890
    %v1019 = vmul.f32 %v891, %v891
    %v1020 = vmul.f32 %v892, %v892
    %v1021 = vmul.f32 %v893, %v893
    %v1022 = vmul.f32 %v894, %v894
    %v1023 = vmul.f32 %v895, %v895
    %v1024 = vmul.f32 %v896, %v896
    %v1025 = vmul.f32 %v897, %v897
    %v1026 = vmul.f32 %v898, %v898
    %v1027 = vmul.f32 %v899, %v899
    %v1028 = vmul.f32 %v900, %v900
    %v1029 = vmul.f32 %v901, %v901
    %v1030 = vmul.f32 %v902, %v902
    %v1031 = vmul.f32 %v903, %v903
    %v1032 = vmul.f32 %v904, %v904
    %v1033 = vmul.f32 %v905, %v905
    %v1034 = vmul.f32 %v906, %v906
    %v1035 = vmul.f32 %v907, %v907
    %v1036 = vmul.f32 %v908, %v908
    %v1037 = vmul.f32 %v909, %v909
    %v1038 = vmul.f32 %v910, %v910
    %v1039 = vmul.f32 %v911, %v911
    %v1040 = vmul.f32 %v912, %v912
    %v1041 = vmul.f32 %v913, %v913
    %v1042 = vmul.f32 %v914, %v914
    %v1043 = vmul.f32 %v915, %v915
    %v1044 = vmul.f32 %v916, %v916
    %v1045 = vmul.f32 %v917, %v917
    %v1046 = vmul.f32 %v918, %v918
    %v1047 = vmul.f32 %v919, %v919
    %v1048 = vmul.f32 %v920, %v920
    %v1049 = vmul.f32 %v921, %v921
    %v1050 = vmul.f32 %v922, %v922
    %v1051 = vmul.f32 %v923, %v923
    %v1052 = vmul.f32 %v924, %v924
    %v1053 = vmul.f32 %v925, %v925
    %v1054 = vmul.f32 %v926, %v926
    %v1055 = vmul.f32 %v927, %v927
    %v1056 = vmul.f32 %v928, %v928
    %v1057 = vmul.f32 %v929, %v929
    %v1058 = vmul.f32 %v930, %v930
    %v1059 = vmul.f32 %v931, %v931
    %v1060 = vadd.f32 %v932, %v934
    %v1061 = vadd.f32 %v1060, %v936
    %v1062 = vadd.f32 %v1061, %v938
    %v1063 = vadd.f32 %v1062, %v940
    %v1064 = vadd.f32 %v1063, %v942
    %v1065 = vadd.f32 %v1064, %v944
    %v1066 = vadd.f32 %v1065, %v946
    %v1067 = vadd.f32 %v1066, %v948
    %v1068 = vadd.f32 %v1067, %v950
    %v1069 = vadd.f32 %v1068, %v952
    %v1070 = vadd.f32 %v1069, %v954
    %v1071 = vadd.f32 %v1070, %v956
    %v1072 = vadd.f32 %v1071, %v958
    %v1073 = vadd.f32 %v1072, %v960
    %v1074 = vadd.f32 %v1073, %v962
    %v1075 = vadd.f32 %v1074, %v964
    %v1076 = vadd.f32 %v1075, %v966
    %v1077 = vadd.f32 %v1076, %v968
    %v1078 = vadd.f32 %v1077, %v970
    %v1079 = vadd.f32 %v1078, %v972
    %v1080 = vadd.f32 %v1079, %v974
    %v1081 = vadd.f32 %v1080, %v976
    %v1082 = vadd.f32 %v1081, %v978
    %v1083 = vadd.f32 %v1082, %v980
    %v1084 = vadd.f32 %v1083, %v982
    %v1085 = vadd.f32 %v1084, %v984
    %v1086 = vadd.f32 %v1085, %v986
    %v1087 = vadd.f32 %v1086, %v988
    %v1088 = vadd.f32 %v1087, %v990
    %v1089 = vadd.f32 %v1088, %v992
    %v1090 = vadd.f32 %v1089, %v994
    %v1091 = vadd.f32 %v1090, %v996
    %v1092 = vadd.f32 %v1091, %v998
    %v1093 = vadd.f32 %v1092, %v1000
    %v1094 = vadd.f32 %v1093, %v1002
    %v1095 = vadd.f32 %v1094, %v1004
    %v1096 = vadd.f32 %v1095, %v1006
    %v1097 = vadd.f32 %v1096, %v1008
    %v1098 = vadd.f32 %v1097, %v1010
    %v1099 = vadd.f32 %v1098, %v1012
    %v1100 = vadd.f32 %v1099, %v1014
    %v1101 = vadd.f32 %v1100, %v1016
    %v1102 = vadd.f32 %v1101, %v1018
    %v1103 = vadd.f32 %v1102, %v1020
    %v1104 = vadd.f32 %v1103, %v1022
    %v1105 = vadd.f32 %v1104, %v1024
    %v1106 = vadd.f32 %v1105, %v1026
    %v1107 = vadd.f32 %v1106, %v1028
    %v1108 = vadd.f32 %v1107, %v1030
    %v1109 = vadd.f32 %v1108, %v1032
    %v1110 = vadd.f32 %v1109, %v1034
    %v1111 = vadd.f32 %v1110, %v1036
    %v1112 = vadd.f32 %v1111, %v1038
    %v1113 = vadd.f32 %v1112, %v1040
    %v1114 = vadd.f32 %v1113, %v1042
    %v1115 = vadd.f32 %v1114, %v1044
    %v1116 = vadd.f32 %v1115, %v1046
    %v1117 = vadd.f32 %v1116, %v1048
    %v1118 = vadd.f32 %v1117, %v1050
    %v1119 = vadd.f32 %v1118, %v1052
    %v1120 = vadd.f32 %v1119, %v1054
    %v1121 = vadd.f32 %v1120, %v1056
    %v1122 = vadd.f32 %v1121, %v1058
    %v1123 = vrot.slane %v1122, 4
    %v1124 = vadd.f32 %v1122, %v1123
    %v1125 = vrot.slane %v1124, 2
    %v1126 = vadd.f32 %v1124, %v1125
    %v1127 = vrot.slane %v1126, 1
    %v1128 = vadd.f32 %v1126, %v1127
    %v1129 = vsel %vm667, %v933, 0.0
    %v1130 = vsel %vm667, %v935, 0.0
    %v1131 = vadd.f32 %v1129, %v1130
    %v1132 = vsel %vm667, %v937, 0.0
    %v1133 = vadd.f32 %v1131, %v1132
    %v1134 = vsel %vm667, %v939, 0.0
    %v1135 = vadd.f32 %v1133, %v1134
    %v1136 = vsel %vm667, %v941, 0.0
    %v1137 = vadd.f32 %v1135, %v1136
    %v1138 = vsel %vm667, %v943, 0.0
    %v1139 = vadd.f32 %v1137, %v1138
    %v1140 = vsel %vm667, %v945, 0.0
    %v1141 = vadd.f32 %v1139, %v1140
    %v1142 = vsel %vm667, %v947, 0.0
    %v1143 = vadd.f32 %v1141, %v1142
    %v1144 = vsel %vm667, %v949, 0.0
    %v1145 = vadd.f32 %v1143, %v1144
    %v1146 = vsel %vm667, %v951, 0.0
    %v1147 = vadd.f32 %v1145, %v1146
    %v1148 = vsel %vm667, %v953, 0.0
    %v1149 = vadd.f32 %v1147, %v1148
    %v1150 = vsel %vm667, %v955, 0.0
    %v1151 = vadd.f32 %v1149, %v1150
    %v1152 = vsel %vm667, %v957, 0.0
    %v1153 = vadd.f32 %v1151, %v1152
    %v1154 = vsel %vm667, %v959, 0.0
    %v1155 = vadd.f32 %v1153, %v1154
    %v1156 = vsel %vm667, %v961, 0.0
    %v1157 = vadd.f32 %v1155, %v1156
    %v1158 = vsel %vm667, %v963, 0.0
    %v1159 = vadd.f32 %v1157, %v1158
    %v1160 = vsel %vm667, %v965, 0.0
    %v1161 = vadd.f32 %v1159, %v1160
    %v1162 = vsel %vm667, %v967, 0.0
    %v1163 = vadd.f32 %v1161, %v1162
    %v1164 = vsel %vm667, %v969, 0.0
    %v1165 = vadd.f32 %v1163, %v1164
    %v1166 = vsel %vm667, %v971, 0.0
    %v1167 = vadd.f32 %v1165, %v1166
    %v1168 = vsel %vm667, %v973, 0.0
    %v1169 = vadd.f32 %v1167, %v1168
    %v1170 = vsel %vm667, %v975, 0.0
    %v1171 = vadd.f32 %v1169, %v1170
    %v1172 = vsel %vm667, %v977, 0.0
    %v1173 = vadd.f32 %v1171, %v1172
    %v1174 = vsel %vm667, %v979, 0.0
    %v1175 = vadd.f32 %v1173, %v1174
    %v1176 = vsel %vm667, %v981, 0.0
    %v1177 = vadd.f32 %v1175, %v1176
    %v1178 = vsel %vm667, %v983, 0.0
    %v1179 = vadd.f32 %v1177, %v1178
    %v1180 = vsel %vm667, %v985, 0.0
    %v1181 = vadd.f32 %v1179, %v1180
    %v1182 = vsel %vm667, %v987, 0.0
    %v1183 = vadd.f32 %v1181, %v1182
    %v1184 = vsel %vm667, %v989, 0.0
    %v1185 = vadd.f32 %v1183, %v1184
    %v1186 = vsel %vm667, %v991, 0.0
    %v1187 = vadd.f32 %v1185, %v1186
    %v1188 = vsel %vm667, %v993, 0.0
    %v1189 = vadd.f32 %v1187, %v1188
    %v1190 = vsel %vm667, %v995, 0.0
    %v1191 = vadd.f32 %v1189, %v1190
    %v1192 = vsel %vm667, %v997, 0.0
    %v1193 = vadd.f32 %v1191, %v1192
    %v1194 = vsel %vm667, %v999, 0.0
    %v1195 = vadd.f32 %v1193, %v1194
    %v1196 = vsel %vm667, %v1001, 0.0
    %v1197 = vadd.f32 %v1195, %v1196
    %v1198 = vsel %vm667, %v1003, 0.0
    %v1199 = vadd.f32 %v1197, %v1198
    %v1200 = vsel %vm667, %v1005, 0.0
    %v1201 = vadd.f32 %v1199, %v1200
    %v1202 = vsel %vm667, %v1007, 0.0
    %v1203 = vadd.f32 %v1201, %v1202
    %v1204 = vsel %vm667, %v1009, 0.0
    %v1205 = vadd.f32 %v1203, %v1204
    %v1206 = vsel %vm667, %v1011, 0.0
    %v1207 = vadd.f32 %v1205, %v1206
    %v1208 = vsel %vm667, %v1013, 0.0
    %v1209 = vadd.f32 %v1207, %v1208
    %v1210 = vsel %vm667, %v1015, 0.0
    %v1211 = vadd.f32 %v1209, %v1210
    %v1212 = vsel %vm667, %v1017, 0.0
    %v1213 = vadd.f32 %v1211, %v1212
    %v1214 = vsel %vm667, %v1019, 0.0
    %v1215 = vadd.f32 %v1213, %v1214
    %v1216 = vsel %vm667, %v1021, 0.0
    %v1217 = vadd.f32 %v1215, %v1216
    %v1218 = vsel %vm667, %v1023, 0.0
    %v1219 = vadd.f32 %v1217, %v1218
    %v1220 = vsel %vm667, %v1025, 0.0
    %v1221 = vadd.f32 %v1219, %v1220
    %v1222 = vsel %vm667, %v1027, 0.0
    %v1223 = vadd.f32 %v1221, %v1222
    %v1224 = vsel %vm667, %v1029, 0.0
    %v1225 = vadd.f32 %v1223, %v1224
    %v1226 = vsel %vm667, %v1031, 0.0
    %v1227 = vadd.f32 %v1225, %v1226
    %v1228 = vsel %vm667, %v1033, 0.0
    %v1229 = vadd.f32 %v1227, %v1228
    %v1230 = vsel %vm667, %v1035, 0.0
    %v1231 = vadd.f32 %v1229, %v1230
    %v1232 = vsel %vm667, %v1037, 0.0
    %v1233 = vadd.f32 %v1231, %v1232
    %v1234 = vsel %vm667, %v1039, 0.0
    %v1235 = vadd.f32 %v1233, %v1234
    %v1236 = vsel %vm667, %v1041, 0.0
    %v1237 = vadd.f32 %v1235, %v1236
    %v1238 = vsel %vm667, %v1043, 0.0
    %v1239 = vadd.f32 %v1237, %v1238
    %v1240 = vsel %vm667, %v1045, 0.0
    %v1241 = vadd.f32 %v1239, %v1240
    %v1242 = vsel %vm667, %v1047, 0.0
    %v1243 = vadd.f32 %v1241, %v1242
    %v1244 = vsel %vm667, %v1049, 0.0
    %v1245 = vadd.f32 %v1243, %v1244
    %v1246 = vsel %vm667, %v1051, 0.0
    %v1247 = vadd.f32 %v1245, %v1246
    %v1248 = vsel %vm667, %v1053, 0.0
    %v1249 = vadd.f32 %v1247, %v1248
    %v1250 = vsel %vm667, %v1055, 0.0
    %v1251 = vadd.f32 %v1249, %v1250
    %v1252 = vsel %vm667, %v1057, 0.0
    %v1253 = vadd.f32 %v1251, %v1252
    %v1254 = vsel %vm667, %v1059, 0.0
    %v1255 = vadd.f32 %v1253, %v1254
    %v1256 = vrot.slane %v1255, 4
    %v1257 = vadd.f32 %v1255, %v1256
    %v1258 = vrot.slane %v1257, 2
    %v1259 = vadd.f32 %v1257, %v1258
    %v1260 = vrot.slane %v1259, 1
    %v1261 = vadd.f32 %v1259, %v1260
    %v1262 = vmul.f32 %v1128, %v801
    %v1263 = vmul.f32 %v1261, %v801
    %v1264 = vadd.f32 %v1262, 0.001
    %v1265 = vadd.f32 %v1263, 0.001
    %v1266 = vrsqrt.pop %v1264
    %v1267 = vrsqrt.pop %v1265
    %v1270 = vcombine.low %v1266, %v1267
    %v1272 = vunpack.c.l.s4 1966171168
    %v1273 = vunpack.c.0.s8 %v1272
    %v1274 = vlaneseq
    %v1275 = vshrl.u32 %v1274, 7
    %v1276 = vsub.s32 %v1273, %v1275
    %v1277 = vrot.slane %v1270, %v1276
    %v1279 = vunpack.c.l.s4 1966171168
    %v1280 = vunpack.c.0.s8 %v1279
    %v1281 = vlaneseq
    %v1282 = vshrl.u32 %v1281, 7
    %v1283 = vsub.s32 %v1280, %v1282
    %v1284 = vrot.slane %v1277, %v1283
    %v1286 = vmul.f32 %v596, %v1284
    %v1288 = vlaneseq
    %v1289 = vshrl.u32 %v1288, 7
    %v1290 = vsub.s32 0, %v1289
    %v1291 = vrot.slane %v1286, %v1290
    %v1292 = vlaneseq
    %v1293 = vshrl.u32 %v1292, 7
    %v1294 = vsub.s32 1, %v1293
    %v1295 = vrot.slane %v1286, %v1294
    %v1298 = vmul.f32 %v802, %v1291
    %v1299 = vmul.f32 %v803, %v1295
    %v1302 = vcombine.low %v1298, %v1299
    %v1304 = vunpack.c.l.s4 1966171168
    %v1305 = vunpack.c.0.s8 %v1304
    %v1306 = vlaneseq
    %v1307 = vshrl.u32 %v1306, 7
    %v1308 = vsub.s32 %v1305, %v1307
    %v1309 = vrot.slane %v1302, %v1308
    %v1311 = vunpack.c.l.s4 1966171168
    %v1312 = vunpack.c.0.s8 %v1311
    %v1313 = vlaneseq
    %v1314 = vshrl.u32 %v1313, 7
    %v1315 = vsub.s32 %v1312, %v1314
    %v1316 = vrot.slane %v1309, %v1315
    %v1318 = vsub.f32 %v597, %v1316
    %v1319 = vmul.f32 %v278, %v1291
    %v1320 = vmul.f32 %v280, %v1295
    %v1321 = vmul.f32 %v282, %v1291
    %v1322 = vmul.f32 %v284, %v1295
    %v1323 = vmul.f32 %v288, %v1291
    %v1324 = vmul.f32 %v290, %v1295
    %v1325 = vmul.f32 %v292, %v1291
    %v1326 = vmul.f32 %v294, %v1295
    %v1327 = vmul.f32 %v298, %v1291
    %v1328 = vmul.f32 %v300, %v1295
    %v1329 = vmul.f32 %v302, %v1291
    %v1330 = vmul.f32 %v304, %v1295
    %v1331 = vmul.f32 %v308, %v1291
    %v1332 = vmul.f32 %v310, %v1295
    %v1333 = vmul.f32 %v312, %v1291
    %v1334 = vmul.f32 %v314, %v1295
    %v1335 = vmul.f32 %v318, %v1291
    %v1336 = vmul.f32 %v320, %v1295
    %v1337 = vmul.f32 %v322, %v1291
    %v1338 = vmul.f32 %v324, %v1295
    %v1339 = vmul.f32 %v328, %v1291
    %v1340 = vmul.f32 %v330, %v1295
    %v1341 = vmul.f32 %v332, %v1291
    %v1342 = vmul.f32 %v334, %v1295
    %v1343 = vmul.f32 %v338, %v1291
    %v1344 = vmul.f32 %v340, %v1295
    %v1345 = vmul.f32 %v342, %v1291
    %v1346 = vmul.f32 %v344, %v1295
    %v1347 = vmul.f32 %v348, %v1291
    %v1348 = vmul.f32 %v350, %v1295
    %v1349 = vmul.f32 %v352, %v1291
    %v1350 = vmul.f32 %v354, %v1295
    %v1351 = vmul.f32 %v358, %v1291
    %v1352 = vmul.f32 %v360, %v1295
    %v1353 = vmul.f32 %v362, %v1291
    %v1354 = vmul.f32 %v364, %v1295
    %v1355 = vmul.f32 %v368, %v1291
    %v1356 = vmul.f32 %v370, %v1295
    %v1357 = vmul.f32 %v372, %v1291
    %v1358 = vmul.f32 %v374, %v1295
    %v1359 = vmul.f32 %v378, %v1291
    %v1360 = vmul.f32 %v380, %v1295
    %v1361 = vmul.f32 %v382, %v1291
    %v1362 = vmul.f32 %v384, %v1295
    %v1363 = vmul.f32 %v388, %v1291
    %v1364 = vmul.f32 %v390, %v1295
    %v1365 = vmul.f32 %v392, %v1291
    %v1366 = vmul.f32 %v394, %v1295
    %v1367 = vmul.f32 %v398, %v1291
    %v1368 = vmul.f32 %v400, %v1295
    %v1369 = vmul.f32 %v402, %v1291
    %v1370 = vmul.f32 %v404, %v1295
    %v1371 = vmul.f32 %v408, %v1291
    %v1372 = vmul.f32 %v410, %v1295
    %v1373 = vmul.f32 %v412, %v1291
    %v1374 = vmul.f32 %v414, %v1295
    %v1375 = vmul.f32 %v418, %v1291
    %v1376 = vmul.f32 %v420, %v1295
    %v1377 = vmul.f32 %v422, %v1291
    %v1378 = vmul.f32 %v424, %v1295
    %v1379 = vmul.f32 %v428, %v1291
    %v1380 = vmul.f32 %v430, %v1295
    %v1381 = vmul.f32 %v432, %v1291
    %v1382 = vmul.f32 %v434, %v1295
    %v1383 = vmul.f32 %v438, %v1291
    %v1384 = vmul.f32 %v440, %v1295
    %v1385 = vmul.f32 %v442, %v1291
    %v1386 = vmul.f32 %v444, %v1295
    %v1387 = vmul.f32 %v448, %v1291
    %v1388 = vmul.f32 %v450, %v1295
    %v1389 = vmul.f32 %v452, %v1291
    %v1390 = vmul.f32 %v454, %v1295
    %v1391 = vmul.f32 %v458, %v1291
    %v1392 = vmul.f32 %v460, %v1295
    %v1393 = vmul.f32 %v462, %v1291
    %v1394 = vmul.f32 %v464, %v1295
    %v1395 = vmul.f32 %v468, %v1291
    %v1396 = vmul.f32 %v470, %v1295
    %v1397 = vmul.f32 %v472, %v1291
    %v1398 = vmul.f32 %v474, %v1295
    %v1399 = vmul.f32 %v478, %v1291
    %v1400 = vmul.f32 %v480, %v1295
    %v1401 = vmul.f32 %v482, %v1291
    %v1402 = vmul.f32 %v484, %v1295
    %v1403 = vmul.f32 %v488, %v1291
    %v1404 = vmul.f32 %v490, %v1295
    %v1405 = vmul.f32 %v492, %v1291
    %v1406 = vmul.f32 %v494, %v1295
    %v1407 = vmul.f32 %v498, %v1291
    %v1408 = vmul.f32 %v500, %v1295
    %v1409 = vmul.f32 %v502, %v1291
    %v1410 = vmul.f32 %v504, %v1295
    %v1411 = vmul.f32 %v508, %v1291
    %v1412 = vmul.f32 %v510, %v1295
    %v1413 = vmul.f32 %v512, %v1291
    %v1414 = vmul.f32 %v514, %v1295
    %v1415 = vmul.f32 %v518, %v1291
    %v1416 = vmul.f32 %v520, %v1295
    %v1417 = vmul.f32 %v522, %v1291
    %v1418 = vmul.f32 %v524, %v1295
    %v1419 = vmul.f32 %v528, %v1291
    %v1420 = vmul.f32 %v530, %v1295
    %v1421 = vmul.f32 %v532, %v1291
    %v1422 = vmul.f32 %v534, %v1295
    %v1423 = vmul.f32 %v538, %v1291
    %v1424 = vmul.f32 %v540, %v1295
    %v1425 = vmul.f32 %v542, %v1291
    %v1426 = vmul.f32 %v544, %v1295
    %v1427 = vmul.f32 %v548, %v1291
    %v1428 = vmul.f32 %v550, %v1295
    %v1429 = vmul.f32 %v552, %v1291
    %v1430 = vmul.f32 %v554, %v1295
    %v1431 = vmul.f32 %v558, %v1291
    %v1432 = vmul.f32 %v560, %v1295
    %v1433 = vmul.f32 %v562, %v1291
    %v1434 = vmul.f32 %v564, %v1295
    %v1435 = vmul.f32 %v568, %v1291
    %v1436 = vmul.f32 %v570, %v1295
    %v1437 = vmul.f32 %v572, %v1291
    %v1438 = vmul.f32 %v574, %v1295
    %v1439 = vmul.f32 %v578, %v1291
    %v1440 = vmul.f32 %v580, %v1295
    %v1441 = vmul.f32 %v582, %v1291
    %v1442 = vmul.f32 %v584, %v1295
    %v1443 = vmul.f32 %v588, %v1291
    %v1444 = vmul.f32 %v590, %v1295
    %v1445 = vmul.f32 %v592, %v1291
    %v1446 = vmul.f32 %v594, %v1295
    %v1448 = vlaneseq
    %v1449 = vshrl.u32 %v1448, 7
    %v1450 = vsub.s32 0, %v1449
    %v1451 = vrot.slane %v1318, %v1450
    %v1452 = vlaneseq
    %v1453 = vshrl.u32 %v1452, 7
    %v1454 = vsub.s32 1, %v1453
    %v1455 = vrot.slane %v1318, %v1454
    %v1458 = vadd.f32 %v1319, %v1451
    %v1459 = vadd.f32 %v1320, %v1455
    %v1460 = vadd.f32 %v1321, %v1451
    %v1461 = vadd.f32 %v1322, %v1455
    %v1462 = vadd.f32 %v1323, %v1451
    %v1463 = vadd.f32 %v1324, %v1455
    %v1464 = vadd.f32 %v1325, %v1451
    %v1465 = vadd.f32 %v1326, %v1455
    %v1466 = vadd.f32 %v1327, %v1451
    %v1467 = vadd.f32 %v1328, %v1455
    %v1468 = vadd.f32 %v1329, %v1451
    %v1469 = vadd.f32 %v1330, %v1455
    %v1470 = vadd.f32 %v1331, %v1451
    %v1471 = vadd.f32 %v1332, %v1455
    %v1472 = vadd.f32 %v1333, %v1451
    %v1473 = vadd.f32 %v1334, %v1455
    %v1474 = vadd.f32 %v1335, %v1451
    %v1475 = vadd.f32 %v1336, %v1455
    %v1476 = vadd.f32 %v1337, %v1451
    %v1477 = vadd.f32 %v1338, %v1455
    %v1478 = vadd.f32 %v1339, %v1451
    %v1479 = vadd.f32 %v1340, %v1455
    %v1480 = vadd.f32 %v1341, %v1451
    %v1481 = vadd.f32 %v1342, %v1455
    %v1482 = vadd.f32 %v1343, %v1451
    %v1483 = vadd.f32 %v1344, %v1455
    %v1484 = vadd.f32 %v1345, %v1451
    %v1485 = vadd.f32 %v1346, %v1455
    %v1486 = vadd.f32 %v1347, %v1451
    %v1487 = vadd.f32 %v1348, %v1455
    %v1488 = vadd.f32 %v1349, %v1451
    %v1489 = vadd.f32 %v1350, %v1455
    %v1490 = vadd.f32 %v1351, %v1451
    %v1491 = vadd.f32 %v1352, %v1455
    %v1492 = vadd.f32 %v1353, %v1451
    %v1493 = vadd.f32 %v1354, %v1455
    %v1494 = vadd.f32 %v1355, %v1451
    %v1495 = vadd.f32 %v1356, %v1455
    %v1496 = vadd.f32 %v1357, %v1451
    %v1497 = vadd.f32 %v1358, %v1455
    %v1498 = vadd.f32 %v1359, %v1451
    %v1499 = vadd.f32 %v1360, %v1455
    %v1500 = vadd.f32 %v1361, %v1451
    %v1501 = vadd.f32 %v1362, %v1455
    %v1502 = vadd.f32 %v1363, %v1451
    %v1503 = vadd.f32 %v1364, %v1455
    %v1504 = vadd.f32 %v1365, %v1451
    %v1505 = vadd.f32 %v1366, %v1455
    %v1506 = vadd.f32 %v1367, %v1451
    %v1507 = vadd.f32 %v1368, %v1455
    %v1508 = vadd.f32 %v1369, %v1451
    %v1509 = vadd.f32 %v1370, %v1455
    %v1510 = vadd.f32 %v1371, %v1451
    %v1511 = vadd.f32 %v1372, %v1455
    %v1512 = vadd.f32 %v1373, %v1451
    %v1513 = vadd.f32 %v1374, %v1455
    %v1514 = vadd.f32 %v1375, %v1451
    %v1515 = vadd.f32 %v1376, %v1455
    %v1516 = vadd.f32 %v1377, %v1451
    %v1517 = vadd.f32 %v1378, %v1455
    %v1518 = vadd.f32 %v1379, %v1451
    %v1519 = vadd.f32 %v1380, %v1455
    %v1520 = vadd.f32 %v1381, %v1451
    %v1521 = vadd.f32 %v1382, %v1455
    %v1522 = vadd.f32 %v1383, %v1451
    %v1523 = vadd.f32 %v1384, %v1455
    %v1524 = vadd.f32 %v1385, %v1451
    %v1525 = vadd.f32 %v1386, %v1455
    %v1526 = vadd.f32 %v1387, %v1451
    %v1527 = vadd.f32 %v1388, %v1455
    %v1528 = vadd.f32 %v1389, %v1451
    %v1529 = vadd.f32 %v1390, %v1455
    %v1530 = vadd.f32 %v1391, %v1451
    %v1531 = vadd.f32 %v1392, %v1455
    %v1532 = vadd.f32 %v1393, %v1451
    %v1533 = vadd.f32 %v1394, %v1455
    %v1534 = vadd.f32 %v1395, %v1451
    %v1535 = vadd.f32 %v1396, %v1455
    %v1536 = vadd.f32 %v1397, %v1451
    %v1537 = vadd.f32 %v1398, %v1455
    %v1538 = vadd.f32 %v1399, %v1451
    %v1539 = vadd.f32 %v1400, %v1455
    %v1540 = vadd.f32 %v1401, %v1451
    %v1541 = vadd.f32 %v1402, %v1455
    %v1542 = vadd.f32 %v1403, %v1451
    %v1543 = vadd.f32 %v1404, %v1455
    %v1544 = vadd.f32 %v1405, %v1451
    %v1545 = vadd.f32 %v1406, %v1455
    %v1546 = vadd.f32 %v1407, %v1451
    %v1547 = vadd.f32 %v1408, %v1455
    %v1548 = vadd.f32 %v1409, %v1451
    %v1549 = vadd.f32 %v1410, %v1455
    %v1550 = vadd.f32 %v1411, %v1451
    %v1551 = vadd.f32 %v1412, %v1455
    %v1552 = vadd.f32 %v1413, %v1451
    %v1553 = vadd.f32 %v1414, %v1455
    %v1554 = vadd.f32 %v1415, %v1451
    %v1555 = vadd.f32 %v1416, %v1455
    %v1556 = vadd.f32 %v1417, %v1451
    %v1557 = vadd.f32 %v1418, %v1455
    %v1558 = vadd.f32 %v1419, %v1451
    %v1559 = vadd.f32 %v1420, %v1455
    %v1560 = vadd.f32 %v1421, %v1451
    %v1561 = vadd.f32 %v1422, %v1455
    %v1562 = vadd.f32 %v1423, %v1451
    %v1563 = vadd.f32 %v1424, %v1455
    %v1564 = vadd.f32 %v1425, %v1451
    %v1565 = vadd.f32 %v1426, %v1455
    %v1566 = vadd.f32 %v1427, %v1451
    %v1567 = vadd.f32 %v1428, %v1455
    %v1568 = vadd.f32 %v1429, %v1451
    %v1569 = vadd.f32 %v1430, %v1455
    %v1570 = vadd.f32 %v1431, %v1451
    %v1571 = vadd.f32 %v1432, %v1455
    %v1572 = vadd.f32 %v1433, %v1451
    %v1573 = vadd.f32 %v1434, %v1455
    %v1574 = vadd.f32 %v1435, %v1451
    %v1575 = vadd.f32 %v1436, %v1455
    %v1576 = vadd.f32 %v1437, %v1451
    %v1577 = vadd.f32 %v1438, %v1455
    %v1578 = vadd.f32 %v1439, %v1451
    %v1579 = vadd.f32 %v1440, %v1455
    %v1580 = vadd.f32 %v1441, %v1451
    %v1581 = vadd.f32 %v1442, %v1455
    %v1582 = vadd.f32 %v1443, %v1451
    %v1583 = vadd.f32 %v1444, %v1455
    %v1584 = vadd.f32 %v1445, %v1451
    %v1585 = vadd.f32 %v1446, %v1455
    %v1586 = vmax.f32 %v1458, 0.0
    %v1587 = vmax.f32 %v1459, 0.0
    %v1588 = vmax.f32 %v1460, 0.0
    %v1589 = vmax.f32 %v1461, 0.0
    %v1590 = vmax.f32 %v1462, 0.0
    %v1591 = vmax.f32 %v1463, 0.0
    %v1592 = vmax.f32 %v1464, 0.0
    %v1593 = vmax.f32 %v1465, 0.0
    %v1594 = vmax.f32 %v1466, 0.0
    %v1595 = vmax.f32 %v1467, 0.0
    %v1596 = vmax.f32 %v1468, 0.0
    %v1597 = vmax.f32 %v1469, 0.0
    %v1598 = vmax.f32 %v1470, 0.0
    %v1599 = vmax.f32 %v1471, 0.0
    %v1600 = vmax.f32 %v1472, 0.0
    %v1601 = vmax.f32 %v1473, 0.0
    %v1602 = vmax.f32 %v1474, 0.0
    %v1603 = vmax.f32 %v1475, 0.0
    %v1604 = vmax.f32 %v1476, 0.0
    %v1605 = vmax.f32 %v1477, 0.0
    %v1606 = vmax.f32 %v1478, 0.0
    %v1607 = vmax.f32 %v1479, 0.0
    %v1608 = vmax.f32 %v1480, 0.0
    %v1609 = vmax.f32 %v1481, 0.0
    %v1610 = vmax.f32 %v1482, 0.0
    %v1611 = vmax.f32 %v1483, 0.0
    %v1612 = vmax.f32 %v1484, 0.0
    %v1613 = vmax.f32 %v1485, 0.0
    %v1614 = vmax.f32 %v1486, 0.0
    %v1615 = vmax.f32 %v1487, 0.0
    %v1616 = vmax.f32 %v1488, 0.0
    %v1617 = vmax.f32 %v1489, 0.0
    %v1618 = vmax.f32 %v1490, 0.0
    %v1619 = vmax.f32 %v1491, 0.0
    %v1620 = vmax.f32 %v1492, 0.0
    %v1621 = vmax.f32 %v1493, 0.0
    %v1622 = vmax.f32 %v1494, 0.0
    %v1623 = vmax.f32 %v1495, 0.0
    %v1624 = vmax.f32 %v1496, 0.0
    %v1625 = vmax.f32 %v1497, 0.0
    %v1626 = vmax.f32 %v1498, 0.0
    %v1627 = vmax.f32 %v1499, 0.0
    %v1628 = vmax.f32 %v1500, 0.0
    %v1629 = vmax.f32 %v1501, 0.0
    %v1630 = vmax.f32 %v1502, 0.0
    %v1631 = vmax.f32 %v1503, 0.0
    %v1632 = vmax.f32 %v1504, 0.0
    %v1633 = vmax.f32 %v1505, 0.0
    %v1634 = vmax.f32 %v1506, 0.0
    %v1635 = vmax.f32 %v1507, 0.0
    %v1636 = vmax.f32 %v1508, 0.0
    %v1637 = vmax.f32 %v1509, 0.0
    %v1638 = vmax.f32 %v1510, 0.0
    %v1639 = vmax.f32 %v1511, 0.0
    %v1640 = vmax.f32 %v1512, 0.0
    %v1641 = vmax.f32 %v1513, 0.0
    %v1642 = vmax.f32 %v1514, 0.0
    %v1643 = vmax.f32 %v1515, 0.0
    %v1644 = vmax.f32 %v1516, 0.0
    %v1645 = vmax.f32 %v1517, 0.0
    %v1646 = vmax.f32 %v1518, 0.0
    %v1647 = vmax.f32 %v1519, 0.0
    %v1648 = vmax.f32 %v1520, 0.0
    %v1649 = vmax.f32 %v1521, 0.0
    %v1650 = vmax.f32 %v1522, 0.0
    %v1651 = vmax.f32 %v1523, 0.0
    %v1652 = vmax.f32 %v1524, 0.0
    %v1653 = vmax.f32 %v1525, 0.0
    %v1654 = vmax.f32 %v1526, 0.0
    %v1655 = vmax.f32 %v1527, 0.0
    %v1656 = vmax.f32 %v1528, 0.0
    %v1657 = vmax.f32 %v1529, 0.0
    %v1658 = vmax.f32 %v1530, 0.0
    %v1659 = vmax.f32 %v1531, 0.0
    %v1660 = vmax.f32 %v1532, 0.0
    %v1661 = vmax.f32 %v1533, 0.0
    %v1662 = vmax.f32 %v1534, 0.0
    %v1663 = vmax.f32 %v1535, 0.0
    %v1664 = vmax.f32 %v1536, 0.0
    %v1665 = vmax.f32 %v1537, 0.0
    %v1666 = vmax.f32 %v1538, 0.0
    %v1667 = vmax.f32 %v1539, 0.0
    %v1668 = vmax.f32 %v1540, 0.0
    %v1669 = vmax.f32 %v1541, 0.0
    %v1670 = vmax.f32 %v1542, 0.0
    %v1671 = vmax.f32 %v1543, 0.0
    %v1672 = vmax.f32 %v1544, 0.0
    %v1673 = vmax.f32 %v1545, 0.0
    %v1674 = vmax.f32 %v1546, 0.0
    %v1675 = vmax.f32 %v1547, 0.0
    %v1676 = vmax.f32 %v1548, 0.0
    %v1677 = vmax.f32 %v1549, 0.0
    %v1678 = vmax.f32 %v1550, 0.0
    %v1679 = vmax.f32 %v1551, 0.0
    %v1680 = vmax.f32 %v1552, 0.0
    %v1681 = vmax.f32 %v1553, 0.0
    %v1682 = vmax.f32 %v1554, 0.0
    %v1683 = vmax.f32 %v1555, 0.0
    %v1684 = vmax.f32 %v1556, 0.0
    %v1685 = vmax.f32 %v1557, 0.0
    %v1686 = vmax.f32 %v1558, 0.0
    %v1687 = vmax.f32 %v1559, 0.0
    %v1688 = vmax.f32 %v1560, 0.0
    %v1689 = vmax.f32 %v1561, 0.0
    %v1690 = vmax.f32 %v1562, 0.0
    %v1691 = vmax.f32 %v1563, 0.0
    %v1692 = vmax.f32 %v1564, 0.0
    %v1693 = vmax.f32 %v1565, 0.0
    %v1694 = vmax.f32 %v1566, 0.0
    %v1695 = vmax.f32 %v1567, 0.0
    %v1696 = vmax.f32 %v1568, 0.0
    %v1697 = vmax.f32 %v1569, 0.0
    %v1698 = vmax.f32 %v1570, 0.0
    %v1699 = vmax.f32 %v1571, 0.0
    %v1700 = vmax.f32 %v1572, 0.0
    %v1701 = vmax.f32 %v1573, 0.0
    %v1702 = vmax.f32 %v1574, 0.0
    %v1703 = vmax.f32 %v1575, 0.0
    %v1704 = vmax.f32 %v1576, 0.0
    %v1705 = vmax.f32 %v1577, 0.0
    %v1706 = vmax.f32 %v1578, 0.0
    %v1707 = vmax.f32 %v1579, 0.0
    %v1708 = vmax.f32 %v1580, 0.0
    %v1709 = vmax.f32 %v1581, 0.0
    %v1710 = vmax.f32 %v1582, 0.0
    %v1711 = vmax.f32 %v1583, 0.0
    %v1712 = vmax.f32 %v1584, 0.0
    %v1713 = vmax.f32 %v1585, 0.0
    %vm1714 = vcmask 523264
    %1715 = vst.msk [vmem:[#allocation3] sm:$0xff] %vm1714, %v1586
    %1716 = vst.msk [vmem:[#allocation3 + $0x8] sm:$0xff] %vm1714, %v1588
    %1717 = vst.msk [vmem:[#allocation3 + $0x10] sm:$0xff] %vm1714, %v1590
    %1718 = vst.msk [vmem:[#allocation3 + $0x18] sm:$0xff] %vm1714, %v1592
    %1719 = vst.msk [vmem:[#allocation3 + $0x20] sm:$0xff] %vm1714, %v1594
    %1720 = vst.msk [vmem:[#allocation3 + $0x28] sm:$0xff] %vm1714, %v1596
    %1721 = vst.msk [vmem:[#allocation3 + $0x30] sm:$0xff] %vm1714, %v1598
    %1722 = vst.msk [vmem:[#allocation3 + $0x38] sm:$0xff] %vm1714, %v1600
    %1723 = vst.msk [vmem:[#allocation3 + $0x40] sm:$0xff] %vm1714, %v1602
    %1724 = vst.msk [vmem:[#allocation3 + $0x48] sm:$0xff] %vm1714, %v1604
    %1725 = vst.msk [vmem:[#allocation3 + $0x50] sm:$0xff] %vm1714, %v1606
    %1726 = vst.msk [vmem:[#allocation3 + $0x58] sm:$0xff] %vm1714, %v1608
    %1727 = vst.msk [vmem:[#allocation3 + $0x60] sm:$0xff] %vm1714, %v1610
    %1728 = vst.msk [vmem:[#allocation3 + $0x68] sm:$0xff] %vm1714, %v1612
    %1729 = vst.msk [vmem:[#allocation3 + $0x70] sm:$0xff] %vm1714, %v1614
    %1730 = vst.msk [vmem:[#allocation3 + $0x78] sm:$0xff] %vm1714, %v1616
    %1731 = vst.msk [vmem:[#allocation3 + $0x80] sm:$0xff] %vm1714, %v1618
    %1732 = vst.msk [vmem:[#allocation3 + $0x88] sm:$0xff] %vm1714, %v1620
    %1733 = vst.msk [vmem:[#allocation3 + $0x90] sm:$0xff] %vm1714, %v1622
    %1734 = vst.msk [vmem:[#allocation3 + $0x98] sm:$0xff] %vm1714, %v1624
    %1735 = vst.msk [vmem:[#allocation3 + $0xa0] sm:$0xff] %vm1714, %v1626
    %1736 = vst.msk [vmem:[#allocation3 + $0xa8] sm:$0xff] %vm1714, %v1628
    %1737 = vst.msk [vmem:[#allocation3 + $0xb0] sm:$0xff] %vm1714, %v1630
    %1738 = vst.msk [vmem:[#allocation3 + $0xb8] sm:$0xff] %vm1714, %v1632
    %1739 = vst.msk [vmem:[#allocation3 + $0xc0] sm:$0xff] %vm1714, %v1634
    %1740 = vst.msk [vmem:[#allocation3 + $0xc8] sm:$0xff] %vm1714, %v1636
    %1741 = vst.msk [vmem:[#allocation3 + $0xd0] sm:$0xff] %vm1714, %v1638
    %1742 = vst.msk [vmem:[#allocation3 + $0xd8] sm:$0xff] %vm1714, %v1640
    %1743 = vst.msk [vmem:[#allocation3 + $0xe0] sm:$0xff] %vm1714, %v1642
    %1744 = vst.msk [vmem:[#allocation3 + $0xe8] sm:$0xff] %vm1714, %v1644
    %1745 = vst.msk [vmem:[#allocation3 + $0xf0] sm:$0xff] %vm1714, %v1646
    %1746 = vst.msk [vmem:[#allocation3 + $0xf8] sm:$0xff] %vm1714, %v1648
    %1747 = vst.msk [vmem:[#allocation3 + $0x100] sm:$0xff] %vm1714, %v1650
    %1748 = vst.msk [vmem:[#allocation3 + $0x108] sm:$0xff] %vm1714, %v1652
    %1749 = vst.msk [vmem:[#allocation3 + $0x110] sm:$0xff] %vm1714, %v1654
    %1750 = vst.msk [vmem:[#allocation3 + $0x118] sm:$0xff] %vm1714, %v1656
    %1751 = vst.msk [vmem:[#allocation3 + $0x120] sm:$0xff] %vm1714, %v1658
    %1752 = vst.msk [vmem:[#allocation3 + $0x128] sm:$0xff] %vm1714, %v1660
    %1753 = vst.msk [vmem:[#allocation3 + $0x130] sm:$0xff] %vm1714, %v1662
    %1754 = vst.msk [vmem:[#allocation3 + $0x138] sm:$0xff] %vm1714, %v1664
    %1755 = vst.msk [vmem:[#allocation3 + $0x140] sm:$0xff] %vm1714, %v1666
    %1756 = vst.msk [vmem:[#allocation3 + $0x148] sm:$0xff] %vm1714, %v1668
    %1757 = vst.msk [vmem:[#allocation3 + $0x150] sm:$0xff] %vm1714, %v1670
    %1758 = vst.msk [vmem:[#allocation3 + $0x158] sm:$0xff] %vm1714, %v1672
    %1759 = vst.msk [vmem:[#allocation3 + $0x160] sm:$0xff] %vm1714, %v1674
    %1760 = vst.msk [vmem:[#allocation3 + $0x168] sm:$0xff] %vm1714, %v1676
    %1761 = vst.msk [vmem:[#allocation3 + $0x170] sm:$0xff] %vm1714, %v1678
    %1762 = vst.msk [vmem:[#allocation3 + $0x178] sm:$0xff] %vm1714, %v1680
    %1763 = vst.msk [vmem:[#allocation3 + $0x180] sm:$0xff] %vm1714, %v1682
    %1764 = vst.msk [vmem:[#allocation3 + $0x188] sm:$0xff] %vm1714, %v1684
    %1765 = vst.msk [vmem:[#allocation3 + $0x190] sm:$0xff] %vm1714, %v1686
    %1766 = vst.msk [vmem:[#allocation3 + $0x198] sm:$0xff] %vm1714, %v1688
    %1767 = vst.msk [vmem:[#allocation3 + $0x1a0] sm:$0xff] %vm1714, %v1690
    %1768 = vst.msk [vmem:[#allocation3 + $0x1a8] sm:$0xff] %vm1714, %v1692
    %1769 = vst.msk [vmem:[#allocation3 + $0x1b0] sm:$0xff] %vm1714, %v1694
    %1770 = vst.msk [vmem:[#allocation3 + $0x1b8] sm:$0xff] %vm1714, %v1696
    %1771 = vst.msk [vmem:[#allocation3 + $0x1c0] sm:$0xff] %vm1714, %v1698
    %1772 = vst.msk [vmem:[#allocation3 + $0x1c8] sm:$0xff] %vm1714, %v1700
    %1773 = vst.msk [vmem:[#allocation3 + $0x1d0] sm:$0xff] %vm1714, %v1702
    %1774 = vst.msk [vmem:[#allocation3 + $0x1d8] sm:$0xff] %vm1714, %v1704
    %1775 = vst.msk [vmem:[#allocation3 + $0x1e0] sm:$0xff] %vm1714, %v1706
    %1776 = vst.msk [vmem:[#allocation3 + $0x1e8] sm:$0xff] %vm1714, %v1708
    %1777 = vst.msk [vmem:[#allocation3 + $0x1f0] sm:$0xff] %vm1714, %v1710
    %1778 = vst.msk [vmem:[#allocation3 + $0x1f8] sm:$0xff] %vm1714, %v1712
    %1843 = vrot.lane.b32.xlu0 %v1586, 64
    %v1844 = vpop.permute.xlu0 %1843
    %1845 = vrot.lane.b32.xlu0 %v1588, 64
    %v1846 = vpop.permute.xlu0 %1845
    %1847 = vrot.lane.b32.xlu0 %v1590, 64
    %v1848 = vpop.permute.xlu0 %1847
    %1849 = vrot.lane.b32.xlu0 %v1592, 64
    %v1850 = vpop.permute.xlu0 %1849
    %1851 = vrot.lane.b32.xlu0 %v1594, 64
    %v1852 = vpop.permute.xlu0 %1851
    %1853 = vrot.lane.b32.xlu0 %v1596, 64
    %v1854 = vpop.permute.xlu0 %1853
    %1855 = vrot.lane.b32.xlu0 %v1598, 64
    %v1856 = vpop.permute.xlu0 %1855
    %1857 = vrot.lane.b32.xlu0 %v1600, 64
    %v1858 = vpop.permute.xlu0 %1857
    %1859 = vrot.lane.b32.xlu0 %v1602, 64
    %v1860 = vpop.permute.xlu0 %1859
    %1861 = vrot.lane.b32.xlu0 %v1604, 64
    %v1862 = vpop.permute.xlu0 %1861
    %1863 = vrot.lane.b32.xlu0 %v1606, 64
    %v1864 = vpop.permute.xlu0 %1863
    %1865 = vrot.lane.b32.xlu0 %v1608, 64
    %v1866 = vpop.permute.xlu0 %1865
    %1867 = vrot.lane.b32.xlu0 %v1610, 64
    %v1868 = vpop.permute.xlu0 %1867
    %1869 = vrot.lane.b32.xlu0 %v1612, 64
    %v1870 = vpop.permute.xlu0 %1869
    %1871 = vrot.lane.b32.xlu0 %v1614, 64
    %v1872 = vpop.permute.xlu0 %1871
    %1873 = vrot.lane.b32.xlu0 %v1616, 64
    %v1874 = vpop.permute.xlu0 %1873
    %1875 = vrot.lane.b32.xlu0 %v1618, 64
    %v1876 = vpop.permute.xlu0 %1875
    %1877 = vrot.lane.b32.xlu0 %v1620, 64
    %v1878 = vpop.permute.xlu0 %1877
    %1879 = vrot.lane.b32.xlu0 %v1622, 64
    %v1880 = vpop.permute.xlu0 %1879
    %1881 = vrot.lane.b32.xlu0 %v1624, 64
    %v1882 = vpop.permute.xlu0 %1881
    %1883 = vrot.lane.b32.xlu0 %v1626, 64
    %v1884 = vpop.permute.xlu0 %1883
    %1885 = vrot.lane.b32.xlu0 %v1628, 64
    %v1886 = vpop.permute.xlu0 %1885
    %1887 = vrot.lane.b32.xlu0 %v1630, 64
    %v1888 = vpop.permute.xlu0 %1887
    %1889 = vrot.lane.b32.xlu0 %v1632, 64
    %v1890 = vpop.permute.xlu0 %1889
    %1891 = vrot.lane.b32.xlu0 %v1634, 64
    %v1892 = vpop.permute.xlu0 %1891
    %1893 = vrot.lane.b32.xlu0 %v1636, 64
    %v1894 = vpop.permute.xlu0 %1893
    %1895 = vrot.lane.b32.xlu0 %v1638, 64
    %v1896 = vpop.permute.xlu0 %1895
    %1897 = vrot.lane.b32.xlu0 %v1640, 64
    %v1898 = vpop.permute.xlu0 %1897
    %1899 = vrot.lane.b32.xlu0 %v1642, 64
    %v1900 = vpop.permute.xlu0 %1899
    %1901 = vrot.lane.b32.xlu0 %v1644, 64
    %v1902 = vpop.permute.xlu0 %1901
    %1903 = vrot.lane.b32.xlu0 %v1646, 64
    %v1904 = vpop.permute.xlu0 %1903
    %1905 = vrot.lane.b32.xlu0 %v1648, 64
    %v1906 = vpop.permute.xlu0 %1905
    %1907 = vrot.lane.b32.xlu0 %v1650, 64
    %v1908 = vpop.permute.xlu0 %1907
    %1909 = vrot.lane.b32.xlu0 %v1652, 64
    %v1910 = vpop.permute.xlu0 %1909
    %1911 = vrot.lane.b32.xlu0 %v1654, 64
    %v1912 = vpop.permute.xlu0 %1911
    %1913 = vrot.lane.b32.xlu0 %v1656, 64
    %v1914 = vpop.permute.xlu0 %1913
    %1915 = vrot.lane.b32.xlu0 %v1658, 64
    %v1916 = vpop.permute.xlu0 %1915
    %1917 = vrot.lane.b32.xlu0 %v1660, 64
    %v1918 = vpop.permute.xlu0 %1917
    %1919 = vrot.lane.b32.xlu0 %v1662, 64
    %v1920 = vpop.permute.xlu0 %1919
    %1921 = vrot.lane.b32.xlu0 %v1664, 64
    %v1922 = vpop.permute.xlu0 %1921
    %1923 = vrot.lane.b32.xlu0 %v1666, 64
    %v1924 = vpop.permute.xlu0 %1923
    %1925 = vrot.lane.b32.xlu0 %v1668, 64
    %v1926 = vpop.permute.xlu0 %1925
    %1927 = vrot.lane.b32.xlu0 %v1670, 64
    %v1928 = vpop.permute.xlu0 %1927
    %1929 = vrot.lane.b32.xlu0 %v1672, 64
    %v1930 = vpop.permute.xlu0 %1929
    %1931 = vrot.lane.b32.xlu0 %v1674, 64
    %v1932 = vpop.permute.xlu0 %1931
    %1933 = vrot.lane.b32.xlu0 %v1676, 64
    %v1934 = vpop.permute.xlu0 %1933
    %1935 = vrot.lane.b32.xlu0 %v1678, 64
    %v1936 = vpop.permute.xlu0 %1935
    %1937 = vrot.lane.b32.xlu0 %v1680, 64
    %v1938 = vpop.permute.xlu0 %1937
    %1939 = vrot.lane.b32.xlu0 %v1682, 64
    %v1940 = vpop.permute.xlu0 %1939
    %1941 = vrot.lane.b32.xlu0 %v1684, 64
    %v1942 = vpop.permute.xlu0 %1941
    %1943 = vrot.lane.b32.xlu0 %v1686, 64
    %v1944 = vpop.permute.xlu0 %1943
    %1945 = vrot.lane.b32.xlu0 %v1688, 64
    %v1946 = vpop.permute.xlu0 %1945
    %1947 = vrot.lane.b32.xlu0 %v1690, 64
    %v1948 = vpop.permute.xlu0 %1947
    %1949 = vrot.lane.b32.xlu0 %v1692, 64
    %v1950 = vpop.permute.xlu0 %1949
    %1951 = vrot.lane.b32.xlu0 %v1694, 64
    %v1952 = vpop.permute.xlu0 %1951
    %1953 = vrot.lane.b32.xlu0 %v1696, 64
    %v1954 = vpop.permute.xlu0 %1953
    %1955 = vrot.lane.b32.xlu0 %v1698, 64
    %v1956 = vpop.permute.xlu0 %1955
    %1957 = vrot.lane.b32.xlu0 %v1700, 64
    %v1958 = vpop.permute.xlu0 %1957
    %1959 = vrot.lane.b32.xlu0 %v1702, 64
    %v1960 = vpop.permute.xlu0 %1959
    %1961 = vrot.lane.b32.xlu0 %v1704, 64
    %v1962 = vpop.permute.xlu0 %1961
    %1963 = vrot.lane.b32.xlu0 %v1706, 64
    %v1964 = vpop.permute.xlu0 %1963
    %1965 = vrot.lane.b32.xlu0 %v1708, 64
    %v1966 = vpop.permute.xlu0 %1965
    %1967 = vrot.lane.b32.xlu0 %v1710, 64
    %v1968 = vpop.permute.xlu0 %1967
    %1969 = vrot.lane.b32.xlu0 %v1712, 64
    %v1970 = vpop.permute.xlu0 %1969
    %2035 = vst.msk [vmem:[#allocation5] sm:$0xff] %vm667, %v1844
    %2036 = vst.msk [vmem:[#allocation5 + $0x8] sm:$0xff] %vm667, %v1846
    %2037 = vst.msk [vmem:[#allocation5 + $0x10] sm:$0xff] %vm667, %v1848
    %2038 = vst.msk [vmem:[#allocation5 + $0x18] sm:$0xff] %vm667, %v1850
    %2039 = vst.msk [vmem:[#allocation5 + $0x20] sm:$0xff] %vm667, %v1852
    %2040 = vst.msk [vmem:[#allocation5 + $0x28] sm:$0xff] %vm667, %v1854
    %2041 = vst.msk [vmem:[#allocation5 + $0x30] sm:$0xff] %vm667, %v1856
    %2042 = vst.msk [vmem:[#allocation5 + $0x38] sm:$0xff] %vm667, %v1858
    %2043 = vst.msk [vmem:[#allocation5 + $0x40] sm:$0xff] %vm667, %v1860
    %2044 = vst.msk [vmem:[#allocation5 + $0x48] sm:$0xff] %vm667, %v1862
    %2045 = vst.msk [vmem:[#allocation5 + $0x50] sm:$0xff] %vm667, %v1864
    %2046 = vst.msk [vmem:[#allocation5 + $0x58] sm:$0xff] %vm667, %v1866
    %2047 = vst.msk [vmem:[#allocation5 + $0x60] sm:$0xff] %vm667, %v1868
    %2048 = vst.msk [vmem:[#allocation5 + $0x68] sm:$0xff] %vm667, %v1870
    %2049 = vst.msk [vmem:[#allocation5 + $0x70] sm:$0xff] %vm667, %v1872
    %2050 = vst.msk [vmem:[#allocation5 + $0x78] sm:$0xff] %vm667, %v1874
    %2051 = vst.msk [vmem:[#allocation5 + $0x80] sm:$0xff] %vm667, %v1876
    %2052 = vst.msk [vmem:[#allocation5 + $0x88] sm:$0xff] %vm667, %v1878
    %2053 = vst.msk [vmem:[#allocation5 + $0x90] sm:$0xff] %vm667, %v1880
    %2054 = vst.msk [vmem:[#allocation5 + $0x98] sm:$0xff] %vm667, %v1882
    %2055 = vst.msk [vmem:[#allocation5 + $0xa0] sm:$0xff] %vm667, %v1884
    %2056 = vst.msk [vmem:[#allocation5 + $0xa8] sm:$0xff] %vm667, %v1886
    %2057 = vst.msk [vmem:[#allocation5 + $0xb0] sm:$0xff] %vm667, %v1888
    %2058 = vst.msk [vmem:[#allocation5 + $0xb8] sm:$0xff] %vm667, %v1890
    %2059 = vst.msk [vmem:[#allocation5 + $0xc0] sm:$0xff] %vm667, %v1892
    %2060 = vst.msk [vmem:[#allocation5 + $0xc8] sm:$0xff] %vm667, %v1894
    %2061 = vst.msk [vmem:[#allocation5 + $0xd0] sm:$0xff] %vm667, %v1896
    %2062 = vst.msk [vmem:[#allocation5 + $0xd8] sm:$0xff] %vm667, %v1898
    %2063 = vst.msk [vmem:[#allocation5 + $0xe0] sm:$0xff] %vm667, %v1900
    %2064 = vst.msk [vmem:[#allocation5 + $0xe8] sm:$0xff] %vm667, %v1902
    %2065 = vst.msk [vmem:[#allocation5 + $0xf0] sm:$0xff] %vm667, %v1904
    %2066 = vst.msk [vmem:[#allocation5 + $0xf8] sm:$0xff] %vm667, %v1906
    %2067 = vst.msk [vmem:[#allocation5 + $0x100] sm:$0xff] %vm667, %v1908
    %2068 = vst.msk [vmem:[#allocation5 + $0x108] sm:$0xff] %vm667, %v1910
    %2069 = vst.msk [vmem:[#allocation5 + $0x110] sm:$0xff] %vm667, %v1912
    %2070 = vst.msk [vmem:[#allocation5 + $0x118] sm:$0xff] %vm667, %v1914
    %2071 = vst.msk [vmem:[#allocation5 + $0x120] sm:$0xff] %vm667, %v1916
    %2072 = vst.msk [vmem:[#allocation5 + $0x128] sm:$0xff] %vm667, %v1918
    %2073 = vst.msk [vmem:[#allocation5 + $0x130] sm:$0xff] %vm667, %v1920
    %2074 = vst.msk [vmem:[#allocation5 + $0x138] sm:$0xff] %vm667, %v1922
    %2075 = vst.msk [vmem:[#allocation5 + $0x140] sm:$0xff] %vm667, %v1924
    %2076 = vst.msk [vmem:[#allocation5 + $0x148] sm:$0xff] %vm667, %v1926
    %2077 = vst.msk [vmem:[#allocation5 + $0x150] sm:$0xff] %vm667, %v1928
    %2078 = vst.msk [vmem:[#allocation5 + $0x158] sm:$0xff] %vm667, %v1930
    %2079 = vst.msk [vmem:[#allocation5 + $0x160] sm:$0xff] %vm667, %v1932
    %2080 = vst.msk [vmem:[#allocation5 + $0x168] sm:$0xff] %vm667, %v1934
    %2081 = vst.msk [vmem:[#allocation5 + $0x170] sm:$0xff] %vm667, %v1936
    %2082 = vst.msk [vmem:[#allocation5 + $0x178] sm:$0xff] %vm667, %v1938
    %2083 = vst.msk [vmem:[#allocation5 + $0x180] sm:$0xff] %vm667, %v1940
    %2084 = vst.msk [vmem:[#allocation5 + $0x188] sm:$0xff] %vm667, %v1942
    %2085 = vst.msk [vmem:[#allocation5 + $0x190] sm:$0xff] %vm667, %v1944
    %2086 = vst.msk [vmem:[#allocation5 + $0x198] sm:$0xff] %vm667, %v1946
    %2087 = vst.msk [vmem:[#allocation5 + $0x1a0] sm:$0xff] %vm667, %v1948
    %2088 = vst.msk [vmem:[#allocation5 + $0x1a8] sm:$0xff] %vm667, %v1950
    %2089 = vst.msk [vmem:[#allocation5 + $0x1b0] sm:$0xff] %vm667, %v1952
    %2090 = vst.msk [vmem:[#allocation5 + $0x1b8] sm:$0xff] %vm667, %v1954
    %2091 = vst.msk [vmem:[#allocation5 + $0x1c0] sm:$0xff] %vm667, %v1956
    %2092 = vst.msk [vmem:[#allocation5 + $0x1c8] sm:$0xff] %vm667, %v1958
    %2093 = vst.msk [vmem:[#allocation5 + $0x1d0] sm:$0xff] %vm667, %v1960
    %2094 = vst.msk [vmem:[#allocation5 + $0x1d8] sm:$0xff] %vm667, %v1962
    %2095 = vst.msk [vmem:[#allocation5 + $0x1e0] sm:$0xff] %vm667, %v1964
    %2096 = vst.msk [vmem:[#allocation5 + $0x1e8] sm:$0xff] %vm667, %v1966
    %2097 = vst.msk [vmem:[#allocation5 + $0x1f0] sm:$0xff] %vm667, %v1968
    %2098 = vst.msk [vmem:[#allocation5 + $0x1f8] sm:$0xff] %vm667, %v1970
    %2163 = vrot.lane.b32.xlu0 %v1586, 16
    %v2164 = vpop.permute.xlu0 %2163
    %2165 = vrot.lane.b32.xlu0 %v1587, 16
    %v2166 = vpop.permute.xlu0 %2165
    %2167 = vrot.lane.b32.xlu0 %v1588, 16
    %v2168 = vpop.permute.xlu0 %2167
    %2169 = vrot.lane.b32.xlu0 %v1589, 16
    %v2170 = vpop.permute.xlu0 %2169
    %2171 = vrot.lane.b32.xlu0 %v1590, 16
    %v2172 = vpop.permute.xlu0 %2171
    %2173 = vrot.lane.b32.xlu0 %v1591, 16
    %v2174 = vpop.permute.xlu0 %2173
    %2175 = vrot.lane.b32.xlu0 %v1592, 16
    %v2176 = vpop.permute.xlu0 %2175
    %2177 = vrot.lane.b32.xlu0 %v1593, 16
    %v2178 = vpop.permute.xlu0 %2177
    %2179 = vrot.lane.b32.xlu0 %v1594, 16
    %v2180 = vpop.permute.xlu0 %2179
    %2181 = vrot.lane.b32.xlu0 %v1595, 16
    %v2182 = vpop.permute.xlu0 %2181
    %2183 = vrot.lane.b32.xlu0 %v1596, 16
    %v2184 = vpop.permute.xlu0 %2183
    %2185 = vrot.lane.b32.xlu0 %v1597, 16
    %v2186 = vpop.permute.xlu0 %2185
    %2187 = vrot.lane.b32.xlu0 %v1598, 16
    %v2188 = vpop.permute.xlu0 %2187
    %2189 = vrot.lane.b32.xlu0 %v1599, 16
    %v2190 = vpop.permute.xlu0 %2189
    %2191 = vrot.lane.b32.xlu0 %v1600, 16
    %v2192 = vpop.permute.xlu0 %2191
    %2193 = vrot.lane.b32.xlu0 %v1601, 16
    %v2194 = vpop.permute.xlu0 %2193
    %2195 = vrot.lane.b32.xlu0 %v1602, 16
    %v2196 = vpop.permute.xlu0 %2195
    %2197 = vrot.lane.b32.xlu0 %v1603, 16
    %v2198 = vpop.permute.xlu0 %2197
    %2199 = vrot.lane.b32.xlu0 %v1604, 16
    %v2200 = vpop.permute.xlu0 %2199
    %2201 = vrot.lane.b32.xlu0 %v1605, 16
    %v2202 = vpop.permute.xlu0 %2201
    %2203 = vrot.lane.b32.xlu0 %v1606, 16
    %v2204 = vpop.permute.xlu0 %2203
    %2205 = vrot.lane.b32.xlu0 %v1607, 16
    %v2206 = vpop.permute.xlu0 %2205
    %2207 = vrot.lane.b32.xlu0 %v1608, 16
    %v2208 = vpop.permute.xlu0 %2207
    %2209 = vrot.lane.b32.xlu0 %v1609, 16
    %v2210 = vpop.permute.xlu0 %2209
    %2211 = vrot.lane.b32.xlu0 %v1610, 16
    %v2212 = vpop.permute.xlu0 %2211
    %2213 = vrot.lane.b32.xlu0 %v1611, 16
    %v2214 = vpop.permute.xlu0 %2213
    %2215 = vrot.lane.b32.xlu0 %v1612, 16
    %v2216 = vpop.permute.xlu0 %2215
    %2217 = vrot.lane.b32.xlu0 %v1613, 16
    %v2218 = vpop.permute.xlu0 %2217
    %2219 = vrot.lane.b32.xlu0 %v1614, 16
    %v2220 = vpop.permute.xlu0 %2219
    %2221 = vrot.lane.b32.xlu0 %v1615, 16
    %v2222 = vpop.permute.xlu0 %2221
    %2223 = vrot.lane.b32.xlu0 %v1616, 16
    %v2224 = vpop.permute.xlu0 %2223
    %2225 = vrot.lane.b32.xlu0 %v1617, 16
    %v2226 = vpop.permute.xlu0 %2225
    %2227 = vrot.lane.b32.xlu0 %v1618, 16
    %v2228 = vpop.permute.xlu0 %2227
    %2229 = vrot.lane.b32.xlu0 %v1619, 16
    %v2230 = vpop.permute.xlu0 %2229
    %2231 = vrot.lane.b32.xlu0 %v1620, 16
    %v2232 = vpop.permute.xlu0 %2231
    %2233 = vrot.lane.b32.xlu0 %v1621, 16
    %v2234 = vpop.permute.xlu0 %2233
    %2235 = vrot.lane.b32.xlu0 %v1622, 16
    %v2236 = vpop.permute.xlu0 %2235
    %2237 = vrot.lane.b32.xlu0 %v1623, 16
    %v2238 = vpop.permute.xlu0 %2237
    %2239 = vrot.lane.b32.xlu0 %v1624, 16
    %v2240 = vpop.permute.xlu0 %2239
    %2241 = vrot.lane.b32.xlu0 %v1625, 16
    %v2242 = vpop.permute.xlu0 %2241
    %2243 = vrot.lane.b32.xlu0 %v1626, 16
    %v2244 = vpop.permute.xlu0 %2243
    %2245 = vrot.lane.b32.xlu0 %v1627, 16
    %v2246 = vpop.permute.xlu0 %2245
    %2247 = vrot.lane.b32.xlu0 %v1628, 16
    %v2248 = vpop.permute.xlu0 %2247
    %2249 = vrot.lane.b32.xlu0 %v1629, 16
    %v2250 = vpop.permute.xlu0 %2249
    %2251 = vrot.lane.b32.xlu0 %v1630, 16
    %v2252 = vpop.permute.xlu0 %2251
    %2253 = vrot.lane.b32.xlu0 %v1631, 16
    %v2254 = vpop.permute.xlu0 %2253
    %2255 = vrot.lane.b32.xlu0 %v1632, 16
    %v2256 = vpop.permute.xlu0 %2255
    %2257 = vrot.lane.b32.xlu0 %v1633, 16
    %v2258 = vpop.permute.xlu0 %2257
    %2259 = vrot.lane.b32.xlu0 %v1634, 16
    %v2260 = vpop.permute.xlu0 %2259
    %2261 = vrot.lane.b32.xlu0 %v1635, 16
    %v2262 = vpop.permute.xlu0 %2261
    %2263 = vrot.lane.b32.xlu0 %v1636, 16
    %v2264 = vpop.permute.xlu0 %2263
    %2265 = vrot.lane.b32.xlu0 %v1637, 16
    %v2266 = vpop.permute.xlu0 %2265
    %2267 = vrot.lane.b32.xlu0 %v1638, 16
    %v2268 = vpop.permute.xlu0 %2267
    %2269 = vrot.lane.b32.xlu0 %v1639, 16
    %v2270 = vpop.permute.xlu0 %2269
    %2271 = vrot.lane.b32.xlu0 %v1640, 16
    %v2272 = vpop.permute.xlu0 %2271
    %2273 = vrot.lane.b32.xlu0 %v1641, 16
    %v2274 = vpop.permute.xlu0 %2273
    %2275 = vrot.lane.b32.xlu0 %v1642, 16
    %v2276 = vpop.permute.xlu0 %2275
    %2277 = vrot.lane.b32.xlu0 %v1643, 16
    %v2278 = vpop.permute.xlu0 %2277
    %2279 = vrot.lane.b32.xlu0 %v1644, 16
    %v2280 = vpop.permute.xlu0 %2279
    %2281 = vrot.lane.b32.xlu0 %v1645, 16
    %v2282 = vpop.permute.xlu0 %2281
    %2283 = vrot.lane.b32.xlu0 %v1646, 16
    %v2284 = vpop.permute.xlu0 %2283
    %2285 = vrot.lane.b32.xlu0 %v1647, 16
    %v2286 = vpop.permute.xlu0 %2285
    %2287 = vrot.lane.b32.xlu0 %v1648, 16
    %v2288 = vpop.permute.xlu0 %2287
    %2289 = vrot.lane.b32.xlu0 %v1649, 16
    %v2290 = vpop.permute.xlu0 %2289
    %2291 = vrot.lane.b32.xlu0 %v1650, 16
    %v2292 = vpop.permute.xlu0 %2291
    %2293 = vrot.lane.b32.xlu0 %v1651, 16
    %v2294 = vpop.permute.xlu0 %2293
    %2295 = vrot.lane.b32.xlu0 %v1652, 16
    %v2296 = vpop.permute.xlu0 %2295
    %2297 = vrot.lane.b32.xlu0 %v1653, 16
    %v2298 = vpop.permute.xlu0 %2297
    %2299 = vrot.lane.b32.xlu0 %v1654, 16
    %v2300 = vpop.permute.xlu0 %2299
    %2301 = vrot.lane.b32.xlu0 %v1655, 16
    %v2302 = vpop.permute.xlu0 %2301
    %2303 = vrot.lane.b32.xlu0 %v1656, 16
    %v2304 = vpop.permute.xlu0 %2303
    %2305 = vrot.lane.b32.xlu0 %v1657, 16
    %v2306 = vpop.permute.xlu0 %2305
    %2307 = vrot.lane.b32.xlu0 %v1658, 16
    %v2308 = vpop.permute.xlu0 %2307
    %2309 = vrot.lane.b32.xlu0 %v1659, 16
    %v2310 = vpop.permute.xlu0 %2309
    %2311 = vrot.lane.b32.xlu0 %v1660, 16
    %v2312 = vpop.permute.xlu0 %2311
    %2313 = vrot.lane.b32.xlu0 %v1661, 16
    %v2314 = vpop.permute.xlu0 %2313
    %2315 = vrot.lane.b32.xlu0 %v1662, 16
    %v2316 = vpop.permute.xlu0 %2315
    %2317 = vrot.lane.b32.xlu0 %v1663, 16
    %v2318 = vpop.permute.xlu0 %2317
    %2319 = vrot.lane.b32.xlu0 %v1664, 16
    %v2320 = vpop.permute.xlu0 %2319
    %2321 = vrot.lane.b32.xlu0 %v1665, 16
    %v2322 = vpop.permute.xlu0 %2321
    %2323 = vrot.lane.b32.xlu0 %v1666, 16
    %v2324 = vpop.permute.xlu0 %2323
    %2325 = vrot.lane.b32.xlu0 %v1667, 16
    %v2326 = vpop.permute.xlu0 %2325
    %2327 = vrot.lane.b32.xlu0 %v1668, 16
    %v2328 = vpop.permute.xlu0 %2327
    %2329 = vrot.lane.b32.xlu0 %v1669, 16
    %v2330 = vpop.permute.xlu0 %2329
    %2331 = vrot.lane.b32.xlu0 %v1670, 16
    %v2332 = vpop.permute.xlu0 %2331
    %2333 = vrot.lane.b32.xlu0 %v1671, 16
    %v2334 = vpop.permute.xlu0 %2333
    %2335 = vrot.lane.b32.xlu0 %v1672, 16
    %v2336 = vpop.permute.xlu0 %2335
    %2337 = vrot.lane.b32.xlu0 %v1673, 16
    %v2338 = vpop.permute.xlu0 %2337
    %2339 = vrot.lane.b32.xlu0 %v1674, 16
    %v2340 = vpop.permute.xlu0 %2339
    %2341 = vrot.lane.b32.xlu0 %v1675, 16
    %v2342 = vpop.permute.xlu0 %2341
    %2343 = vrot.lane.b32.xlu0 %v1676, 16
    %v2344 = vpop.permute.xlu0 %2343
    %2345 = vrot.lane.b32.xlu0 %v1677, 16
    %v2346 = vpop.permute.xlu0 %2345
    %2347 = vrot.lane.b32.xlu0 %v1678, 16
    %v2348 = vpop.permute.xlu0 %2347
    %2349 = vrot.lane.b32.xlu0 %v1679, 16
    %v2350 = vpop.permute.xlu0 %2349
    %2351 = vrot.lane.b32.xlu0 %v1680, 16
    %v2352 = vpop.permute.xlu0 %2351
    %2353 = vrot.lane.b32.xlu0 %v1681, 16
    %v2354 = vpop.permute.xlu0 %2353
    %2355 = vrot.lane.b32.xlu0 %v1682, 16
    %v2356 = vpop.permute.xlu0 %2355
    %2357 = vrot.lane.b32.xlu0 %v1683, 16
    %v2358 = vpop.permute.xlu0 %2357
    %2359 = vrot.lane.b32.xlu0 %v1684, 16
    %v2360 = vpop.permute.xlu0 %2359
    %2361 = vrot.lane.b32.xlu0 %v1685, 16
    %v2362 = vpop.permute.xlu0 %2361
    %2363 = vrot.lane.b32.xlu0 %v1686, 16
    %v2364 = vpop.permute.xlu0 %2363
    %2365 = vrot.lane.b32.xlu0 %v1687, 16
    %v2366 = vpop.permute.xlu0 %2365
    %2367 = vrot.lane.b32.xlu0 %v1688, 16
    %v2368 = vpop.permute.xlu0 %2367
    %2369 = vrot.lane.b32.xlu0 %v1689, 16
    %v2370 = vpop.permute.xlu0 %2369
    %2371 = vrot.lane.b32.xlu0 %v1690, 16
    %v2372 = vpop.permute.xlu0 %2371
    %2373 = vrot.lane.b32.xlu0 %v1691, 16
    %v2374 = vpop.permute.xlu0 %2373
    %2375 = vrot.lane.b32.xlu0 %v1692, 16
    %v2376 = vpop.permute.xlu0 %2375
    %2377 = vrot.lane.b32.xlu0 %v1693, 16
    %v2378 = vpop.permute.xlu0 %2377
    %2379 = vrot.lane.b32.xlu0 %v1694, 16
    %v2380 = vpop.permute.xlu0 %2379
    %2381 = vrot.lane.b32.xlu0 %v1695, 16
    %v2382 = vpop.permute.xlu0 %2381
    %2383 = vrot.lane.b32.xlu0 %v1696, 16
    %v2384 = vpop.permute.xlu0 %2383
    %2385 = vrot.lane.b32.xlu0 %v1697, 16
    %v2386 = vpop.permute.xlu0 %2385
    %2387 = vrot.lane.b32.xlu0 %v1698, 16
    %v2388 = vpop.permute.xlu0 %2387
    %2389 = vrot.lane.b32.xlu0 %v1699, 16
    %v2390 = vpop.permute.xlu0 %2389
    %2391 = vrot.lane.b32.xlu0 %v1700, 16
    %v2392 = vpop.permute.xlu0 %2391
    %2393 = vrot.lane.b32.xlu0 %v1701, 16
    %v2394 = vpop.permute.xlu0 %2393
    %2395 = vrot.lane.b32.xlu0 %v1702, 16
    %v2396 = vpop.permute.xlu0 %2395
    %2397 = vrot.lane.b32.xlu0 %v1703, 16
    %v2398 = vpop.permute.xlu0 %2397
    %2399 = vrot.lane.b32.xlu0 %v1704, 16
    %v2400 = vpop.permute.xlu0 %2399
    %2401 = vrot.lane.b32.xlu0 %v1705, 16
    %v2402 = vpop.permute.xlu0 %2401
    %2403 = vrot.lane.b32.xlu0 %v1706, 16
    %v2404 = vpop.permute.xlu0 %2403
    %2405 = vrot.lane.b32.xlu0 %v1707, 16
    %v2406 = vpop.permute.xlu0 %2405
    %2407 = vrot.lane.b32.xlu0 %v1708, 16
    %v2408 = vpop.permute.xlu0 %2407
    %2409 = vrot.lane.b32.xlu0 %v1709, 16
    %v2410 = vpop.permute.xlu0 %2409
    %2411 = vrot.lane.b32.xlu0 %v1710, 16
    %v2412 = vpop.permute.xlu0 %2411
    %2413 = vrot.lane.b32.xlu0 %v1711, 16
    %v2414 = vpop.permute.xlu0 %2413
    %2415 = vrot.lane.b32.xlu0 %v1712, 16
    %v2416 = vpop.permute.xlu0 %2415
    %2417 = vrot.lane.b32.xlu0 %v1713, 16
    %v2418 = vpop.permute.xlu0 %2417
    %vm2419 = vcmask 130048
    %v2420 = vsel %vm2419, %v2164, %v2166
    %v2421 = vsel %vm2419, %v2168, %v2170
    %v2422 = vsel %vm2419, %v2172, %v2174
    %v2423 = vsel %vm2419, %v2176, %v2178
    %v2424 = vsel %vm2419, %v2180, %v2182
    %v2425 = vsel %vm2419, %v2184, %v2186
    %v2426 = vsel %vm2419, %v2188, %v2190
    %v2427 = vsel %vm2419, %v2192, %v2194
    %v2428 = vsel %vm2419, %v2196, %v2198
    %v2429 = vsel %vm2419, %v2200, %v2202
    %v2430 = vsel %vm2419, %v2204, %v2206
    %v2431 = vsel %vm2419, %v2208, %v2210
    %v2432 = vsel %vm2419, %v2212, %v2214
    %v2433 = vsel %vm2419, %v2216, %v2218
    %v2434 = vsel %vm2419, %v2220, %v2222
    %v2435 = vsel %vm2419, %v2224, %v2226
    %v2436 = vsel %vm2419, %v2228, %v2230
    %v2437 = vsel %vm2419, %v2232, %v2234
    %v2438 = vsel %vm2419, %v2236, %v2238
    %v2439 = vsel %vm2419, %v2240, %v2242
    %v2440 = vsel %vm2419, %v2244, %v2246
    %v2441 = vsel %vm2419, %v2248, %v2250
    %v2442 = vsel %vm2419, %v2252, %v2254
    %v2443 = vsel %vm2419, %v2256, %v2258
    %v2444 = vsel %vm2419, %v2260, %v2262
    %v2445 = vsel %vm2419, %v2264, %v2266
    %v2446 = vsel %vm2419, %v2268, %v2270
    %v2447 = vsel %vm2419, %v2272, %v2274
    %v2448 = vsel %vm2419, %v2276, %v2278
    %v2449 = vsel %vm2419, %v2280, %v2282
    %v2450 = vsel %vm2419, %v2284, %v2286
    %v2451 = vsel %vm2419, %v2288, %v2290
    %v2452 = vsel %vm2419, %v2292, %v2294
    %v2453 = vsel %vm2419, %v2296, %v2298
    %v2454 = vsel %vm2419, %v2300, %v2302
    %v2455 = vsel %vm2419, %v2304, %v2306
    %v2456 = vsel %vm2419, %v2308, %v2310
    %v2457 = vsel %vm2419, %v2312, %v2314
    %v2458 = vsel %vm2419, %v2316, %v2318
    %v2459 = vsel %vm2419, %v2320, %v2322
    %v2460 = vsel %vm2419, %v2324, %v2326
    %v2461 = vsel %vm2419, %v2328, %v2330
    %v2462 = vsel %vm2419, %v2332, %v2334
    %v2463 = vsel %vm2419, %v2336, %v2338
    %v2464 = vsel %vm2419, %v2340, %v2342
    %v2465 = vsel %vm2419, %v2344, %v2346
    %v2466 = vsel %vm2419, %v2348, %v2350
    %v2467 = vsel %vm2419, %v2352, %v2354
    %v2468 = vsel %vm2419, %v2356, %v2358
    %v2469 = vsel %vm2419, %v2360, %v2362
    %v2470 = vsel %vm2419, %v2364, %v2366
    %v2471 = vsel %vm2419, %v2368, %v2370
    %v2472 = vsel %vm2419, %v2372, %v2374
    %v2473 = vsel %vm2419, %v2376, %v2378
    %v2474 = vsel %vm2419, %v2380, %v2382
    %v2475 = vsel %vm2419, %v2384, %v2386
    %v2476 = vsel %vm2419, %v2388, %v2390
    %v2477 = vsel %vm2419, %v2392, %v2394
    %v2478 = vsel %vm2419, %v2396, %v2398
    %v2479 = vsel %vm2419, %v2400, %v2402
    %v2480 = vsel %vm2419, %v2404, %v2406
    %v2481 = vsel %vm2419, %v2408, %v2410
    %v2482 = vsel %vm2419, %v2412, %v2414
    %v2483 = vsel %vm2419, %v2416, %v2418
    %2548 = vst.msk [vmem:[#allocation7] sm:$0xff] %vm1714, %v2420
    %2549 = vst.msk [vmem:[#allocation7 + $0x8] sm:$0xff] %vm1714, %v2421
    %2550 = vst.msk [vmem:[#allocation7 + $0x10] sm:$0xff] %vm1714, %v2422
    %2551 = vst.msk [vmem:[#allocation7 + $0x18] sm:$0xff] %vm1714, %v2423
    %2552 = vst.msk [vmem:[#allocation7 + $0x20] sm:$0xff] %vm1714, %v2424
    %2553 = vst.msk [vmem:[#allocation7 + $0x28] sm:$0xff] %vm1714, %v2425
    %2554 = vst.msk [vmem:[#allocation7 + $0x30] sm:$0xff] %vm1714, %v2426
    %2555 = vst.msk [vmem:[#allocation7 + $0x38] sm:$0xff] %vm1714, %v2427
    %2556 = vst.msk [vmem:[#allocation7 + $0x40] sm:$0xff] %vm1714, %v2428
    %2557 = vst.msk [vmem:[#allocation7 + $0x48] sm:$0xff] %vm1714, %v2429
    %2558 = vst.msk [vmem:[#allocation7 + $0x50] sm:$0xff] %vm1714, %v2430
    %2559 = vst.msk [vmem:[#allocation7 + $0x58] sm:$0xff] %vm1714, %v2431
    %2560 = vst.msk [vmem:[#allocation7 + $0x60] sm:$0xff] %vm1714, %v2432
    %2561 = vst.msk [vmem:[#allocation7 + $0x68] sm:$0xff] %vm1714, %v2433
    %2562 = vst.msk [vmem:[#allocation7 + $0x70] sm:$0xff] %vm1714, %v2434
    %2563 = vst.msk [vmem:[#allocation7 + $0x78] sm:$0xff] %vm1714, %v2435
    %2564 = vst.msk [vmem:[#allocation7 + $0x80] sm:$0xff] %vm1714, %v2436
    %2565 = vst.msk [vmem:[#allocation7 + $0x88] sm:$0xff] %vm1714, %v2437
    %2566 = vst.msk [vmem:[#allocation7 + $0x90] sm:$0xff] %vm1714, %v2438
    %2567 = vst.msk [vmem:[#allocation7 + $0x98] sm:$0xff] %vm1714, %v2439
    %2568 = vst.msk [vmem:[#allocation7 + $0xa0] sm:$0xff] %vm1714, %v2440
    %2569 = vst.msk [vmem:[#allocation7 + $0xa8] sm:$0xff] %vm1714, %v2441
    %2570 = vst.msk [vmem:[#allocation7 + $0xb0] sm:$0xff] %vm1714, %v2442
    %2571 = vst.msk [vmem:[#allocation7 + $0xb8] sm:$0xff] %vm1714, %v2443
    %2572 = vst.msk [vmem:[#allocation7 + $0xc0] sm:$0xff] %vm1714, %v2444
    %2573 = vst.msk [vmem:[#allocation7 + $0xc8] sm:$0xff] %vm1714, %v2445
    %2574 = vst.msk [vmem:[#allocation7 + $0xd0] sm:$0xff] %vm1714, %v2446
    %2575 = vst.msk [vmem:[#allocation7 + $0xd8] sm:$0xff] %vm1714, %v2447
    %2576 = vst.msk [vmem:[#allocation7 + $0xe0] sm:$0xff] %vm1714, %v2448
    %2577 = vst.msk [vmem:[#allocation7 + $0xe8] sm:$0xff] %vm1714, %v2449
    %2578 = vst.msk [vmem:[#allocation7 + $0xf0] sm:$0xff] %vm1714, %v2450
    %2579 = vst.msk [vmem:[#allocation7 + $0xf8] sm:$0xff] %vm1714, %v2451
    %2580 = vst.msk [vmem:[#allocation7 + $0x100] sm:$0xff] %vm1714, %v2452
    %2581 = vst.msk [vmem:[#allocation7 + $0x108] sm:$0xff] %vm1714, %v2453
    %2582 = vst.msk [vmem:[#allocation7 + $0x110] sm:$0xff] %vm1714, %v2454
    %2583 = vst.msk [vmem:[#allocation7 + $0x118] sm:$0xff] %vm1714, %v2455
    %2584 = vst.msk [vmem:[#allocation7 + $0x120] sm:$0xff] %vm1714, %v2456
    %2585 = vst.msk [vmem:[#allocation7 + $0x128] sm:$0xff] %vm1714, %v2457
    %2586 = vst.msk [vmem:[#allocation7 + $0x130] sm:$0xff] %vm1714, %v2458
    %2587 = vst.msk [vmem:[#allocation7 + $0x138] sm:$0xff] %vm1714, %v2459
    %2588 = vst.msk [vmem:[#allocation7 + $0x140] sm:$0xff] %vm1714, %v2460
    %2589 = vst.msk [vmem:[#allocation7 + $0x148] sm:$0xff] %vm1714, %v2461
    %2590 = vst.msk [vmem:[#allocation7 + $0x150] sm:$0xff] %vm1714, %v2462
    %2591 = vst.msk [vmem:[#allocation7 + $0x158] sm:$0xff] %vm1714, %v2463
    %2592 = vst.msk [vmem:[#allocation7 + $0x160] sm:$0xff] %vm1714, %v2464
    %2593 = vst.msk [vmem:[#allocation7 + $0x168] sm:$0xff] %vm1714, %v2465
    %2594 = vst.msk [vmem:[#allocation7 + $0x170] sm:$0xff] %vm1714, %v2466
    %2595 = vst.msk [vmem:[#allocation7 + $0x178] sm:$0xff] %vm1714, %v2467
    %2596 = vst.msk [vmem:[#allocation7 + $0x180] sm:$0xff] %vm1714, %v2468
    %2597 = vst.msk [vmem:[#allocation7 + $0x188] sm:$0xff] %vm1714, %v2469
    %2598 = vst.msk [vmem:[#allocation7 + $0x190] sm:$0xff] %vm1714, %v2470
    %2599 = vst.msk [vmem:[#allocation7 + $0x198] sm:$0xff] %vm1714, %v2471
    %2600 = vst.msk [vmem:[#allocation7 + $0x1a0] sm:$0xff] %vm1714, %v2472
    %2601 = vst.msk [vmem:[#allocation7 + $0x1a8] sm:$0xff] %vm1714, %v2473
    %2602 = vst.msk [vmem:[#allocation7 + $0x1b0] sm:$0xff] %vm1714, %v2474
    %2603 = vst.msk [vmem:[#allocation7 + $0x1b8] sm:$0xff] %vm1714, %v2475
    %2604 = vst.msk [vmem:[#allocation7 + $0x1c0] sm:$0xff] %vm1714, %v2476
    %2605 = vst.msk [vmem:[#allocation7 + $0x1c8] sm:$0xff] %vm1714, %v2477
    %2606 = vst.msk [vmem:[#allocation7 + $0x1d0] sm:$0xff] %vm1714, %v2478
    %2607 = vst.msk [vmem:[#allocation7 + $0x1d8] sm:$0xff] %vm1714, %v2479
    %2608 = vst.msk [vmem:[#allocation7 + $0x1e0] sm:$0xff] %vm1714, %v2480
    %2609 = vst.msk [vmem:[#allocation7 + $0x1e8] sm:$0xff] %vm1714, %v2481
    %2610 = vst.msk [vmem:[#allocation7 + $0x1f0] sm:$0xff] %vm1714, %v2482
    %2611 = vst.msk [vmem:[#allocation7 + $0x1f8] sm:$0xff] %vm1714, %v2483
    %2612 = vst.msk [vmem:[#allocation2] sm:$0xff] %vm139, 0.0
    %2613 = vst.msk [vmem:[#allocation2 + $0x8] sm:$0xff] %vm139, 0.0
    %vm2614 = vcmask 25600
    %2615 = vst.msk [vmem:[#allocation2 + $0x10] sm:$0x3] %vm2614, 0.0
    %2616 = vst.msk [vmem:[#allocation2 + $0x18] sm:$0xff] %vm139, 0.0
    %2617 = vst.msk [vmem:[#allocation2 + $0x20] sm:$0xff] %vm139, 0.0
    %2618 = vst.msk [vmem:[#allocation2 + $0x28] sm:$0x3] %vm2614, 0.0
    %2619 = vst.msk [vmem:[#allocation2 + $0x30] sm:$0xff] %vm139, 0.0
    %2620 = vst.msk [vmem:[#allocation2 + $0x38] sm:$0xff] %vm139, 0.0
    %2621 = vst.msk [vmem:[#allocation2 + $0x40] sm:$0x3] %vm2614, 0.0
    %2622 = vst.msk [vmem:[#allocation2 + $0x48] sm:$0xff] %vm139, 0.0
    %2623 = vst.msk [vmem:[#allocation2 + $0x50] sm:$0xff] %vm139, 0.0
    %2624 = vst.msk [vmem:[#allocation2 + $0x58] sm:$0x3] %vm2614, 0.0
    %2625 = vst.msk [vmem:[#allocation2 + $0x60] sm:$0xff] %vm139, 0.0
    %2626 = vst.msk [vmem:[#allocation2 + $0x68] sm:$0xff] %vm139, 0.0
    %2627 = vst.msk [vmem:[#allocation2 + $0x70] sm:$0x3] %vm2614, 0.0
    %2628 = vst.msk [vmem:[#allocation2 + $0x78] sm:$0xff] %vm139, 0.0
    %2629 = vst.msk [vmem:[#allocation2 + $0x80] sm:$0xff] %vm139, 0.0
    %2630 = vst.msk [vmem:[#allocation2 + $0x88] sm:$0x3] %vm2614, 0.0
    %2631 = vst.msk [vmem:[#allocation2 + $0x90] sm:$0xff] %vm139, 0.0
    %2632 = vst.msk [vmem:[#allocation2 + $0x98] sm:$0xff] %vm139, 0.0
    %2633 = vst.msk [vmem:[#allocation2 + $0xa0] sm:$0x3] %vm2614, 0.0
    %2634 = vst.msk [vmem:[#allocation2 + $0xa8] sm:$0xff] %vm139, 0.0
    %2635 = vst.msk [vmem:[#allocation2 + $0xb0] sm:$0xff] %vm139, 0.0
    %2636 = vst.msk [vmem:[#allocation2 + $0xb8] sm:$0x3] %vm2614, 0.0
    %2637 = vst.msk [vmem:[#allocation2 + $0xc0] sm:$0xff] %vm139, 0.0
    %2638 = vst.msk [vmem:[#allocation2 + $0xc8] sm:$0xff] %vm139, 0.0
    %2639 = vst.msk [vmem:[#allocation2 + $0xd0] sm:$0x3] %vm2614, 0.0
    %2640 = vst.msk [vmem:[#allocation2 + $0xd8] sm:$0xff] %vm139, 0.0
    %2641 = vst.msk [vmem:[#allocation2 + $0xe0] sm:$0xff] %vm139, 0.0
    %2642 = vst.msk [vmem:[#allocation2 + $0xe8] sm:$0x3] %vm2614, 0.0
    %2643 = vst.msk [vmem:[#allocation2 + $0xf0] sm:$0xff] %vm139, 0.0
    %2644 = vst.msk [vmem:[#allocation2 + $0xf8] sm:$0xff] %vm139, 0.0
    %2645 = vst.msk [vmem:[#allocation2 + $0x100] sm:$0x3] %vm2614, 0.0
    %2646 = vst.msk [vmem:[#allocation2 + $0x108] sm:$0xff] %vm139, 0.0
    %2647 = vst.msk [vmem:[#allocation2 + $0x110] sm:$0xff] %vm139, 0.0
    %2648 = vst.msk [vmem:[#allocation2 + $0x118] sm:$0x3] %vm2614, 0.0
    %2649 = vst.msk [vmem:[#allocation2 + $0x120] sm:$0xff] %vm139, 0.0
    %2650 = vst.msk [vmem:[#allocation2 + $0x128] sm:$0xff] %vm139, 0.0
    %2651 = vst.msk [vmem:[#allocation2 + $0x130] sm:$0x3] %vm2614, 0.0
    %2652 = vst.msk [vmem:[#allocation2 + $0x138] sm:$0xff] %vm139, 0.0
    %2653 = vst.msk [vmem:[#allocation2 + $0x140] sm:$0xff] %vm139, 0.0
    %2654 = vst.msk [vmem:[#allocation2 + $0x148] sm:$0x3] %vm2614, 0.0
    %2655 = vst.msk [vmem:[#allocation2 + $0x150] sm:$0xff] %vm139, 0.0
    %2656 = vst.msk [vmem:[#allocation2 + $0x158] sm:$0xff] %vm139, 0.0
    %2657 = vst.msk [vmem:[#allocation2 + $0x160] sm:$0x3] %vm2614, 0.0
    %2658 = vst.msk [vmem:[#allocation2 + $0x168] sm:$0xff] %vm139, 0.0
    %2659 = vst.msk [vmem:[#allocation2 + $0x170] sm:$0xff] %vm139, 0.0
    %2660 = vst.msk [vmem:[#allocation2 + $0x178] sm:$0x3] %vm2614, 0.0
    %2661 = vst.msk [vmem:[#allocation2 + $0x180] sm:$0xff] %vm139, 0.0
    %2662 = vst.msk [vmem:[#allocation2 + $0x188] sm:$0xff] %vm139, 0.0
    %2663 = vst.msk [vmem:[#allocation2 + $0x190] sm:$0x3] %vm2614, 0.0
    %2664 = vst.msk [vmem:[#allocation2 + $0x198] sm:$0xff] %vm139, 0.0
    %2665 = vst.msk [vmem:[#allocation2 + $0x1a0] sm:$0xff] %vm139, 0.0
    %2666 = vst.msk [vmem:[#allocation2 + $0x1a8] sm:$0x3] %vm2614, 0.0
    %2667 = vst.msk [vmem:[#allocation2 + $0x1b0] sm:$0xff] %vm139, 0.0
    %2668 = vst.msk [vmem:[#allocation2 + $0x1b8] sm:$0xff] %vm139, 0.0
    %2669 = vst.msk [vmem:[#allocation2 + $0x1c0] sm:$0x3] %vm2614, 0.0
    %2670 = vst.msk [vmem:[#allocation2 + $0x1c8] sm:$0xff] %vm139, 0.0
    %2671 = vst.msk [vmem:[#allocation2 + $0x1d0] sm:$0xff] %vm139, 0.0
    %2672 = vst.msk [vmem:[#allocation2 + $0x1d8] sm:$0x3] %vm2614, 0.0
    %2673 = vst.msk [vmem:[#allocation2 + $0x1e0] sm:$0xff] %vm139, 0.0
    %2674 = vst.msk [vmem:[#allocation2 + $0x1e8] sm:$0xff] %vm139, 0.0
    %2675 = vst.msk [vmem:[#allocation2 + $0x1f0] sm:$0x3] %vm2614, 0.0
    %2676 = vst.msk [vmem:[#allocation2 + $0x1f8] sm:$0xff] %vm139, 0.0
    %2677 = vst.msk [vmem:[#allocation2 + $0x200] sm:$0xff] %vm139, 0.0
    %2678 = vst.msk [vmem:[#allocation2 + $0x208] sm:$0x3] %vm2614, 0.0
    %2679 = vst.msk [vmem:[#allocation2 + $0x210] sm:$0xff] %vm139, 0.0
    %2680 = vst.msk [vmem:[#allocation2 + $0x218] sm:$0xff] %vm139, 0.0
    %2681 = vst.msk [vmem:[#allocation2 + $0x220] sm:$0x3] %vm2614, 0.0
    %2682 = vst.msk [vmem:[#allocation2 + $0x228] sm:$0xff] %vm139, 0.0
    %2683 = vst.msk [vmem:[#allocation2 + $0x230] sm:$0xff] %vm139, 0.0
    %2684 = vst.msk [vmem:[#allocation2 + $0x238] sm:$0x3] %vm2614, 0.0
    %2685 = vst.msk [vmem:[#allocation2 + $0x240] sm:$0xff] %vm139, 0.0
    %2686 = vst.msk [vmem:[#allocation2 + $0x248] sm:$0xff] %vm139, 0.0
    %2687 = vst.msk [vmem:[#allocation2 + $0x250] sm:$0x3] %vm2614, 0.0
    %2688 = vst.msk [vmem:[#allocation2 + $0x258] sm:$0xff] %vm139, 0.0
    %2689 = vst.msk [vmem:[#allocation2 + $0x260] sm:$0xff] %vm139, 0.0
    %2690 = vst.msk [vmem:[#allocation2 + $0x268] sm:$0x3] %vm2614, 0.0
    %2691 = vst.msk [vmem:[#allocation2 + $0x270] sm:$0xff] %vm139, 0.0
    %2692 = vst.msk [vmem:[#allocation2 + $0x278] sm:$0xff] %vm139, 0.0
    %2693 = vst.msk [vmem:[#allocation2 + $0x280] sm:$0x3] %vm2614, 0.0
    %2694 = vst.msk [vmem:[#allocation2 + $0x288] sm:$0xff] %vm139, 0.0
    %2695 = vst.msk [vmem:[#allocation2 + $0x290] sm:$0xff] %vm139, 0.0
    %2696 = vst.msk [vmem:[#allocation2 + $0x298] sm:$0x3] %vm2614, 0.0
    %2697 = vst.msk [vmem:[#allocation2 + $0x2a0] sm:$0xff] %vm139, 0.0
    %2698 = vst.msk [vmem:[#allocation2 + $0x2a8] sm:$0xff] %vm139, 0.0
    %2699 = vst.msk [vmem:[#allocation2 + $0x2b0] sm:$0x3] %vm2614, 0.0
    %2700 = vst.msk [vmem:[#allocation2 + $0x2b8] sm:$0xff] %vm139, 0.0
    %2701 = vst.msk [vmem:[#allocation2 + $0x2c0] sm:$0xff] %vm139, 0.0
    %2702 = vst.msk [vmem:[#allocation2 + $0x2c8] sm:$0x3] %vm2614, 0.0
    %2703 = vst.msk [vmem:[#allocation2 + $0x2d0] sm:$0xff] %vm139, 0.0
    %2704 = vst.msk [vmem:[#allocation2 + $0x2d8] sm:$0xff] %vm139, 0.0
    %2705 = vst.msk [vmem:[#allocation2 + $0x2e0] sm:$0x3] %vm2614, 0.0
    %2706 = vst.msk [vmem:[#allocation2 + $0x2e8] sm:$0xff] %vm139, 0.0
    %2707 = vst.msk [vmem:[#allocation2 + $0x2f0] sm:$0xff] %vm139, 0.0
    %2708 = vst.msk [vmem:[#allocation2 + $0x2f8] sm:$0x3] %vm2614, 0.0
    %2709 = vst.msk [vmem:[#allocation2 + $0x300] sm:$0xff] %vm139, 0.0
    %2710 = vst.msk [vmem:[#allocation2 + $0x308] sm:$0xff] %vm139, 0.0
    %2711 = vst.msk [vmem:[#allocation2 + $0x310] sm:$0x3] %vm2614, 0.0
    %2712 = vst.msk [vmem:[#allocation2 + $0x318] sm:$0xff] %vm139, 0.0
    %2713 = vst.msk [vmem:[#allocation2 + $0x320] sm:$0xff] %vm139, 0.0
    %2714 = vst.msk [vmem:[#allocation2 + $0x328] sm:$0x3] %vm2614, 0.0
    %2715 = vst.msk [vmem:[#allocation2 + $0x330] sm:$0xff] %vm139, 0.0
    %2716 = vst.msk [vmem:[#allocation2 + $0x338] sm:$0xff] %vm139, 0.0
    %2717 = vst.msk [vmem:[#allocation2 + $0x340] sm:$0x3] %vm2614, 0.0
    %2718 = vst.msk [vmem:[#allocation2 + $0x348] sm:$0xff] %vm139, 0.0
    %2719 = vst.msk [vmem:[#allocation2 + $0x350] sm:$0xff] %vm139, 0.0
    %2720 = vst.msk [vmem:[#allocation2 + $0x358] sm:$0x3] %vm2614, 0.0
    %s2721 = scalar_lea.vmem [#allocation2], 24
    %2722 = vst.msk [vmem:[%s2721 + $0x1] sm:$0xff] %vm139, %v33
    %2723 = vst.msk [vmem:[%s2721 + $0x9] sm:$0xff] %vm139, %v34
    %2724 = vst.msk [vmem:[%s2721 + $0x19] sm:$0xff] %vm139, %v35
    %2725 = vst.msk [vmem:[%s2721 + $0x21] sm:$0xff] %vm139, %v36
    %2726 = vst.msk [vmem:[%s2721 + $0x31] sm:$0xff] %vm139, %v37
    %2727 = vst.msk [vmem:[%s2721 + $0x39] sm:$0xff] %vm139, %v38
    %2728 = vst.msk [vmem:[%s2721 + $0x49] sm:$0xff] %vm139, %v39
    %2729 = vst.msk [vmem:[%s2721 + $0x51] sm:$0xff] %vm139, %v40
    %2730 = vst.msk [vmem:[%s2721 + $0x61] sm:$0xff] %vm139, %v41
    %2731 = vst.msk [vmem:[%s2721 + $0x69] sm:$0xff] %vm139, %v42
    %2732 = vst.msk [vmem:[%s2721 + $0x79] sm:$0xff] %vm139, %v43
    %2733 = vst.msk [vmem:[%s2721 + $0x81] sm:$0xff] %vm139, %v44
    %2734 = vst.msk [vmem:[%s2721 + $0x91] sm:$0xff] %vm139, %v45
    %2735 = vst.msk [vmem:[%s2721 + $0x99] sm:$0xff] %vm139, %v46
    %2736 = vst.msk [vmem:[%s2721 + $0xa9] sm:$0xff] %vm139, %v47
    %2737 = vst.msk [vmem:[%s2721 + $0xb1] sm:$0xff] %vm139, %v48
    %2738 = vst.msk [vmem:[%s2721 + $0xc1] sm:$0xff] %vm139, %v49
    %2739 = vst.msk [vmem:[%s2721 + $0xc9] sm:$0xff] %vm139, %v50
    %2740 = vst.msk [vmem:[%s2721 + $0xd9] sm:$0xff] %vm139, %v51
    %2741 = vst.msk [vmem:[%s2721 + $0xe1] sm:$0xff] %vm139, %v52
    %2742 = vst.msk [vmem:[%s2721 + $0xf1] sm:$0xff] %vm139, %v53
    %2743 = vst.msk [vmem:[%s2721 + $0xf9] sm:$0xff] %vm139, %v54
    %2744 = vst.msk [vmem:[%s2721 + $0x109] sm:$0xff] %vm139, %v55
    %2745 = vst.msk [vmem:[%s2721 + $0x111] sm:$0xff] %vm139, %v56
    %2746 = vst.msk [vmem:[%s2721 + $0x121] sm:$0xff] %vm139, %v57
    %2747 = vst.msk [vmem:[%s2721 + $0x129] sm:$0xff] %vm139, %v58
    %2748 = vst.msk [vmem:[%s2721 + $0x139] sm:$0xff] %vm139, %v59
    %2749 = vst.msk [vmem:[%s2721 + $0x141] sm:$0xff] %vm139, %v60
    %2750 = vst.msk [vmem:[%s2721 + $0x151] sm:$0xff] %vm139, %v61
    %2751 = vst.msk [vmem:[%s2721 + $0x159] sm:$0xff] %vm139, %v62
    %2752 = vst.msk [vmem:[%s2721 + $0x169] sm:$0xff] %vm139, %v63
    %2753 = vst.msk [vmem:[%s2721 + $0x171] sm:$0xff] %vm139, %v64
    %2754 = vst.msk [vmem:[%s2721 + $0x1b1] sm:$0xff] %vm139, %v65
    %2755 = vst.msk [vmem:[%s2721 + $0x1b9] sm:$0xff] %vm139, %v66
    %2756 = vst.msk [vmem:[%s2721 + $0x1c9] sm:$0xff] %vm139, %v67
    %2757 = vst.msk [vmem:[%s2721 + $0x1d1] sm:$0xff] %vm139, %v68
    %2758 = vst.msk [vmem:[%s2721 + $0x1e1] sm:$0xff] %vm139, %v69
    %2759 = vst.msk [vmem:[%s2721 + $0x1e9] sm:$0xff] %vm139, %v70
    %2760 = vst.msk [vmem:[%s2721 + $0x1f9] sm:$0xff] %vm139, %v71
    %2761 = vst.msk [vmem:[%s2721 + $0x201] sm:$0xff] %vm139, %v72
    %2762 = vst.msk [vmem:[%s2721 + $0x211] sm:$0xff] %vm139, %v73
    %2763 = vst.msk [vmem:[%s2721 + $0x219] sm:$0xff] %vm139, %v74
    %2764 = vst.msk [vmem:[%s2721 + $0x229] sm:$0xff] %vm139, %v75
    %2765 = vst.msk [vmem:[%s2721 + $0x231] sm:$0xff] %vm139, %v76
    %2766 = vst.msk [vmem:[%s2721 + $0x241] sm:$0xff] %vm139, %v77
    %2767 = vst.msk [vmem:[%s2721 + $0x249] sm:$0xff] %vm139, %v78
    %2768 = vst.msk [vmem:[%s2721 + $0x259] sm:$0xff] %vm139, %v79
    %2769 = vst.msk [vmem:[%s2721 + $0x261] sm:$0xff] %vm139, %v80
    %2770 = vst.msk [vmem:[%s2721 + $0x271] sm:$0xff] %vm139, %v81
    %2771 = vst.msk [vmem:[%s2721 + $0x279] sm:$0xff] %vm139, %v82
    %2772 = vst.msk [vmem:[%s2721 + $0x289] sm:$0xff] %vm139, %v83
    %2773 = vst.msk [vmem:[%s2721 + $0x291] sm:$0xff] %vm139, %v84
    %2774 = vst.msk [vmem:[%s2721 + $0x2a1] sm:$0xff] %vm139, %v85
    %2775 = vst.msk [vmem:[%s2721 + $0x2a9] sm:$0xff] %vm139, %v86
    %2776 = vst.msk [vmem:[%s2721 + $0x2b9] sm:$0xff] %vm139, %v87
    %2777 = vst.msk [vmem:[%s2721 + $0x2c1] sm:$0xff] %vm139, %v88
    %2778 = vst.msk [vmem:[%s2721 + $0x2d1] sm:$0xff] %vm139, %v89
    %2779 = vst.msk [vmem:[%s2721 + $0x2d9] sm:$0xff] %vm139, %v90
    %2780 = vst.msk [vmem:[%s2721 + $0x2e9] sm:$0xff] %vm139, %v91
    %2781 = vst.msk [vmem:[%s2721 + $0x2f1] sm:$0xff] %vm139, %v92
    %2782 = vst.msk [vmem:[%s2721 + $0x301] sm:$0xff] %vm139, %v93
    %2783 = vst.msk [vmem:[%s2721 + $0x309] sm:$0xff] %vm139, %v94
    %2784 = vst.msk [vmem:[%s2721 + $0x319] sm:$0xff] %vm139, %v95
    %2785 = vst.msk [vmem:[%s2721 + $0x321] sm:$0xff] %vm139, %v96
    %v2786 = vld [vmem:[#allocation2] sm:$0xff]
    %v2787 = vld [vmem:[#allocation2 + $0x8] sm:$0xff]
    %v2788 = vld [vmem:[#allocation2 + $0x18] sm:$0xff]
    %v2789 = vld [vmem:[#allocation2 + $0x20] sm:$0xff]
    %v2790 = vld [vmem:[#allocation2 + $0x30] sm:$0xff]
    %v2791 = vld [vmem:[#allocation2 + $0x38] sm:$0xff]
    %v2792 = vld [vmem:[#allocation2 + $0x48] sm:$0xff]
    %v2793 = vld [vmem:[#allocation2 + $0x50] sm:$0xff]
    %v2794 = vld [vmem:[#allocation2 + $0x60] sm:$0xff]
    %v2795 = vld [vmem:[#allocation2 + $0x68] sm:$0xff]
    %v2796 = vld [vmem:[#allocation2 + $0x78] sm:$0xff]
    %v2797 = vld [vmem:[#allocation2 + $0x80] sm:$0xff]
    %v2798 = vld [vmem:[#allocation2 + $0x90] sm:$0xff]
    %v2799 = vld [vmem:[#allocation2 + $0x98] sm:$0xff]
    %v2800 = vld [vmem:[#allocation2 + $0xa8] sm:$0xff]
    %v2801 = vld [vmem:[#allocation2 + $0xb0] sm:$0xff]
    %v2802 = vld [vmem:[#allocation2 + $0xc0] sm:$0xff]
    %v2803 = vld [vmem:[#allocation2 + $0xc8] sm:$0xff]
    %v2804 = vld [vmem:[#allocation2 + $0xd8] sm:$0xff]
    %v2805 = vld [vmem:[#allocation2 + $0xe0] sm:$0xff]
    %v2806 = vld [vmem:[#allocation2 + $0xf0] sm:$0xff]
    %v2807 = vld [vmem:[#allocation2 + $0xf8] sm:$0xff]
    %v2808 = vld [vmem:[#allocation2 + $0x108] sm:$0xff]
    %v2809 = vld [vmem:[#allocation2 + $0x110] sm:$0xff]
    %v2810 = vld [vmem:[#allocation2 + $0x120] sm:$0xff]
    %v2811 = vld [vmem:[#allocation2 + $0x128] sm:$0xff]
    %v2812 = vld [vmem:[#allocation2 + $0x138] sm:$0xff]
    %v2813 = vld [vmem:[#allocation2 + $0x140] sm:$0xff]
    %v2814 = vld [vmem:[#allocation2 + $0x150] sm:$0xff]
    %v2815 = vld [vmem:[#allocation2 + $0x158] sm:$0xff]
    %v2816 = vld [vmem:[#allocation2 + $0x168] sm:$0xff]
    %v2817 = vld [vmem:[#allocation2 + $0x170] sm:$0xff]
    %v2818 = vld [vmem:[#allocation2 + $0x1b0] sm:$0xff]
    %v2819 = vld [vmem:[#allocation2 + $0x1b8] sm:$0xff]
    %v2820 = vld [vmem:[#allocation2 + $0x1c8] sm:$0xff]
    %v2821 = vld [vmem:[#allocation2 + $0x1d0] sm:$0xff]
    %v2822 = vld [vmem:[#allocation2 + $0x1e0] sm:$0xff]
    %v2823 = vld [vmem:[#allocation2 + $0x1e8] sm:$0xff]
    %v2824 = vld [vmem:[#allocation2 + $0x1f8] sm:$0xff]
    %v2825 = vld [vmem:[#allocation2 + $0x200] sm:$0xff]
    %v2826 = vld [vmem:[#allocation2 + $0x210] sm:$0xff]
    %v2827 = vld [vmem:[#allocation2 + $0x218] sm:$0xff]
    %v2828 = vld [vmem:[#allocation2 + $0x228] sm:$0xff]
    %v2829 = vld [vmem:[#allocation2 + $0x230] sm:$0xff]
    %v2830 = vld [vmem:[#allocation2 + $0x240] sm:$0xff]
    %v2831 = vld [vmem:[#allocation2 + $0x248] sm:$0xff]
    %v2832 = vld [vmem:[#allocation2 + $0x258] sm:$0xff]
    %v2833 = vld [vmem:[#allocation2 + $0x260] sm:$0xff]
    %v2834 = vld [vmem:[#allocation2 + $0x270] sm:$0xff]
    %v2835 = vld [vmem:[#allocation2 + $0x278] sm:$0xff]
    %v2836 = vld [vmem:[#allocation2 + $0x288] sm:$0xff]
    %v2837 = vld [vmem:[#allocation2 + $0x290] sm:$0xff]
    %v2838 = vld [vmem:[#allocation2 + $0x2a0] sm:$0xff]
    %v2839 = vld [vmem:[#allocation2 + $0x2a8] sm:$0xff]
    %v2840 = vld [vmem:[#allocation2 + $0x2b8] sm:$0xff]
    %v2841 = vld [vmem:[#allocation2 + $0x2c0] sm:$0xff]
    %v2842 = vld [vmem:[#allocation2 + $0x2d0] sm:$0xff]
    %v2843 = vld [vmem:[#allocation2 + $0x2d8] sm:$0xff]
    %v2844 = vld [vmem:[#allocation2 + $0x2e8] sm:$0xff]
    %v2845 = vld [vmem:[#allocation2 + $0x2f0] sm:$0xff]
    %v2846 = vld [vmem:[#allocation2 + $0x300] sm:$0xff]
    %v2847 = vld [vmem:[#allocation2 + $0x308] sm:$0xff]
    %v2848 = vld [vmem:[#allocation2 + $0x318] sm:$0xff]
    %v2849 = vld [vmem:[#allocation2 + $0x320] sm:$0xff]
    %v2850 = vadd.f32 %v2786, 0.0
    %v2851 = vadd.f32 %v2787, 0.0
    %v2852 = vadd.f32 %v2788, 0.0
    %v2853 = vadd.f32 %v2789, 0.0
    %v2854 = vadd.f32 %v2790, 0.0
    %v2855 = vadd.f32 %v2791, 0.0
    %v2856 = vadd.f32 %v2792, 0.0
    %v2857 = vadd.f32 %v2793, 0.0
    %v2858 = vadd.f32 %v2794, 0.0
    %v2859 = vadd.f32 %v2795, 0.0
    %v2860 = vadd.f32 %v2796, 0.0
    %v2861 = vadd.f32 %v2797, 0.0
    %v2862 = vadd.f32 %v2798, 0.0
    %v2863 = vadd.f32 %v2799, 0.0
    %v2864 = vadd.f32 %v2800, 0.0
    %v2865 = vadd.f32 %v2801, 0.0
    %v2866 = vadd.f32 %v2802, 0.0
    %v2867 = vadd.f32 %v2803, 0.0
    %v2868 = vadd.f32 %v2804, 0.0
    %v2869 = vadd.f32 %v2805, 0.0
    %v2870 = vadd.f32 %v2806, 0.0
    %v2871 = vadd.f32 %v2807, 0.0
    %v2872 = vadd.f32 %v2808, 0.0
    %v2873 = vadd.f32 %v2809, 0.0
    %v2874 = vadd.f32 %v2810, 0.0
    %v2875 = vadd.f32 %v2811, 0.0
    %v2876 = vadd.f32 %v2812, 0.0
    %v2877 = vadd.f32 %v2813, 0.0
    %v2878 = vadd.f32 %v2814, 0.0
    %v2879 = vadd.f32 %v2815, 0.0
    %v2880 = vadd.f32 %v2816, 0.0
    %v2881 = vadd.f32 %v2817, 0.0
    %v2882 = vadd.f32 %v2818, 0.0
    %v2883 = vadd.f32 %v2819, 0.0
    %v2884 = vadd.f32 %v2820, 0.0
    %v2885 = vadd.f32 %v2821, 0.0
    %v2886 = vadd.f32 %v2822, 0.0
    %v2887 = vadd.f32 %v2823, 0.0
    %v2888 = vadd.f32 %v2824, 0.0
    %v2889 = vadd.f32 %v2825, 0.0
    %v2890 = vadd.f32 %v2826, 0.0
    %v2891 = vadd.f32 %v2827, 0.0
    %v2892 = vadd.f32 %v2828, 0.0
    %v2893 = vadd.f32 %v2829, 0.0
    %v2894 = vadd.f32 %v2830, 0.0
    %v2895 = vadd.f32 %v2831, 0.0
    %v2896 = vadd.f32 %v2832, 0.0
    %v2897 = vadd.f32 %v2833, 0.0
    %v2898 = vadd.f32 %v2834, 0.0
    %v2899 = vadd.f32 %v2835, 0.0
    %v2900 = vadd.f32 %v2836, 0.0
    %v2901 = vadd.f32 %v2837, 0.0
    %v2902 = vadd.f32 %v2838, 0.0
    %v2903 = vadd.f32 %v2839, 0.0
    %v2904 = vadd.f32 %v2840, 0.0
    %v2905 = vadd.f32 %v2841, 0.0
    %v2906 = vadd.f32 %v2842, 0.0
    %v2907 = vadd.f32 %v2843, 0.0
    %v2908 = vadd.f32 %v2844, 0.0
    %v2909 = vadd.f32 %v2845, 0.0
    %v2910 = vadd.f32 %v2846, 0.0
    %v2911 = vadd.f32 %v2847, 0.0
    %v2912 = vadd.f32 %v2848, 0.0
    %v2913 = vadd.f32 %v2849, 0.0
    %v2914 = vld [vmem:[#allocation2 + $0x1] sm:$0xff]
    %v2915 = vld [vmem:[#allocation2 + $0x9] sm:$0xff]
    %v2916 = vld [vmem:[#allocation2 + $0x19] sm:$0xff]
    %v2917 = vld [vmem:[#allocation2 + $0x21] sm:$0xff]
    %v2918 = vld [vmem:[#allocation2 + $0x31] sm:$0xff]
    %v2919 = vld [vmem:[#allocation2 + $0x39] sm:$0xff]
    %v2920 = vld [vmem:[#allocation2 + $0x49] sm:$0xff]
    %v2921 = vld [vmem:[#allocation2 + $0x51] sm:$0xff]
    %v2922 = vld [vmem:[#allocation2 + $0x61] sm:$0xff]
    %v2923 = vld [vmem:[#allocation2 + $0x69] sm:$0xff]
    %v2924 = vld [vmem:[#allocation2 + $0x79] sm:$0xff]
    %v2925 = vld [vmem:[#allocation2 + $0x81] sm:$0xff]
    %v2926 = vld [vmem:[#allocation2 + $0x91] sm:$0xff]
    %v2927 = vld [vmem:[#allocation2 + $0x99] sm:$0xff]
    %v2928 = vld [vmem:[#allocation2 + $0xa9] sm:$0xff]
    %v2929 = vld [vmem:[#allocation2 + $0xb1] sm:$0xff]
    %v2930 = vld [vmem:[#allocation2 + $0xc1] sm:$0xff]
    %v2931 = vld [vmem:[#allocation2 + $0xc9] sm:$0xff]
    %v2932 = vld [vmem:[#allocation2 + $0xd9] sm:$0xff]
    %v2933 = vld [vmem:[#allocation2 + $0xe1] sm:$0xff]
    %v2934 = vld [vmem:[#allocation2 + $0xf1] sm:$0xff]
    %v2935 = vld [vmem:[#allocation2 + $0xf9] sm:$0xff]
    %v2936 = vld [vmem:[#allocation2 + $0x109] sm:$0xff]
    %v2937 = vld [vmem:[#allocation2 + $0x111] sm:$0xff]
    %v2938 = vld [vmem:[#allocation2 + $0x121] sm:$0xff]
    %v2939 = vld [vmem:[#allocation2 + $0x129] sm:$0xff]
    %v2940 = vld [vmem:[#allocation2 + $0x139] sm:$0xff]
    %v2941 = vld [vmem:[#allocation2 + $0x141] sm:$0xff]
    %v2942 = vld [vmem:[#allocation2 + $0x151] sm:$0xff]
    %v2943 = vld [vmem:[#allocation2 + $0x159] sm:$0xff]
    %v2944 = vld [vmem:[#allocation2 + $0x169] sm:$0xff]
    %v2945 = vld [vmem:[#allocation2 + $0x171] sm:$0xff]
    %v2946 = vld [vmem:[#allocation2 + $0x1b1] sm:$0xff]
    %v2947 = vld [vmem:[#allocation2 + $0x1b9] sm:$0xff]
    %v2948 = vld [vmem:[#allocation2 + $0x1c9] sm:$0xff]
    %v2949 = vld [vmem:[#allocation2 + $0x1d1] sm:$0xff]
    %v2950 = vld [vmem:[#allocation2 + $0x1e1] sm:$0xff]
    %v2951 = vld [vmem:[#allocation2 + $0x1e9] sm:$0xff]
    %v2952 = vld [vmem:[#allocation2 + $0x1f9] sm:$0xff]
    %v2953 = vld [vmem:[#allocation2 + $0x201] sm:$0xff]
    %v2954 = vld [vmem:[#allocation2 + $0x211] sm:$0xff]
    %v2955 = vld [vmem:[#allocation2 + $0x219] sm:$0xff]
    %v2956 = vld [vmem:[#allocation2 + $0x229] sm:$0xff]
    %v2957 = vld [vmem:[#allocation2 + $0x231] sm:$0xff]
    %v2958 = vld [vmem:[#allocation2 + $0x241] sm:$0xff]
    %v2959 = vld [vmem:[#allocation2 + $0x249] sm:$0xff]
    %v2960 = vld [vmem:[#allocation2 + $0x259] sm:$0xff]
    %v2961 = vld [vmem:[#allocation2 + $0x261] sm:$0xff]
    %v2962 = vld [vmem:[#allocation2 + $0x271] sm:$0xff]
    %v2963 = vld [vmem:[#allocation2 + $0x279] sm:$0xff]
    %v2964 = vld [vmem:[#allocation2 + $0x289] sm:$0xff]
    %v2965 = vld [vmem:[#allocation2 + $0x291] sm:$0xff]
    %v2966 = vld [vmem:[#allocation2 + $0x2a1] sm:$0xff]
    %v2967 = vld [vmem:[#allocation2 + $0x2a9] sm:$0xff]
    %v2968 = vld [vmem:[#allocation2 + $0x2b9] sm:$0xff]
    %v2969 = vld [vmem:[#allocation2 + $0x2c1] sm:$0xff]
    %v2970 = vld [vmem:[#allocation2 + $0x2d1] sm:$0xff]
    %v2971 = vld [vmem:[#allocation2 + $0x2d9] sm:$0xff]
    %v2972 = vld [vmem:[#allocation2 + $0x2e9] sm:$0xff]
    %v2973 = vld [vmem:[#allocation2 + $0x2f1] sm:$0xff]
    %v2974 = vld [vmem:[#allocation2 + $0x301] sm:$0xff]
    %v2975 = vld [vmem:[#allocation2 + $0x309] sm:$0xff]
    %v2976 = vld [vmem:[#allocation2 + $0x319] sm:$0xff]
    %v2977 = vld [vmem:[#allocation2 + $0x321] sm:$0xff]
    %v2978 = vadd.f32 %v2850, %v2914
    %v2979 = vadd.f32 %v2851, %v2915
    %v2980 = vadd.f32 %v2852, %v2916
    %v2981 = vadd.f32 %v2853, %v2917
    %v2982 = vadd.f32 %v2854, %v2918
    %v2983 = vadd.f32 %v2855, %v2919
    %v2984 = vadd.f32 %v2856, %v2920
    %v2985 = vadd.f32 %v2857, %v2921
    %v2986 = vadd.f32 %v2858, %v2922
    %v2987 = vadd.f32 %v2859, %v2923
    %v2988 = vadd.f32 %v2860, %v2924
    %v2989 = vadd.f32 %v2861, %v2925
    %v2990 = vadd.f32 %v2862, %v2926
    %v2991 = vadd.f32 %v2863, %v2927
    %v2992 = vadd.f32 %v2864, %v2928
    %v2993 = vadd.f32 %v2865, %v2929
    %v2994 = vadd.f32 %v2866, %v2930
    %v2995 = vadd.f32 %v2867, %v2931
    %v2996 = vadd.f32 %v2868, %v2932
    %v2997 = vadd.f32 %v2869, %v2933
    %v2998 = vadd.f32 %v2870, %v2934
    %v2999 = vadd.f32 %v2871, %v2935
    %v3000 = vadd.f32 %v2872, %v2936
    %v3001 = vadd.f32 %v2873, %v2937
    %v3002 = vadd.f32 %v2874, %v2938
    %v3003 = vadd.f32 %v2875, %v2939
    %v3004 = vadd.f32 %v2876, %v2940
    %v3005 = vadd.f32 %v2877, %v2941
    %v3006 = vadd.f32 %v2878, %v2942
    %v3007 = vadd.f32 %v2879, %v2943
    %v3008 = vadd.f32 %v2880, %v2944
    %v3009 = vadd.f32 %v2881, %v2945
    %v3010 = vadd.f32 %v2882, %v2946
    %v3011 = vadd.f32 %v2883, %v2947
    %v3012 = vadd.f32 %v2884, %v2948
    %v3013 = vadd.f32 %v2885, %v2949
    %v3014 = vadd.f32 %v2886, %v2950
    %v3015 = vadd.f32 %v2887, %v2951
    %v3016 = vadd.f32 %v2888, %v2952
    %v3017 = vadd.f32 %v2889, %v2953
    %v3018 = vadd.f32 %v2890, %v2954
    %v3019 = vadd.f32 %v2891, %v2955
    %v3020 = vadd.f32 %v2892, %v2956
    %v3021 = vadd.f32 %v2893, %v2957
    %v3022 = vadd.f32 %v2894, %v2958
    %v3023 = vadd.f32 %v2895, %v2959
    %v3024 = vadd.f32 %v2896, %v2960
    %v3025 = vadd.f32 %v2897, %v2961
    %v3026 = vadd.f32 %v2898, %v2962
    %v3027 = vadd.f32 %v2899, %v2963
    %v3028 = vadd.f32 %v2900, %v2964
    %v3029 = vadd.f32 %v2901, %v2965
    %v3030 = vadd.f32 %v2902, %v2966
    %v3031 = vadd.f32 %v2903, %v2967
    %v3032 = vadd.f32 %v2904, %v2968
    %v3033 = vadd.f32 %v2905, %v2969
    %v3034 = vadd.f32 %v2906, %v2970
    %v3035 = vadd.f32 %v2907, %v2971
    %v3036 = vadd.f32 %v2908, %v2972
    %v3037 = vadd.f32 %v2909, %v2973
    %v3038 = vadd.f32 %v2910, %v2974
    %v3039 = vadd.f32 %v2911, %v2975
    %v3040 = vadd.f32 %v2912, %v2976
    %v3041 = vadd.f32 %v2913, %v2977
    %v3042 = vld [vmem:[#allocation2 + $0x2] sm:$0xff]
    %v3043 = vld [vmem:[#allocation2 + $0xa] sm:$0xff]
    %v3044 = vld [vmem:[#allocation2 + $0x1a] sm:$0xff]
    %v3045 = vld [vmem:[#allocation2 + $0x22] sm:$0xff]
    %v3046 = vld [vmem:[#allocation2 + $0x32] sm:$0xff]
    %v3047 = vld [vmem:[#allocation2 + $0x3a] sm:$0xff]
    %v3048 = vld [vmem:[#allocation2 + $0x4a] sm:$0xff]
    %v3049 = vld [vmem:[#allocation2 + $0x52] sm:$0xff]
    %v3050 = vld [vmem:[#allocation2 + $0x62] sm:$0xff]
    %v3051 = vld [vmem:[#allocation2 + $0x6a] sm:$0xff]
    %v3052 = vld [vmem:[#allocation2 + $0x7a] sm:$0xff]
    %v3053 = vld [vmem:[#allocation2 + $0x82] sm:$0xff]
    %v3054 = vld [vmem:[#allocation2 + $0x92] sm:$0xff]
    %v3055 = vld [vmem:[#allocation2 + $0x9a] sm:$0xff]
    %v3056 = vld [vmem:[#allocation2 + $0xaa] sm:$0xff]
    %v3057 = vld [vmem:[#allocation2 + $0xb2] sm:$0xff]
    %v3058 = vld [vmem:[#allocation2 + $0xc2] sm:$0xff]
    %v3059 = vld [vmem:[#allocation2 + $0xca] sm:$0xff]
    %v3060 = vld [vmem:[#allocation2 + $0xda] sm:$0xff]
    %v3061 = vld [vmem:[#allocation2 + $0xe2] sm:$0xff]
    %v3062 = vld [vmem:[#allocation2 + $0xf2] sm:$0xff]
    %v3063 = vld [vmem:[#allocation2 + $0xfa] sm:$0xff]
    %v3064 = vld [vmem:[#allocation2 + $0x10a] sm:$0xff]
    %v3065 = vld [vmem:[#allocation2 + $0x112] sm:$0xff]
    %v3066 = vld [vmem:[#allocation2 + $0x122] sm:$0xff]
    %v3067 = vld [vmem:[#allocation2 + $0x12a] sm:$0xff]
    %v3068 = vld [vmem:[#allocation2 + $0x13a] sm:$0xff]
    %v3069 = vld [vmem:[#allocation2 + $0x142] sm:$0xff]
    %v3070 = vld [vmem:[#allocation2 + $0x152] sm:$0xff]
    %v3071 = vld [vmem:[#allocation2 + $0x15a] sm:$0xff]
    %v3072 = vld [vmem:[#allocation2 + $0x16a] sm:$0xff]
    %v3073 = vld [vmem:[#allocation2 + $0x172] sm:$0xff]
    %v3074 = vld [vmem:[#allocation2 + $0x1b2] sm:$0xff]
    %v3075 = vld [vmem:[#allocation2 + $0x1ba] sm:$0xff]
    %v3076 = vld [vmem:[#allocation2 + $0x1ca] sm:$0xff]
    %v3077 = vld [vmem:[#allocation2 + $0x1d2] sm:$0xff]
    %v3078 = vld [vmem:[#allocation2 + $0x1e2] sm:$0xff]
    %v3079 = vld [vmem:[#allocation2 + $0x1ea] sm:$0xff]
    %v3080 = vld [vmem:[#allocation2 + $0x1fa] sm:$0xff]
    %v3081 = vld [vmem:[#allocation2 + $0x202] sm:$0xff]
    %v3082 = vld [vmem:[#allocation2 + $0x212] sm:$0xff]
    %v3083 = vld [vmem:[#allocation2 + $0x21a] sm:$0xff]
    %v3084 = vld [vmem:[#allocation2 + $0x22a] sm:$0xff]
    %v3085 = vld [vmem:[#allocation2 + $0x232] sm:$0xff]
    %v3086 = vld [vmem:[#allocation2 + $0x242] sm:$0xff]
    %v3087 = vld [vmem:[#allocation2 + $0x24a] sm:$0xff]
    %v3088 = vld [vmem:[#allocation2 + $0x25a] sm:$0xff]
    %v3089 = vld [vmem:[#allocation2 + $0x262] sm:$0xff]
    %v3090 = vld [vmem:[#allocation2 + $0x272] sm:$0xff]
    %v3091 = vld [vmem:[#allocation2 + $0x27a] sm:$0xff]
    %v3092 = vld [vmem:[#allocation2 + $0x28a] sm:$0xff]
    %v3093 = vld [vmem:[#allocation2 + $0x292] sm:$0xff]
    %v3094 = vld [vmem:[#allocation2 + $0x2a2] sm:$0xff]
    %v3095 = vld [vmem:[#allocation2 + $0x2aa] sm:$0xff]
    %v3096 = vld [vmem:[#allocation2 + $0x2ba] sm:$0xff]
    %v3097 = vld [vmem:[#allocation2 + $0x2c2] sm:$0xff]
    %v3098 = vld [vmem:[#allocation2 + $0x2d2] sm:$0xff]
    %v3099 = vld [vmem:[#allocation2 + $0x2da] sm:$0xff]
    %v3100 = vld [vmem:[#allocation2 + $0x2ea] sm:$0xff]
    %v3101 = vld [vmem:[#allocation2 + $0x2f2] sm:$0xff]
    %v3102 = vld [vmem:[#allocation2 + $0x302] sm:$0xff]
    %v3103 = vld [vmem:[#allocation2 + $0x30a] sm:$0xff]
    %v3104 = vld [vmem:[#allocation2 + $0x31a] sm:$0xff]
    %v3105 = vld [vmem:[#allocation2 + $0x322] sm:$0xff]
    %v3106 = vadd.f32 %v2978, %v3042
    %v3107 = vadd.f32 %v2979, %v3043
    %v3108 = vadd.f32 %v2980, %v3044
    %v3109 = vadd.f32 %v2981, %v3045
    %v3110 = vadd.f32 %v2982, %v3046
    %v3111 = vadd.f32 %v2983, %v3047
    %v3112 = vadd.f32 %v2984, %v3048
    %v3113 = vadd.f32 %v2985, %v3049
    %v3114 = vadd.f32 %v2986, %v3050
    %v3115 = vadd.f32 %v2987, %v3051
    %v3116 = vadd.f32 %v2988, %v3052
    %v3117 = vadd.f32 %v2989, %v3053
    %v3118 = vadd.f32 %v2990, %v3054
    %v3119 = vadd.f32 %v2991, %v3055
    %v3120 = vadd.f32 %v2992, %v3056
    %v3121 = vadd.f32 %v2993, %v3057
    %v3122 = vadd.f32 %v2994, %v3058
    %v3123 = vadd.f32 %v2995, %v3059
    %v3124 = vadd.f32 %v2996, %v3060
    %v3125 = vadd.f32 %v2997, %v3061
    %v3126 = vadd.f32 %v2998, %v3062
    %v3127 = vadd.f32 %v2999, %v3063
    %v3128 = vadd.f32 %v3000, %v3064
    %v3129 = vadd.f32 %v3001, %v3065
    %v3130 = vadd.f32 %v3002, %v3066
    %v3131 = vadd.f32 %v3003, %v3067
    %v3132 = vadd.f32 %v3004, %v3068
    %v3133 = vadd.f32 %v3005, %v3069
    %v3134 = vadd.f32 %v3006, %v3070
    %v3135 = vadd.f32 %v3007, %v3071
    %v3136 = vadd.f32 %v3008, %v3072
    %v3137 = vadd.f32 %v3009, %v3073
    %v3138 = vadd.f32 %v3010, %v3074
    %v3139 = vadd.f32 %v3011, %v3075
    %v3140 = vadd.f32 %v3012, %v3076
    %v3141 = vadd.f32 %v3013, %v3077
    %v3142 = vadd.f32 %v3014, %v3078
    %v3143 = vadd.f32 %v3015, %v3079
    %v3144 = vadd.f32 %v3016, %v3080
    %v3145 = vadd.f32 %v3017, %v3081
    %v3146 = vadd.f32 %v3018, %v3082
    %v3147 = vadd.f32 %v3019, %v3083
    %v3148 = vadd.f32 %v3020, %v3084
    %v3149 = vadd.f32 %v3021, %v3085
    %v3150 = vadd.f32 %v3022, %v3086
    %v3151 = vadd.f32 %v3023, %v3087
    %v3152 = vadd.f32 %v3024, %v3088
    %v3153 = vadd.f32 %v3025, %v3089
    %v3154 = vadd.f32 %v3026, %v3090
    %v3155 = vadd.f32 %v3027, %v3091
    %v3156 = vadd.f32 %v3028, %v3092
    %v3157 = vadd.f32 %v3029, %v3093
    %v3158 = vadd.f32 %v3030, %v3094
    %v3159 = vadd.f32 %v3031, %v3095
    %v3160 = vadd.f32 %v3032, %v3096
    %v3161 = vadd.f32 %v3033, %v3097
    %v3162 = vadd.f32 %v3034, %v3098
    %v3163 = vadd.f32 %v3035, %v3099
    %v3164 = vadd.f32 %v3036, %v3100
    %v3165 = vadd.f32 %v3037, %v3101
    %v3166 = vadd.f32 %v3038, %v3102
    %v3167 = vadd.f32 %v3039, %v3103
    %v3168 = vadd.f32 %v3040, %v3104
    %v3169 = vadd.f32 %v3041, %v3105
    %v3170 = vld [vmem:[%s2721] sm:$0xff]
    %v3171 = vld [vmem:[%s2721 + $0x8] sm:$0xff]
    %v3172 = vld [vmem:[%s2721 + $0x18] sm:$0xff]
    %v3173 = vld [vmem:[%s2721 + $0x20] sm:$0xff]
    %v3174 = vld [vmem:[%s2721 + $0x30] sm:$0xff]
    %v3175 = vld [vmem:[%s2721 + $0x38] sm:$0xff]
    %v3176 = vld [vmem:[%s2721 + $0x48] sm:$0xff]
    %v3177 = vld [vmem:[%s2721 + $0x50] sm:$0xff]
    %v3178 = vld [vmem:[%s2721 + $0x60] sm:$0xff]
    %v3179 = vld [vmem:[%s2721 + $0x68] sm:$0xff]
    %v3180 = vld [vmem:[%s2721 + $0x78] sm:$0xff]
    %v3181 = vld [vmem:[%s2721 + $0x80] sm:$0xff]
    %v3182 = vld [vmem:[%s2721 + $0x90] sm:$0xff]
    %v3183 = vld [vmem:[%s2721 + $0x98] sm:$0xff]
    %v3184 = vld [vmem:[%s2721 + $0xa8] sm:$0xff]
    %v3185 = vld [vmem:[%s2721 + $0xb0] sm:$0xff]
    %v3186 = vld [vmem:[%s2721 + $0xc0] sm:$0xff]
    %v3187 = vld [vmem:[%s2721 + $0xc8] sm:$0xff]
    %v3188 = vld [vmem:[%s2721 + $0xd8] sm:$0xff]
    %v3189 = vld [vmem:[%s2721 + $0xe0] sm:$0xff]
    %v3190 = vld [vmem:[%s2721 + $0xf0] sm:$0xff]
    %v3191 = vld [vmem:[%s2721 + $0xf8] sm:$0xff]
    %v3192 = vld [vmem:[%s2721 + $0x108] sm:$0xff]
    %v3193 = vld [vmem:[%s2721 + $0x110] sm:$0xff]
    %v3194 = vld [vmem:[%s2721 + $0x120] sm:$0xff]
    %v3195 = vld [vmem:[%s2721 + $0x128] sm:$0xff]
    %v3196 = vld [vmem:[%s2721 + $0x138] sm:$0xff]
    %v3197 = vld [vmem:[%s2721 + $0x140] sm:$0xff]
    %v3198 = vld [vmem:[%s2721 + $0x150] sm:$0xff]
    %v3199 = vld [vmem:[%s2721 + $0x158] sm:$0xff]
    %v3200 = vld [vmem:[%s2721 + $0x168] sm:$0xff]
    %v3201 = vld [vmem:[%s2721 + $0x170] sm:$0xff]
    %v3202 = vld [vmem:[%s2721 + $0x1b0] sm:$0xff]
    %v3203 = vld [vmem:[%s2721 + $0x1b8] sm:$0xff]
    %v3204 = vld [vmem:[%s2721 + $0x1c8] sm:$0xff]
    %v3205 = vld [vmem:[%s2721 + $0x1d0] sm:$0xff]
    %v3206 = vld [vmem:[%s2721 + $0x1e0] sm:$0xff]
    %v3207 = vld [vmem:[%s2721 + $0x1e8] sm:$0xff]
    %v3208 = vld [vmem:[%s2721 + $0x1f8] sm:$0xff]
    %v3209 = vld [vmem:[%s2721 + $0x200] sm:$0xff]
    %v3210 = vld [vmem:[%s2721 + $0x210] sm:$0xff]
    %v3211 = vld [vmem:[%s2721 + $0x218] sm:$0xff]
    %v3212 = vld [vmem:[%s2721 + $0x228] sm:$0xff]
    %v3213 = vld [vmem:[%s2721 + $0x230] sm:$0xff]
    %v3214 = vld [vmem:[%s2721 + $0x240] sm:$0xff]
    %v3215 = vld [vmem:[%s2721 + $0x248] sm:$0xff]
    %v3216 = vld [vmem:[%s2721 + $0x258] sm:$0xff]
    %v3217 = vld [vmem:[%s2721 + $0x260] sm:$0xff]
    %v3218 = vld [vmem:[%s2721 + $0x270] sm:$0xff]
    %v3219 = vld [vmem:[%s2721 + $0x278] sm:$0xff]
    %v3220 = vld [vmem:[%s2721 + $0x288] sm:$0xff]
    %v3221 = vld [vmem:[%s2721 + $0x290] sm:$0xff]
    %v3222 = vld [vmem:[%s2721 + $0x2a0] sm:$0xff]
    %v3223 = vld [vmem:[%s2721 + $0x2a8] sm:$0xff]
    %v3224 = vld [vmem:[%s2721 + $0x2b8] sm:$0xff]
    %v3225 = vld [vmem:[%s2721 + $0x2c0] sm:$0xff]
    %v3226 = vld [vmem:[%s2721 + $0x2d0] sm:$0xff]
    %v3227 = vld [vmem:[%s2721 + $0x2d8] sm:$0xff]
    %v3228 = vld [vmem:[%s2721 + $0x2e8] sm:$0xff]
    %v3229 = vld [vmem:[%s2721 + $0x2f0] sm:$0xff]
    %v3230 = vld [vmem:[%s2721 + $0x300] sm:$0xff]
    %v3231 = vld [vmem:[%s2721 + $0x308] sm:$0xff]
    %v3232 = vld [vmem:[%s2721 + $0x318] sm:$0xff]
    %v3233 = vld [vmem:[%s2721 + $0x320] sm:$0xff]
    %v3234 = vadd.f32 %v3106, %v3170
    %v3235 = vadd.f32 %v3107, %v3171
    %v3236 = vadd.f32 %v3108, %v3172
    %v3237 = vadd.f32 %v3109, %v3173
    %v3238 = vadd.f32 %v3110, %v3174
    %v3239 = vadd.f32 %v3111, %v3175
    %v3240 = vadd.f32 %v3112, %v3176
    %v3241 = vadd.f32 %v3113, %v3177
    %v3242 = vadd.f32 %v3114, %v3178
    %v3243 = vadd.f32 %v3115, %v3179
    %v3244 = vadd.f32 %v3116, %v3180
    %v3245 = vadd.f32 %v3117, %v3181
    %v3246 = vadd.f32 %v3118, %v3182
    %v3247 = vadd.f32 %v3119, %v3183
    %v3248 = vadd.f32 %v3120, %v3184
    %v3249 = vadd.f32 %v3121, %v3185
    %v3250 = vadd.f32 %v3122, %v3186
    %v3251 = vadd.f32 %v3123, %v3187
    %v3252 = vadd.f32 %v3124, %v3188
    %v3253 = vadd.f32 %v3125, %v3189
    %v3254 = vadd.f32 %v3126, %v3190
    %v3255 = vadd.f32 %v3127, %v3191
    %v3256 = vadd.f32 %v3128, %v3192
    %v3257 = vadd.f32 %v3129, %v3193
    %v3258 = vadd.f32 %v3130, %v3194
    %v3259 = vadd.f32 %v3131, %v3195
    %v3260 = vadd.f32 %v3132, %v3196
    %v3261 = vadd.f32 %v3133, %v3197
    %v3262 = vadd.f32 %v3134, %v3198
    %v3263 = vadd.f32 %v3135, %v3199
    %v3264 = vadd.f32 %v3136, %v3200
    %v3265 = vadd.f32 %v3137, %v3201
    %v3266 = vadd.f32 %v3138, %v3202
    %v3267 = vadd.f32 %v3139, %v3203
    %v3268 = vadd.f32 %v3140, %v3204
    %v3269 = vadd.f32 %v3141, %v3205
    %v3270 = vadd.f32 %v3142, %v3206
    %v3271 = vadd.f32 %v3143, %v3207
    %v3272 = vadd.f32 %v3144, %v3208
    %v3273 = vadd.f32 %v3145, %v3209
    %v3274 = vadd.f32 %v3146, %v3210
    %v3275 = vadd.f32 %v3147, %v3211
    %v3276 = vadd.f32 %v3148, %v3212
    %v3277 = vadd.f32 %v3149, %v3213
    %v3278 = vadd.f32 %v3150, %v3214
    %v3279 = vadd.f32 %v3151, %v3215
    %v3280 = vadd.f32 %v3152, %v3216
    %v3281 = vadd.f32 %v3153, %v3217
    %v3282 = vadd.f32 %v3154, %v3218
    %v3283 = vadd.f32 %v3155, %v3219
    %v3284 = vadd.f32 %v3156, %v3220
    %v3285 = vadd.f32 %v3157, %v3221
    %v3286 = vadd.f32 %v3158, %v3222
    %v3287 = vadd.f32 %v3159, %v3223
    %v3288 = vadd.f32 %v3160, %v3224
    %v3289 = vadd.f32 %v3161, %v3225
    %v3290 = vadd.f32 %v3162, %v3226
    %v3291 = vadd.f32 %v3163, %v3227
    %v3292 = vadd.f32 %v3164, %v3228
    %v3293 = vadd.f32 %v3165, %v3229
    %v3294 = vadd.f32 %v3166, %v3230
    %v3295 = vadd.f32 %v3167, %v3231
    %v3296 = vadd.f32 %v3168, %v3232
    %v3297 = vadd.f32 %v3169, %v3233
    %v3298 = vld [vmem:[%s2721 + $0x1] sm:$0xff]
    %v3299 = vld [vmem:[%s2721 + $0x9] sm:$0xff]
    %v3300 = vld [vmem:[%s2721 + $0x19] sm:$0xff]
    %v3301 = vld [vmem:[%s2721 + $0x21] sm:$0xff]
    %v3302 = vld [vmem:[%s2721 + $0x31] sm:$0xff]
    %v3303 = vld [vmem:[%s2721 + $0x39] sm:$0xff]
    %v3304 = vld [vmem:[%s2721 + $0x49] sm:$0xff]
    %v3305 = vld [vmem:[%s2721 + $0x51] sm:$0xff]
    %v3306 = vld [vmem:[%s2721 + $0x61] sm:$0xff]
    %v3307 = vld [vmem:[%s2721 + $0x69] sm:$0xff]
    %v3308 = vld [vmem:[%s2721 + $0x79] sm:$0xff]
    %v3309 = vld [vmem:[%s2721 + $0x81] sm:$0xff]
    %v3310 = vld [vmem:[%s2721 + $0x91] sm:$0xff]
    %v3311 = vld [vmem:[%s2721 + $0x99] sm:$0xff]
    %v3312 = vld [vmem:[%s2721 + $0xa9] sm:$0xff]
    %v3313 = vld [vmem:[%s2721 + $0xb1] sm:$0xff]
    %v3314 = vld [vmem:[%s2721 + $0xc1] sm:$0xff]
    %v3315 = vld [vmem:[%s2721 + $0xc9] sm:$0xff]
    %v3316 = vld [vmem:[%s2721 + $0xd9] sm:$0xff]
    %v3317 = vld [vmem:[%s2721 + $0xe1] sm:$0xff]
    %v3318 = vld [vmem:[%s2721 + $0xf1] sm:$0xff]
    %v3319 = vld [vmem:[%s2721 + $0xf9] sm:$0xff]
    %v3320 = vld [vmem:[%s2721 + $0x109] sm:$0xff]
    %v3321 = vld [vmem:[%s2721 + $0x111] sm:$0xff]
    %v3322 = vld [vmem:[%s2721 + $0x121] sm:$0xff]
    %v3323 = vld [vmem:[%s2721 + $0x129] sm:$0xff]
    %v3324 = vld [vmem:[%s2721 + $0x139] sm:$0xff]
    %v3325 = vld [vmem:[%s2721 + $0x141] sm:$0xff]
    %v3326 = vld [vmem:[%s2721 + $0x151] sm:$0xff]
    %v3327 = vld [vmem:[%s2721 + $0x159] sm:$0xff]
    %v3328 = vld [vmem:[%s2721 + $0x169] sm:$0xff]
    %v3329 = vld [vmem:[%s2721 + $0x171] sm:$0xff]
    %v3330 = vld [vmem:[%s2721 + $0x1b1] sm:$0xff]
    %v3331 = vld [vmem:[%s2721 + $0x1b9] sm:$0xff]
    %v3332 = vld [vmem:[%s2721 + $0x1c9] sm:$0xff]
    %v3333 = vld [vmem:[%s2721 + $0x1d1] sm:$0xff]
    %v3334 = vld [vmem:[%s2721 + $0x1e1] sm:$0xff]
    %v3335 = vld [vmem:[%s2721 + $0x1e9] sm:$0xff]
    %v3336 = vld [vmem:[%s2721 + $0x1f9] sm:$0xff]
    %v3337 = vld [vmem:[%s2721 + $0x201] sm:$0xff]
    %v3338 = vld [vmem:[%s2721 + $0x211] sm:$0xff]
    %v3339 = vld [vmem:[%s2721 + $0x219] sm:$0xff]
    %v3340 = vld [vmem:[%s2721 + $0x229] sm:$0xff]
    %v3341 = vld [vmem:[%s2721 + $0x231] sm:$0xff]
    %v3342 = vld [vmem:[%s2721 + $0x241] sm:$0xff]
    %v3343 = vld [vmem:[%s2721 + $0x249] sm:$0xff]
    %v3344 = vld [vmem:[%s2721 + $0x259] sm:$0xff]
    %v3345 = vld [vmem:[%s2721 + $0x261] sm:$0xff]
    %v3346 = vld [vmem:[%s2721 + $0x271] sm:$0xff]
    %v3347 = vld [vmem:[%s2721 + $0x279] sm:$0xff]
    %v3348 = vld [vmem:[%s2721 + $0x289] sm:$0xff]
    %v3349 = vld [vmem:[%s2721 + $0x291] sm:$0xff]
    %v3350 = vld [vmem:[%s2721 + $0x2a1] sm:$0xff]
    %v3351 = vld [vmem:[%s2721 + $0x2a9] sm:$0xff]
    %v3352 = vld [vmem:[%s2721 + $0x2b9] sm:$0xff]
    %v3353 = vld [vmem:[%s2721 + $0x2c1] sm:$0xff]
    %v3354 = vld [vmem:[%s2721 + $0x2d1] sm:$0xff]
    %v3355 = vld [vmem:[%s2721 + $0x2d9] sm:$0xff]
    %v3356 = vld [vmem:[%s2721 + $0x2e9] sm:$0xff]
    %v3357 = vld [vmem:[%s2721 + $0x2f1] sm:$0xff]
    %v3358 = vld [vmem:[%s2721 + $0x301] sm:$0xff]
    %v3359 = vld [vmem:[%s2721 + $0x309] sm:$0xff]
    %v3360 = vld [vmem:[%s2721 + $0x319] sm:$0xff]
    %v3361 = vld [vmem:[%s2721 + $0x321] sm:$0xff]
    %v3362 = vadd.f32 %v3234, %v3298
    %v3363 = vadd.f32 %v3235, %v3299
    %v3364 = vadd.f32 %v3236, %v3300
    %v3365 = vadd.f32 %v3237, %v3301
    %v3366 = vadd.f32 %v3238, %v3302
    %v3367 = vadd.f32 %v3239, %v3303
    %v3368 = vadd.f32 %v3240, %v3304
    %v3369 = vadd.f32 %v3241, %v3305
    %v3370 = vadd.f32 %v3242, %v3306
    %v3371 = vadd.f32 %v3243, %v3307
    %v3372 = vadd.f32 %v3244, %v3308
    %v3373 = vadd.f32 %v3245, %v3309
    %v3374 = vadd.f32 %v3246, %v3310
    %v3375 = vadd.f32 %v3247, %v3311
    %v3376 = vadd.f32 %v3248, %v3312
    %v3377 = vadd.f32 %v3249, %v3313
    %v3378 = vadd.f32 %v3250, %v3314
    %v3379 = vadd.f32 %v3251, %v3315
    %v3380 = vadd.f32 %v3252, %v3316
    %v3381 = vadd.f32 %v3253, %v3317
    %v3382 = vadd.f32 %v3254, %v3318
    %v3383 = vadd.f32 %v3255, %v3319
    %v3384 = vadd.f32 %v3256, %v3320
    %v3385 = vadd.f32 %v3257, %v3321
    %v3386 = vadd.f32 %v3258, %v3322
    %v3387 = vadd.f32 %v3259, %v3323
    %v3388 = vadd.f32 %v3260, %v3324
    %v3389 = vadd.f32 %v3261, %v3325
    %v3390 = vadd.f32 %v3262, %v3326
    %v3391 = vadd.f32 %v3263, %v3327
    %v3392 = vadd.f32 %v3264, %v3328
    %v3393 = vadd.f32 %v3265, %v3329
    %v3394 = vadd.f32 %v3266, %v3330
    %v3395 = vadd.f32 %v3267, %v3331
    %v3396 = vadd.f32 %v3268, %v3332
    %v3397 = vadd.f32 %v3269, %v3333
    %v3398 = vadd.f32 %v3270, %v3334
    %v3399 = vadd.f32 %v3271, %v3335
    %v3400 = vadd.f32 %v3272, %v3336
    %v3401 = vadd.f32 %v3273, %v3337
    %v3402 = vadd.f32 %v3274, %v3338
    %v3403 = vadd.f32 %v3275, %v3339
    %v3404 = vadd.f32 %v3276, %v3340
    %v3405 = vadd.f32 %v3277, %v3341
    %v3406 = vadd.f32 %v3278, %v3342
    %v3407 = vadd.f32 %v3279, %v3343
    %v3408 = vadd.f32 %v3280, %v3344
    %v3409 = vadd.f32 %v3281, %v3345
    %v3410 = vadd.f32 %v3282, %v3346
    %v3411 = vadd.f32 %v3283, %v3347
    %v3412 = vadd.f32 %v3284, %v3348
    %v3413 = vadd.f32 %v3285, %v3349
    %v3414 = vadd.f32 %v3286, %v3350
    %v3415 = vadd.f32 %v3287, %v3351
    %v3416 = vadd.f32 %v3288, %v3352
    %v3417 = vadd.f32 %v3289, %v3353
    %v3418 = vadd.f32 %v3290, %v3354
    %v3419 = vadd.f32 %v3291, %v3355
    %v3420 = vadd.f32 %v3292, %v3356
    %v3421 = vadd.f32 %v3293, %v3357
    %v3422 = vadd.f32 %v3294, %v3358
    %v3423 = vadd.f32 %v3295, %v3359
    %v3424 = vadd.f32 %v3296, %v3360
    %v3425 = vadd.f32 %v3297, %v3361
    %v3426 = vld [vmem:[%s2721 + $0x2] sm:$0xff]
    %v3427 = vld [vmem:[%s2721 + $0xa] sm:$0xff]
    %v3428 = vld [vmem:[%s2721 + $0x1a] sm:$0xff]
    %v3429 = vld [vmem:[%s2721 + $0x22] sm:$0xff]
    %v3430 = vld [vmem:[%s2721 + $0x32] sm:$0xff]
    %v3431 = vld [vmem:[%s2721 + $0x3a] sm:$0xff]
    %v3432 = vld [vmem:[%s2721 + $0x4a] sm:$0xff]
    %v3433 = vld [vmem:[%s2721 + $0x52] sm:$0xff]
    %v3434 = vld [vmem:[%s2721 + $0x62] sm:$0xff]
    %v3435 = vld [vmem:[%s2721 + $0x6a] sm:$0xff]
    %v3436 = vld [vmem:[%s2721 + $0x7a] sm:$0xff]
    %v3437 = vld [vmem:[%s2721 + $0x82] sm:$0xff]
    %v3438 = vld [vmem:[%s2721 + $0x92] sm:$0xff]
    %v3439 = vld [vmem:[%s2721 + $0x9a] sm:$0xff]
    %v3440 = vld [vmem:[%s2721 + $0xaa] sm:$0xff]
    %v3441 = vld [vmem:[%s2721 + $0xb2] sm:$0xff]
    %v3442 = vld [vmem:[%s2721 + $0xc2] sm:$0xff]
    %v3443 = vld [vmem:[%s2721 + $0xca] sm:$0xff]
    %v3444 = vld [vmem:[%s2721 + $0xda] sm:$0xff]
    %v3445 = vld [vmem:[%s2721 + $0xe2] sm:$0xff]
    %v3446 = vld [vmem:[%s2721 + $0xf2] sm:$0xff]
    %v3447 = vld [vmem:[%s2721 + $0xfa] sm:$0xff]
    %v3448 = vld [vmem:[%s2721 + $0x10a] sm:$0xff]
    %v3449 = vld [vmem:[%s2721 + $0x112] sm:$0xff]
    %v3450 = vld [vmem:[%s2721 + $0x122] sm:$0xff]
    %v3451 = vld [vmem:[%s2721 + $0x12a] sm:$0xff]
    %v3452 = vld [vmem:[%s2721 + $0x13a] sm:$0xff]
    %v3453 = vld [vmem:[%s2721 + $0x142] sm:$0xff]
    %v3454 = vld [vmem:[%s2721 + $0x152] sm:$0xff]
    %v3455 = vld [vmem:[%s2721 + $0x15a] sm:$0xff]
    %v3456 = vld [vmem:[%s2721 + $0x16a] sm:$0xff]
    %v3457 = vld [vmem:[%s2721 + $0x172] sm:$0xff]
    %v3458 = vld [vmem:[%s2721 + $0x1b2] sm:$0xff]
    %v3459 = vld [vmem:[%s2721 + $0x1ba] sm:$0xff]
    %v3460 = vld [vmem:[%s2721 + $0x1ca] sm:$0xff]
    %v3461 = vld [vmem:[%s2721 + $0x1d2] sm:$0xff]
    %v3462 = vld [vmem:[%s2721 + $0x1e2] sm:$0xff]
    %v3463 = vld [vmem:[%s2721 + $0x1ea] sm:$0xff]
    %v3464 = vld [vmem:[%s2721 + $0x1fa] sm:$0xff]
    %v3465 = vld [vmem:[%s2721 + $0x202] sm:$0xff]
    %v3466 = vld [vmem:[%s2721 + $0x212] sm:$0xff]
    %v3467 = vld [vmem:[%s2721 + $0x21a] sm:$0xff]
    %v3468 = vld [vmem:[%s2721 + $0x22a] sm:$0xff]
    %v3469 = vld [vmem:[%s2721 + $0x232] sm:$0xff]
    %v3470 = vld [vmem:[%s2721 + $0x242] sm:$0xff]
    %v3471 = vld [vmem:[%s2721 + $0x24a] sm:$0xff]
    %v3472 = vld [vmem:[%s2721 + $0x25a] sm:$0xff]
    %v3473 = vld [vmem:[%s2721 + $0x262] sm:$0xff]
    %v3474 = vld [vmem:[%s2721 + $0x272] sm:$0xff]
    %v3475 = vld [vmem:[%s2721 + $0x27a] sm:$0xff]
    %v3476 = vld [vmem:[%s2721 + $0x28a] sm:$0xff]
    %v3477 = vld [vmem:[%s2721 + $0x292] sm:$0xff]
    %v3478 = vld [vmem:[%s2721 + $0x2a2] sm:$0xff]
    %v3479 = vld [vmem:[%s2721 + $0x2aa] sm:$0xff]
    %v3480 = vld [vmem:[%s2721 + $0x2ba] sm:$0xff]
    %v3481 = vld [vmem:[%s2721 + $0x2c2] sm:$0xff]
    %v3482 = vld [vmem:[%s2721 + $0x2d2] sm:$0xff]
    %v3483 = vld [vmem:[%s2721 + $0x2da] sm:$0xff]
    %v3484 = vld [vmem:[%s2721 + $0x2ea] sm:$0xff]
    %v3485 = vld [vmem:[%s2721 + $0x2f2] sm:$0xff]
    %v3486 = vld [vmem:[%s2721 + $0x302] sm:$0xff]
    %v3487 = vld [vmem:[%s2721 + $0x30a] sm:$0xff]
    %v3488 = vld [vmem:[%s2721 + $0x31a] sm:$0xff]
    %v3489 = vld [vmem:[%s2721 + $0x322] sm:$0xff]
    %v3490 = vadd.f32 %v3362, %v3426
    %v3491 = vadd.f32 %v3363, %v3427
    %v3492 = vadd.f32 %v3364, %v3428
    %v3493 = vadd.f32 %v3365, %v3429
    %v3494 = vadd.f32 %v3366, %v3430
    %v3495 = vadd.f32 %v3367, %v3431
    %v3496 = vadd.f32 %v3368, %v3432
    %v3497 = vadd.f32 %v3369, %v3433
    %v3498 = vadd.f32 %v3370, %v3434
    %v3499 = vadd.f32 %v3371, %v3435
    %v3500 = vadd.f32 %v3372, %v3436
    %v3501 = vadd.f32 %v3373, %v3437
    %v3502 = vadd.f32 %v3374, %v3438
    %v3503 = vadd.f32 %v3375, %v3439
    %v3504 = vadd.f32 %v3376, %v3440
    %v3505 = vadd.f32 %v3377, %v3441
    %v3506 = vadd.f32 %v3378, %v3442
    %v3507 = vadd.f32 %v3379, %v3443
    %v3508 = vadd.f32 %v3380, %v3444
    %v3509 = vadd.f32 %v3381, %v3445
    %v3510 = vadd.f32 %v3382, %v3446
    %v3511 = vadd.f32 %v3383, %v3447
    %v3512 = vadd.f32 %v3384, %v3448
    %v3513 = vadd.f32 %v3385, %v3449
    %v3514 = vadd.f32 %v3386, %v3450
    %v3515 = vadd.f32 %v3387, %v3451
    %v3516 = vadd.f32 %v3388, %v3452
    %v3517 = vadd.f32 %v3389, %v3453
    %v3518 = vadd.f32 %v3390, %v3454
    %v3519 = vadd.f32 %v3391, %v3455
    %v3520 = vadd.f32 %v3392, %v3456
    %v3521 = vadd.f32 %v3393, %v3457
    %v3522 = vadd.f32 %v3394, %v3458
    %v3523 = vadd.f32 %v3395, %v3459
    %v3524 = vadd.f32 %v3396, %v3460
    %v3525 = vadd.f32 %v3397, %v3461
    %v3526 = vadd.f32 %v3398, %v3462
    %v3527 = vadd.f32 %v3399, %v3463
    %v3528 = vadd.f32 %v3400, %v3464
    %v3529 = vadd.f32 %v3401, %v3465
    %v3530 = vadd.f32 %v3402, %v3466
    %v3531 = vadd.f32 %v3403, %v3467
    %v3532 = vadd.f32 %v3404, %v3468
    %v3533 = vadd.f32 %v3405, %v3469
    %v3534 = vadd.f32 %v3406, %v3470
    %v3535 = vadd.f32 %v3407, %v3471
    %v3536 = vadd.f32 %v3408, %v3472
    %v3537 = vadd.f32 %v3409, %v3473
    %v3538 = vadd.f32 %v3410, %v3474
    %v3539 = vadd.f32 %v3411, %v3475
    %v3540 = vadd.f32 %v3412, %v3476
    %v3541 = vadd.f32 %v3413, %v3477
    %v3542 = vadd.f32 %v3414, %v3478
    %v3543 = vadd.f32 %v3415, %v3479
    %v3544 = vadd.f32 %v3416, %v3480
    %v3545 = vadd.f32 %v3417, %v3481
    %v3546 = vadd.f32 %v3418, %v3482
    %v3547 = vadd.f32 %v3419, %v3483
    %v3548 = vadd.f32 %v3420, %v3484
    %v3549 = vadd.f32 %v3421, %v3485
    %v3550 = vadd.f32 %v3422, %v3486
    %v3551 = vadd.f32 %v3423, %v3487
    %v3552 = vadd.f32 %v3424, %v3488
    %v3553 = vadd.f32 %v3425, %v3489
    %s3554 = scalar_lea.vmem [#allocation2], 48
    %v3555 = vld [vmem:[%s3554] sm:$0xff]
    %v3556 = vld [vmem:[%s3554 + $0x8] sm:$0xff]
    %v3557 = vld [vmem:[%s3554 + $0x18] sm:$0xff]
    %v3558 = vld [vmem:[%s3554 + $0x20] sm:$0xff]
    %v3559 = vld [vmem:[%s3554 + $0x30] sm:$0xff]
    %v3560 = vld [vmem:[%s3554 + $0x38] sm:$0xff]
    %v3561 = vld [vmem:[%s3554 + $0x48] sm:$0xff]
    %v3562 = vld [vmem:[%s3554 + $0x50] sm:$0xff]
    %v3563 = vld [vmem:[%s3554 + $0x60] sm:$0xff]
    %v3564 = vld [vmem:[%s3554 + $0x68] sm:$0xff]
    %v3565 = vld [vmem:[%s3554 + $0x78] sm:$0xff]
    %v3566 = vld [vmem:[%s3554 + $0x80] sm:$0xff]
    %v3567 = vld [vmem:[%s3554 + $0x90] sm:$0xff]
    %v3568 = vld [vmem:[%s3554 + $0x98] sm:$0xff]
    %v3569 = vld [vmem:[%s3554 + $0xa8] sm:$0xff]
    %v3570 = vld [vmem:[%s3554 + $0xb0] sm:$0xff]
    %v3571 = vld [vmem:[%s3554 + $0xc0] sm:$0xff]
    %v3572 = vld [vmem:[%s3554 + $0xc8] sm:$0xff]
    %v3573 = vld [vmem:[%s3554 + $0xd8] sm:$0xff]
    %v3574 = vld [vmem:[%s3554 + $0xe0] sm:$0xff]
    %v3575 = vld [vmem:[%s3554 + $0xf0] sm:$0xff]
    %v3576 = vld [vmem:[%s3554 + $0xf8] sm:$0xff]
    %v3577 = vld [vmem:[%s3554 + $0x108] sm:$0xff]
    %v3578 = vld [vmem:[%s3554 + $0x110] sm:$0xff]
    %v3579 = vld [vmem:[%s3554 + $0x120] sm:$0xff]
    %v3580 = vld [vmem:[%s3554 + $0x128] sm:$0xff]
    %v3581 = vld [vmem:[%s3554 + $0x138] sm:$0xff]
    %v3582 = vld [vmem:[%s3554 + $0x140] sm:$0xff]
    %v3583 = vld [vmem:[%s3554 + $0x150] sm:$0xff]
    %v3584 = vld [vmem:[%s3554 + $0x158] sm:$0xff]
    %v3585 = vld [vmem:[%s3554 + $0x168] sm:$0xff]
    %v3586 = vld [vmem:[%s3554 + $0x170] sm:$0xff]
    %v3587 = vld [vmem:[%s3554 + $0x1b0] sm:$0xff]
    %v3588 = vld [vmem:[%s3554 + $0x1b8] sm:$0xff]
    %v3589 = vld [vmem:[%s3554 + $0x1c8] sm:$0xff]
    %v3590 = vld [vmem:[%s3554 + $0x1d0] sm:$0xff]
    %v3591 = vld [vmem:[%s3554 + $0x1e0] sm:$0xff]
    %v3592 = vld [vmem:[%s3554 + $0x1e8] sm:$0xff]
    %v3593 = vld [vmem:[%s3554 + $0x1f8] sm:$0xff]
    %v3594 = vld [vmem:[%s3554 + $0x200] sm:$0xff]
    %v3595 = vld [vmem:[%s3554 + $0x210] sm:$0xff]
    %v3596 = vld [vmem:[%s3554 + $0x218] sm:$0xff]
    %v3597 = vld [vmem:[%s3554 + $0x228] sm:$0xff]
    %v3598 = vld [vmem:[%s3554 + $0x230] sm:$0xff]
    %v3599 = vld [vmem:[%s3554 + $0x240] sm:$0xff]
    %v3600 = vld [vmem:[%s3554 + $0x248] sm:$0xff]
    %v3601 = vld [vmem:[%s3554 + $0x258] sm:$0xff]
    %v3602 = vld [vmem:[%s3554 + $0x260] sm:$0xff]
    %v3603 = vld [vmem:[%s3554 + $0x270] sm:$0xff]
    %v3604 = vld [vmem:[%s3554 + $0x278] sm:$0xff]
    %v3605 = vld [vmem:[%s3554 + $0x288] sm:$0xff]
    %v3606 = vld [vmem:[%s3554 + $0x290] sm:$0xff]
    %v3607 = vld [vmem:[%s3554 + $0x2a0] sm:$0xff]
    %v3608 = vld [vmem:[%s3554 + $0x2a8] sm:$0xff]
    %v3609 = vld [vmem:[%s3554 + $0x2b8] sm:$0xff]
    %v3610 = vld [vmem:[%s3554 + $0x2c0] sm:$0xff]
    %v3611 = vld [vmem:[%s3554 + $0x2d0] sm:$0xff]
    %v3612 = vld [vmem:[%s3554 + $0x2d8] sm:$0xff]
    %v3613 = vld [vmem:[%s3554 + $0x2e8] sm:$0xff]
    %v3614 = vld [vmem:[%s3554 + $0x2f0] sm:$0xff]
    %v3615 = vld [vmem:[%s3554 + $0x300] sm:$0xff]
    %v3616 = vld [vmem:[%s3554 + $0x308] sm:$0xff]
    %v3617 = vld [vmem:[%s3554 + $0x318] sm:$0xff]
    %v3618 = vld [vmem:[%s3554 + $0x320] sm:$0xff]
    %v3619 = vadd.f32 %v3490, %v3555
    %v3620 = vadd.f32 %v3491, %v3556
    %v3621 = vadd.f32 %v3492, %v3557
    %v3622 = vadd.f32 %v3493, %v3558
    %v3623 = vadd.f32 %v3494, %v3559
    %v3624 = vadd.f32 %v3495, %v3560
    %v3625 = vadd.f32 %v3496, %v3561
    %v3626 = vadd.f32 %v3497, %v3562
    %v3627 = vadd.f32 %v3498, %v3563
    %v3628 = vadd.f32 %v3499, %v3564
    %v3629 = vadd.f32 %v3500, %v3565
    %v3630 = vadd.f32 %v3501, %v3566
    %v3631 = vadd.f32 %v3502, %v3567
    %v3632 = vadd.f32 %v3503, %v3568
    %v3633 = vadd.f32 %v3504, %v3569
    %v3634 = vadd.f32 %v3505, %v3570
    %v3635 = vadd.f32 %v3506, %v3571
    %v3636 = vadd.f32 %v3507, %v3572
    %v3637 = vadd.f32 %v3508, %v3573
    %v3638 = vadd.f32 %v3509, %v3574
    %v3639 = vadd.f32 %v3510, %v3575
    %v3640 = vadd.f32 %v3511, %v3576
    %v3641 = vadd.f32 %v3512, %v3577
    %v3642 = vadd.f32 %v3513, %v3578
    %v3643 = vadd.f32 %v3514, %v3579
    %v3644 = vadd.f32 %v3515, %v3580
    %v3645 = vadd.f32 %v3516, %v3581
    %v3646 = vadd.f32 %v3517, %v3582
    %v3647 = vadd.f32 %v3518, %v3583
    %v3648 = vadd.f32 %v3519, %v3584
    %v3649 = vadd.f32 %v3520, %v3585
    %v3650 = vadd.f32 %v3521, %v3586
    %v3651 = vadd.f32 %v3522, %v3587
    %v3652 = vadd.f32 %v3523, %v3588
    %v3653 = vadd.f32 %v3524, %v3589
    %v3654 = vadd.f32 %v3525, %v3590
    %v3655 = vadd.f32 %v3526, %v3591
    %v3656 = vadd.f32 %v3527, %v3592
    %v3657 = vadd.f32 %v3528, %v3593
    %v3658 = vadd.f32 %v3529, %v3594
    %v3659 = vadd.f32 %v3530, %v3595
    %v3660 = vadd.f32 %v3531, %v3596
    %v3661 = vadd.f32 %v3532, %v3597
    %v3662 = vadd.f32 %v3533, %v3598
    %v3663 = vadd.f32 %v3534, %v3599
    %v3664 = vadd.f32 %v3535, %v3600
    %v3665 = vadd.f32 %v3536, %v3601
    %v3666 = vadd.f32 %v3537, %v3602
    %v3667 = vadd.f32 %v3538, %v3603
    %v3668 = vadd.f32 %v3539, %v3604
    %v3669 = vadd.f32 %v3540, %v3605
    %v3670 = vadd.f32 %v3541, %v3606
    %v3671 = vadd.f32 %v3542, %v3607
    %v3672 = vadd.f32 %v3543, %v3608
    %v3673 = vadd.f32 %v3544, %v3609
    %v3674 = vadd.f32 %v3545, %v3610
    %v3675 = vadd.f32 %v3546, %v3611
    %v3676 = vadd.f32 %v3547, %v3612
    %v3677 = vadd.f32 %v3548, %v3613
    %v3678 = vadd.f32 %v3549, %v3614
    %v3679 = vadd.f32 %v3550, %v3615
    %v3680 = vadd.f32 %v3551, %v3616
    %v3681 = vadd.f32 %v3552, %v3617
    %v3682 = vadd.f32 %v3553, %v3618
    %v3683 = vld [vmem:[%s3554 + $0x1] sm:$0xff]
    %v3684 = vld [vmem:[%s3554 + $0x9] sm:$0xff]
    %v3685 = vld [vmem:[%s3554 + $0x19] sm:$0xff]
    %v3686 = vld [vmem:[%s3554 + $0x21] sm:$0xff]
    %v3687 = vld [vmem:[%s3554 + $0x31] sm:$0xff]
    %v3688 = vld [vmem:[%s3554 + $0x39] sm:$0xff]
    %v3689 = vld [vmem:[%s3554 + $0x49] sm:$0xff]
    %v3690 = vld [vmem:[%s3554 + $0x51] sm:$0xff]
    %v3691 = vld [vmem:[%s3554 + $0x61] sm:$0xff]
    %v3692 = vld [vmem:[%s3554 + $0x69] sm:$0xff]
    %v3693 = vld [vmem:[%s3554 + $0x79] sm:$0xff]
    %v3694 = vld [vmem:[%s3554 + $0x81] sm:$0xff]
    %v3695 = vld [vmem:[%s3554 + $0x91] sm:$0xff]
    %v3696 = vld [vmem:[%s3554 + $0x99] sm:$0xff]
    %v3697 = vld [vmem:[%s3554 + $0xa9] sm:$0xff]
    %v3698 = vld [vmem:[%s3554 + $0xb1] sm:$0xff]
    %v3699 = vld [vmem:[%s3554 + $0xc1] sm:$0xff]
    %v3700 = vld [vmem:[%s3554 + $0xc9] sm:$0xff]
    %v3701 = vld [vmem:[%s3554 + $0xd9] sm:$0xff]
    %v3702 = vld [vmem:[%s3554 + $0xe1] sm:$0xff]
    %v3703 = vld [vmem:[%s3554 + $0xf1] sm:$0xff]
    %v3704 = vld [vmem:[%s3554 + $0xf9] sm:$0xff]
    %v3705 = vld [vmem:[%s3554 + $0x109] sm:$0xff]
    %v3706 = vld [vmem:[%s3554 + $0x111] sm:$0xff]
    %v3707 = vld [vmem:[%s3554 + $0x121] sm:$0xff]
    %v3708 = vld [vmem:[%s3554 + $0x129] sm:$0xff]
    %v3709 = vld [vmem:[%s3554 + $0x139] sm:$0xff]
    %v3710 = vld [vmem:[%s3554 + $0x141] sm:$0xff]
    %v3711 = vld [vmem:[%s3554 + $0x151] sm:$0xff]
    %v3712 = vld [vmem:[%s3554 + $0x159] sm:$0xff]
    %v3713 = vld [vmem:[%s3554 + $0x169] sm:$0xff]
    %v3714 = vld [vmem:[%s3554 + $0x171] sm:$0xff]
    %v3715 = vld [vmem:[%s3554 + $0x1b1] sm:$0xff]
    %v3716 = vld [vmem:[%s3554 + $0x1b9] sm:$0xff]
    %v3717 = vld [vmem:[%s3554 + $0x1c9] sm:$0xff]
    %v3718 = vld [vmem:[%s3554 + $0x1d1] sm:$0xff]
    %v3719 = vld [vmem:[%s3554 + $0x1e1] sm:$0xff]
    %v3720 = vld [vmem:[%s3554 + $0x1e9] sm:$0xff]
    %v3721 = vld [vmem:[%s3554 + $0x1f9] sm:$0xff]
    %v3722 = vld [vmem:[%s3554 + $0x201] sm:$0xff]
    %v3723 = vld [vmem:[%s3554 + $0x211] sm:$0xff]
    %v3724 = vld [vmem:[%s3554 + $0x219] sm:$0xff]
    %v3725 = vld [vmem:[%s3554 + $0x229] sm:$0xff]
    %v3726 = vld [vmem:[%s3554 + $0x231] sm:$0xff]
    %v3727 = vld [vmem:[%s3554 + $0x241] sm:$0xff]
    %v3728 = vld [vmem:[%s3554 + $0x249] sm:$0xff]
    %v3729 = vld [vmem:[%s3554 + $0x259] sm:$0xff]
    %v3730 = vld [vmem:[%s3554 + $0x261] sm:$0xff]
    %v3731 = vld [vmem:[%s3554 + $0x271] sm:$0xff]
    %v3732 = vld [vmem:[%s3554 + $0x279] sm:$0xff]
    %v3733 = vld [vmem:[%s3554 + $0x289] sm:$0xff]
    %v3734 = vld [vmem:[%s3554 + $0x291] sm:$0xff]
    %v3735 = vld [vmem:[%s3554 + $0x2a1] sm:$0xff]
    %v3736 = vld [vmem:[%s3554 + $0x2a9] sm:$0xff]
    %v3737 = vld [vmem:[%s3554 + $0x2b9] sm:$0xff]
    %v3738 = vld [vmem:[%s3554 + $0x2c1] sm:$0xff]
    %v3739 = vld [vmem:[%s3554 + $0x2d1] sm:$0xff]
    %v3740 = vld [vmem:[%s3554 + $0x2d9] sm:$0xff]
    %v3741 = vld [vmem:[%s3554 + $0x2e9] sm:$0xff]
    %v3742 = vld [vmem:[%s3554 + $0x2f1] sm:$0xff]
    %v3743 = vld [vmem:[%s3554 + $0x301] sm:$0xff]
    %v3744 = vld [vmem:[%s3554 + $0x309] sm:$0xff]
    %v3745 = vld [vmem:[%s3554 + $0x319] sm:$0xff]
    %v3746 = vld [vmem:[%s3554 + $0x321] sm:$0xff]
    %v3747 = vadd.f32 %v3619, %v3683
    %v3748 = vadd.f32 %v3620, %v3684
    %v3749 = vadd.f32 %v3621, %v3685
    %v3750 = vadd.f32 %v3622, %v3686
    %v3751 = vadd.f32 %v3623, %v3687
    %v3752 = vadd.f32 %v3624, %v3688
    %v3753 = vadd.f32 %v3625, %v3689
    %v3754 = vadd.f32 %v3626, %v3690
    %v3755 = vadd.f32 %v3627, %v3691
    %v3756 = vadd.f32 %v3628, %v3692
    %v3757 = vadd.f32 %v3629, %v3693
    %v3758 = vadd.f32 %v3630, %v3694
    %v3759 = vadd.f32 %v3631, %v3695
    %v3760 = vadd.f32 %v3632, %v3696
    %v3761 = vadd.f32 %v3633, %v3697
    %v3762 = vadd.f32 %v3634, %v3698
    %v3763 = vadd.f32 %v3635, %v3699
    %v3764 = vadd.f32 %v3636, %v3700
    %v3765 = vadd.f32 %v3637, %v3701
    %v3766 = vadd.f32 %v3638, %v3702
    %v3767 = vadd.f32 %v3639, %v3703
    %v3768 = vadd.f32 %v3640, %v3704
    %v3769 = vadd.f32 %v3641, %v3705
    %v3770 = vadd.f32 %v3642, %v3706
    %v3771 = vadd.f32 %v3643, %v3707
    %v3772 = vadd.f32 %v3644, %v3708
    %v3773 = vadd.f32 %v3645, %v3709
    %v3774 = vadd.f32 %v3646, %v3710
    %v3775 = vadd.f32 %v3647, %v3711
    %v3776 = vadd.f32 %v3648, %v3712
    %v3777 = vadd.f32 %v3649, %v3713
    %v3778 = vadd.f32 %v3650, %v3714
    %v3779 = vadd.f32 %v3651, %v3715
    %v3780 = vadd.f32 %v3652, %v3716
    %v3781 = vadd.f32 %v3653, %v3717
    %v3782 = vadd.f32 %v3654, %v3718
    %v3783 = vadd.f32 %v3655, %v3719
    %v3784 = vadd.f32 %v3656, %v3720
    %v3785 = vadd.f32 %v3657, %v3721
    %v3786 = vadd.f32 %v3658, %v3722
    %v3787 = vadd.f32 %v3659, %v3723
    %v3788 = vadd.f32 %v3660, %v3724
    %v3789 = vadd.f32 %v3661, %v3725
    %v3790 = vadd.f32 %v3662, %v3726
    %v3791 = vadd.f32 %v3663, %v3727
    %v3792 = vadd.f32 %v3664, %v3728
    %v3793 = vadd.f32 %v3665, %v3729
    %v3794 = vadd.f32 %v3666, %v3730
    %v3795 = vadd.f32 %v3667, %v3731
    %v3796 = vadd.f32 %v3668, %v3732
    %v3797 = vadd.f32 %v3669, %v3733
    %v3798 = vadd.f32 %v3670, %v3734
    %v3799 = vadd.f32 %v3671, %v3735
    %v3800 = vadd.f32 %v3672, %v3736
    %v3801 = vadd.f32 %v3673, %v3737
    %v3802 = vadd.f32 %v3674, %v3738
    %v3803 = vadd.f32 %v3675, %v3739
    %v3804 = vadd.f32 %v3676, %v3740
    %v3805 = vadd.f32 %v3677, %v3741
    %v3806 = vadd.f32 %v3678, %v3742
    %v3807 = vadd.f32 %v3679, %v3743
    %v3808 = vadd.f32 %v3680, %v3744
    %v3809 = vadd.f32 %v3681, %v3745
    %v3810 = vadd.f32 %v3682, %v3746
    %v3811 = vld [vmem:[%s3554 + $0x2] sm:$0xff]
    %v3812 = vld [vmem:[%s3554 + $0xa] sm:$0xff]
    %v3813 = vld [vmem:[%s3554 + $0x1a] sm:$0xff]
    %v3814 = vld [vmem:[%s3554 + $0x22] sm:$0xff]
    %v3815 = vld [vmem:[%s3554 + $0x32] sm:$0xff]
    %v3816 = vld [vmem:[%s3554 + $0x3a] sm:$0xff]
    %v3817 = vld [vmem:[%s3554 + $0x4a] sm:$0xff]
    %v3818 = vld [vmem:[%s3554 + $0x52] sm:$0xff]
    %v3819 = vld [vmem:[%s3554 + $0x62] sm:$0xff]
    %v3820 = vld [vmem:[%s3554 + $0x6a] sm:$0xff]
    %v3821 = vld [vmem:[%s3554 + $0x7a] sm:$0xff]
    %v3822 = vld [vmem:[%s3554 + $0x82] sm:$0xff]
    %v3823 = vld [vmem:[%s3554 + $0x92] sm:$0xff]
    %v3824 = vld [vmem:[%s3554 + $0x9a] sm:$0xff]
    %v3825 = vld [vmem:[%s3554 + $0xaa] sm:$0xff]
    %v3826 = vld [vmem:[%s3554 + $0xb2] sm:$0xff]
    %v3827 = vld [vmem:[%s3554 + $0xc2] sm:$0xff]
    %v3828 = vld [vmem:[%s3554 + $0xca] sm:$0xff]
    %v3829 = vld [vmem:[%s3554 + $0xda] sm:$0xff]
    %v3830 = vld [vmem:[%s3554 + $0xe2] sm:$0xff]
    %v3831 = vld [vmem:[%s3554 + $0xf2] sm:$0xff]
    %v3832 = vld [vmem:[%s3554 + $0xfa] sm:$0xff]
    %v3833 = vld [vmem:[%s3554 + $0x10a] sm:$0xff]
    %v3834 = vld [vmem:[%s3554 + $0x112] sm:$0xff]
    %v3835 = vld [vmem:[%s3554 + $0x122] sm:$0xff]
    %v3836 = vld [vmem:[%s3554 + $0x12a] sm:$0xff]
    %v3837 = vld [vmem:[%s3554 + $0x13a] sm:$0xff]
    %v3838 = vld [vmem:[%s3554 + $0x142] sm:$0xff]
    %v3839 = vld [vmem:[%s3554 + $0x152] sm:$0xff]
    %v3840 = vld [vmem:[%s3554 + $0x15a] sm:$0xff]
    %v3841 = vld [vmem:[%s3554 + $0x16a] sm:$0xff]
    %v3842 = vld [vmem:[%s3554 + $0x172] sm:$0xff]
    %v3843 = vld [vmem:[%s3554 + $0x1b2] sm:$0xff]
    %v3844 = vld [vmem:[%s3554 + $0x1ba] sm:$0xff]
    %v3845 = vld [vmem:[%s3554 + $0x1ca] sm:$0xff]
    %v3846 = vld [vmem:[%s3554 + $0x1d2] sm:$0xff]
    %v3847 = vld [vmem:[%s3554 + $0x1e2] sm:$0xff]
    %v3848 = vld [vmem:[%s3554 + $0x1ea] sm:$0xff]
    %v3849 = vld [vmem:[%s3554 + $0x1fa] sm:$0xff]
    %v3850 = vld [vmem:[%s3554 + $0x202] sm:$0xff]
    %v3851 = vld [vmem:[%s3554 + $0x212] sm:$0xff]
    %v3852 = vld [vmem:[%s3554 + $0x21a] sm:$0xff]
    %v3853 = vld [vmem:[%s3554 + $0x22a] sm:$0xff]
    %v3854 = vld [vmem:[%s3554 + $0x232] sm:$0xff]
    %v3855 = vld [vmem:[%s3554 + $0x242] sm:$0xff]
    %v3856 = vld [vmem:[%s3554 + $0x24a] sm:$0xff]
    %v3857 = vld [vmem:[%s3554 + $0x25a] sm:$0xff]
    %v3858 = vld [vmem:[%s3554 + $0x262] sm:$0xff]
    %v3859 = vld [vmem:[%s3554 + $0x272] sm:$0xff]
    %v3860 = vld [vmem:[%s3554 + $0x27a] sm:$0xff]
    %v3861 = vld [vmem:[%s3554 + $0x28a] sm:$0xff]
    %v3862 = vld [vmem:[%s3554 + $0x292] sm:$0xff]
    %v3863 = vld [vmem:[%s3554 + $0x2a2] sm:$0xff]
    %v3864 = vld [vmem:[%s3554 + $0x2aa] sm:$0xff]
    %v3865 = vld [vmem:[%s3554 + $0x2ba] sm:$0xff]
    %v3866 = vld [vmem:[%s3554 + $0x2c2] sm:$0xff]
    %v3867 = vld [vmem:[%s3554 + $0x2d2] sm:$0xff]
    %v3868 = vld [vmem:[%s3554 + $0x2da] sm:$0xff]
    %v3869 = vld [vmem:[%s3554 + $0x2ea] sm:$0xff]
    %v3870 = vld [vmem:[%s3554 + $0x2f2] sm:$0xff]
    %v3871 = vld [vmem:[%s3554 + $0x302] sm:$0xff]
    %v3872 = vld [vmem:[%s3554 + $0x30a] sm:$0xff]
    %v3873 = vld [vmem:[%s3554 + $0x31a] sm:$0xff]
    %v3874 = vld [vmem:[%s3554 + $0x322] sm:$0xff]
    %v3875 = vadd.f32 %v3747, %v3811
    %v3876 = vadd.f32 %v3748, %v3812
    %v3877 = vadd.f32 %v3749, %v3813
    %v3878 = vadd.f32 %v3750, %v3814
    %v3879 = vadd.f32 %v3751, %v3815
    %v3880 = vadd.f32 %v3752, %v3816
    %v3881 = vadd.f32 %v3753, %v3817
    %v3882 = vadd.f32 %v3754, %v3818
    %v3883 = vadd.f32 %v3755, %v3819
    %v3884 = vadd.f32 %v3756, %v3820
    %v3885 = vadd.f32 %v3757, %v3821
    %v3886 = vadd.f32 %v3758, %v3822
    %v3887 = vadd.f32 %v3759, %v3823
    %v3888 = vadd.f32 %v3760, %v3824
    %v3889 = vadd.f32 %v3761, %v3825
    %v3890 = vadd.f32 %v3762, %v3826
    %v3891 = vadd.f32 %v3763, %v3827
    %v3892 = vadd.f32 %v3764, %v3828
    %v3893 = vadd.f32 %v3765, %v3829
    %v3894 = vadd.f32 %v3766, %v3830
    %v3895 = vadd.f32 %v3767, %v3831
    %v3896 = vadd.f32 %v3768, %v3832
    %v3897 = vadd.f32 %v3769, %v3833
    %v3898 = vadd.f32 %v3770, %v3834
    %v3899 = vadd.f32 %v3771, %v3835
    %v3900 = vadd.f32 %v3772, %v3836
    %v3901 = vadd.f32 %v3773, %v3837
    %v3902 = vadd.f32 %v3774, %v3838
    %v3903 = vadd.f32 %v3775, %v3839
    %v3904 = vadd.f32 %v3776, %v3840
    %v3905 = vadd.f32 %v3777, %v3841
    %v3906 = vadd.f32 %v3778, %v3842
    %v3907 = vadd.f32 %v3779, %v3843
    %v3908 = vadd.f32 %v3780, %v3844
    %v3909 = vadd.f32 %v3781, %v3845
    %v3910 = vadd.f32 %v3782, %v3846
    %v3911 = vadd.f32 %v3783, %v3847
    %v3912 = vadd.f32 %v3784, %v3848
    %v3913 = vadd.f32 %v3785, %v3849
    %v3914 = vadd.f32 %v3786, %v3850
    %v3915 = vadd.f32 %v3787, %v3851
    %v3916 = vadd.f32 %v3788, %v3852
    %v3917 = vadd.f32 %v3789, %v3853
    %v3918 = vadd.f32 %v3790, %v3854
    %v3919 = vadd.f32 %v3791, %v3855
    %v3920 = vadd.f32 %v3792, %v3856
    %v3921 = vadd.f32 %v3793, %v3857
    %v3922 = vadd.f32 %v3794, %v3858
    %v3923 = vadd.f32 %v3795, %v3859
    %v3924 = vadd.f32 %v3796, %v3860
    %v3925 = vadd.f32 %v3797, %v3861
    %v3926 = vadd.f32 %v3798, %v3862
    %v3927 = vadd.f32 %v3799, %v3863
    %v3928 = vadd.f32 %v3800, %v3864
    %v3929 = vadd.f32 %v3801, %v3865
    %v3930 = vadd.f32 %v3802, %v3866
    %v3931 = vadd.f32 %v3803, %v3867
    %v3932 = vadd.f32 %v3804, %v3868
    %v3933 = vadd.f32 %v3805, %v3869
    %v3934 = vadd.f32 %v3806, %v3870
    %v3935 = vadd.f32 %v3807, %v3871
    %v3936 = vadd.f32 %v3808, %v3872
    %v3937 = vadd.f32 %v3809, %v3873
    %v3938 = vadd.f32 %v3810, %v3874
    %v3939 = vmul.f32 %v3875, 0.11111111
    %v3940 = vmul.f32 %v3876, 0.11111111
    %v3941 = vmul.f32 %v3877, 0.11111111
    %v3942 = vmul.f32 %v3878, 0.11111111
    %v3943 = vmul.f32 %v3879, 0.11111111
    %v3944 = vmul.f32 %v3880, 0.11111111
    %v3945 = vmul.f32 %v3881, 0.11111111
    %v3946 = vmul.f32 %v3882, 0.11111111
    %v3947 = vmul.f32 %v3883, 0.11111111
    %v3948 = vmul.f32 %v3884, 0.11111111
    %v3949 = vmul.f32 %v3885, 0.11111111
    %v3950 = vmul.f32 %v3886, 0.11111111
    %v3951 = vmul.f32 %v3887, 0.11111111
    %v3952 = vmul.f32 %v3888, 0.11111111
    %v3953 = vmul.f32 %v3889, 0.11111111
    %v3954 = vmul.f32 %v3890, 0.11111111
    %v3955 = vmul.f32 %v3891, 0.11111111
    %v3956 = vmul.f32 %v3892, 0.11111111
    %v3957 = vmul.f32 %v3893, 0.11111111
    %v3958 = vmul.f32 %v3894, 0.11111111
    %v3959 = vmul.f32 %v3895, 0.11111111
    %v3960 = vmul.f32 %v3896, 0.11111111
    %v3961 = vmul.f32 %v3897, 0.11111111
    %v3962 = vmul.f32 %v3898, 0.11111111
    %v3963 = vmul.f32 %v3899, 0.11111111
    %v3964 = vmul.f32 %v3900, 0.11111111
    %v3965 = vmul.f32 %v3901, 0.11111111
    %v3966 = vmul.f32 %v3902, 0.11111111
    %v3967 = vmul.f32 %v3903, 0.11111111
    %v3968 = vmul.f32 %v3904, 0.11111111
    %v3969 = vmul.f32 %v3905, 0.11111111
    %v3970 = vmul.f32 %v3906, 0.11111111
    %v3971 = vmul.f32 %v3907, 0.11111111
    %v3972 = vmul.f32 %v3908, 0.11111111
    %v3973 = vmul.f32 %v3909, 0.11111111
    %v3974 = vmul.f32 %v3910, 0.11111111
    %v3975 = vmul.f32 %v3911, 0.11111111
    %v3976 = vmul.f32 %v3912, 0.11111111
    %v3977 = vmul.f32 %v3913, 0.11111111
    %v3978 = vmul.f32 %v3914, 0.11111111
    %v3979 = vmul.f32 %v3915, 0.11111111
    %v3980 = vmul.f32 %v3916, 0.11111111
    %v3981 = vmul.f32 %v3917, 0.11111111
    %v3982 = vmul.f32 %v3918, 0.11111111
    %v3983 = vmul.f32 %v3919, 0.11111111
    %v3984 = vmul.f32 %v3920, 0.11111111
    %v3985 = vmul.f32 %v3921, 0.11111111
    %v3986 = vmul.f32 %v3922, 0.11111111
    %v3987 = vmul.f32 %v3923, 0.11111111
    %v3988 = vmul.f32 %v3924, 0.11111111
    %v3989 = vmul.f32 %v3925, 0.11111111
    %v3990 = vmul.f32 %v3926, 0.11111111
    %v3991 = vmul.f32 %v3927, 0.11111111
    %v3992 = vmul.f32 %v3928, 0.11111111
    %v3993 = vmul.f32 %v3929, 0.11111111
    %v3994 = vmul.f32 %v3930, 0.11111111
    %v3995 = vmul.f32 %v3931, 0.11111111
    %v3996 = vmul.f32 %v3932, 0.11111111
    %v3997 = vmul.f32 %v3933, 0.11111111
    %v3998 = vmul.f32 %v3934, 0.11111111
    %v3999 = vmul.f32 %v3935, 0.11111111
    %v4000 = vmul.f32 %v3936, 0.11111111
    %v4001 = vmul.f32 %v3937, 0.11111111
    %v4002 = vmul.f32 %v3938, 0.11111111
    %v4003 = vpack.c.bf16 %v3940, %v3939
    %v4004 = vpack.c.bf16 %v3942, %v3941
    %v4005 = vpack.c.bf16 %v3944, %v3943
    %v4006 = vpack.c.bf16 %v3946, %v3945
    %v4007 = vpack.c.bf16 %v3948, %v3947
    %v4008 = vpack.c.bf16 %v3950, %v3949
    %v4009 = vpack.c.bf16 %v3952, %v3951
    %v4010 = vpack.c.bf16 %v3954, %v3953
    %v4011 = vpack.c.bf16 %v3956, %v3955
    %v4012 = vpack.c.bf16 %v3958, %v3957
    %v4013 = vpack.c.bf16 %v3960, %v3959
    %v4014 = vpack.c.bf16 %v3962, %v3961
    %v4015 = vpack.c.bf16 %v3964, %v3963
    %v4016 = vpack.c.bf16 %v3966, %v3965
    %v4017 = vpack.c.bf16 %v3968, %v3967
    %v4018 = vpack.c.bf16 %v3970, %v3969
    %v4019 = vpack.c.bf16 %v3972, %v3971
    %v4020 = vpack.c.bf16 %v3974, %v3973
    %v4021 = vpack.c.bf16 %v3976, %v3975
    %v4022 = vpack.c.bf16 %v3978, %v3977
    %v4023 = vpack.c.bf16 %v3980, %v3979
    %v4024 = vpack.c.bf16 %v3982, %v3981
    %v4025 = vpack.c.bf16 %v3984, %v3983
    %v4026 = vpack.c.bf16 %v3986, %v3985
    %v4027 = vpack.c.bf16 %v3988, %v3987
    %v4028 = vpack.c.bf16 %v3990, %v3989
    %v4029 = vpack.c.bf16 %v3992, %v3991
    %v4030 = vpack.c.bf16 %v3994, %v3993
    %v4031 = vpack.c.bf16 %v3996, %v3995
    %v4032 = vpack.c.bf16 %v3998, %v3997
    %v4033 = vpack.c.bf16 %v4000, %v3999
    %v4034 = vpack.c.bf16 %v4002, %v4001
    %v4035 = vld [vmem:[%s4] sm:$0x3]
    %v4037 = vsel %vm139, %v4003, 0
    %v4040 = vsel %vm139, %v4004, 0
    %v4043 = vsel %vm139, %v4005, 0
    %v4046 = vsel %vm139, %v4006, 0
    %v4049 = vsel %vm139, %v4007, 0
    %v4052 = vsel %vm139, %v4008, 0
    %v4055 = vsel %vm139, %v4009, 0
    %v4058 = vsel %vm139, %v4010, 0
    %v4061 = vsel %vm139, %v4011, 0
    %v4064 = vsel %vm139, %v4012, 0
    %v4067 = vsel %vm139, %v4013, 0
    %v4070 = vsel %vm139, %v4014, 0
    %v4073 = vsel %vm139, %v4015, 0
    %v4076 = vsel %vm139, %v4016, 0
    %v4079 = vsel %vm139, %v4017, 0
    %v4082 = vsel %vm139, %v4018, 0
    %v4085 = vsel %vm139, %v4019, 0
    %v4088 = vsel %vm139, %v4020, 0
    %v4091 = vsel %vm139, %v4021, 0
    %v4094 = vsel %vm139, %v4022, 0
    %v4097 = vsel %vm139, %v4023, 0
    %v4100 = vsel %vm139, %v4024, 0
    %v4103 = vsel %vm139, %v4025, 0
    %v4106 = vsel %vm139, %v4026, 0
    %v4109 = vsel %vm139, %v4027, 0
    %v4112 = vsel %vm139, %v4028, 0
    %v4115 = vsel %vm139, %v4029, 0
    %v4118 = vsel %vm139, %v4030, 0
    %v4121 = vsel %vm139, %v4031, 0
    %v4124 = vsel %vm139, %v4032, 0
    %v4127 = vsel %vm139, %v4033, 0
    %v4130 = vsel %vm139, %v4034, 0
    %v4133 = vsel %vm236, %v4035, 0
    %4135 = vmatprep.subr.bf16.mxu0 0
    %4136 = vmatpush1.bf16.msra.mxu0 %v4133
    %4137 = vmatprep.subr.bf16.mxu0 0
    %4138 = vmatpush1.bf16.msra.mxu0 0
    %4139 = vmatprep.subr.bf16.mxu0 0
    %4140 = vmatpush1.bf16.msra.mxu0 0
    %4141 = vmatprep.subr.bf16.mxu0 0
    %4142 = vmatpush1.bf16.msra.mxu0 0
    %4143 = vmatprep.subr.bf16.mxu0 0
    %4144 = vmatpush1.bf16.msra.mxu0 0
    %4145 = vmatprep.subr.bf16.mxu0 0
    %4146 = vmatpush1.bf16.msra.mxu0 0
    %4147 = vmatprep.subr.bf16.mxu0 0
    %4148 = vmatpush1.bf16.msra.mxu0 0
    %4149 = vmatprep.subr.bf16.mxu0 0
    %4150 = vmatpush1.bf16.msra.mxu0 0
    %4151 = vmatprep.subr.bf16.mxu0 0
    %4152 = vmatpush1.bf16.msra.mxu0 0
    %4153 = vmatprep.subr.bf16.mxu0 0
    %4154 = vmatpush1.bf16.msra.mxu0 0
    %4155 = vmatprep.subr.bf16.mxu0 0
    %4156 = vmatpush1.bf16.msra.mxu0 0
    %4157 = vmatprep.subr.bf16.mxu0 0
    %4158 = vmatpush1.bf16.msra.mxu0 0
    %4159 = vmatprep.subr.bf16.mxu0 0
    %4160 = vmatpush1.bf16.msra.mxu0 0
    %4161 = vmatprep.subr.bf16.mxu0 0
    %4162 = vmatpush1.bf16.msra.mxu0 0
    %4163 = vmatprep.subr.bf16.mxu0 0
    %4164 = vmatpush1.bf16.msra.mxu0 0
    %4165 = vmatprep.subr.bf16.mxu0 0
    %4166 = vmatpush1.bf16.msra.mxu0 0
    %4167 = vmatprep.mubr.bf16.mxu0 0
    %4168 = vmatmul.mubr.bf16.gmra.mrb[0].mxu0 %v4037
    %v4169 = vpop.f32.mrb[0].mxu0
    %v4170 = vadd.f32 0.0, %v4169
    %v4171 = vpop.f32.mrb[0].mxu0
    %v4172 = vpop.f32.mrb[0].mxu0
    %v4173 = vadd.f32 0.0, %v4172
    %v4174 = vpop.f32.mrb[0].mxu0
    %4175 = vmatprep.mubr.bf16.mxu0 0
    %4176 = vmatmul.mubr.bf16.gmra.mrb[0].mxu0 %v4040
    %v4177 = vpop.f32.mrb[0].mxu0
    %v4178 = vadd.f32 0.0, %v4177
    %v4179 = vpop.f32.mrb[0].mxu0
    %v4180 = vpop.f32.mrb[0].mxu0
    %v4181 = vadd.f32 0.0, %v4180
    %v4182 = vpop.f32.mrb[0].mxu0
    %4183 = vmatprep.mubr.bf16.mxu0 0
    %4184 = vmatmul.mubr.bf16.gmra.mrb[0].mxu0 %v4043
    %v4185 = vpop.f32.mrb[0].mxu0
    %v4186 = vadd.f32 0.0, %v4185
    %v4187 = vpop.f32.mrb[0].mxu0
    %v4188 = vpop.f32.mrb[0].mxu0
    %v4189 = vadd.f32 0.0, %v4188
    %v4190 = vpop.f32.mrb[0].mxu0
    %4191 = vmatprep.mubr.bf16.mxu0 0
    %4192 = vmatmul.mubr.bf16.gmra.mrb[0].mxu0 %v4046
    %v4193 = vpop.f32.mrb[0].mxu0
    %v4194 = vadd.f32 0.0, %v4193
    %v4195 = vpop.f32.mrb[0].mxu0
    %v4196 = vpop.f32.mrb[0].mxu0
    %v4197 = vadd.f32 0.0, %v4196
    %v4198 = vpop.f32.mrb[0].mxu0
    %4199 = vmatprep.mubr.bf16.mxu0 0
    %4200 = vmatmul.mubr.bf16.gmra.mrb[0].mxu0 %v4049
    %v4201 = vpop.f32.mrb[0].mxu0
    %v4202 = vadd.f32 0.0, %v4201
    %v4203 = vpop.f32.mrb[0].mxu0
    %v4204 = vpop.f32.mrb[0].mxu0
    %v4205 = vadd.f32 0.0, %v4204
    %v4206 = vpop.f32.mrb[0].mxu0
    %4207 = vmatprep.mubr.bf16.mxu0 0
    %4208 = vmatmul.mubr.bf16.gmra.mrb[0].mxu0 %v4052
    %v4209 = vpop.f32.mrb[0].mxu0
    %v4210 = vadd.f32 0.0, %v4209
    %v4211 = vpop.f32.mrb[0].mxu0
    %v4212 = vpop.f32.mrb[0].mxu0
    %v4213 = vadd.f32 0.0, %v4212
    %v4214 = vpop.f32.mrb[0].mxu0
    %4215 = vmatprep.mubr.bf16.mxu0 0
    %4216 = vmatmul.mubr.bf16.gmra.mrb[0].mxu0 %v4055
    %v4217 = vpop.f32.mrb[0].mxu0
    %v4218 = vadd.f32 0.0, %v4217
    %v4219 = vpop.f32.mrb[0].mxu0
    %v4220 = vpop.f32.mrb[0].mxu0
    %v4221 = vadd.f32 0.0, %v4220
    %v4222 = vpop.f32.mrb[0].mxu0
    %4223 = vmatprep.mubr.bf16.mxu0 0
    %4224 = vmatmul.mubr.bf16.gmra.mrb[0].mxu0 %v4058
    %v4225 = vpop.f32.mrb[0].mxu0
    %v4226 = vadd.f32 0.0, %v4225
    %v4227 = vpop.f32.mrb[0].mxu0
    %v4228 = vpop.f32.mrb[0].mxu0
    %v4229 = vadd.f32 0.0, %v4228
    %v4230 = vpop.f32.mrb[0].mxu0
    %4231 = vmatprep.mubr.bf16.mxu0 0
    %4232 = vmatmul.mubr.bf16.gmra.mrb[0].mxu0 %v4061
    %v4233 = vpop.f32.mrb[0].mxu0
    %v4234 = vadd.f32 0.0, %v4233
    %v4235 = vpop.f32.mrb[0].mxu0
    %v4236 = vpop.f32.mrb[0].mxu0
    %v4237 = vadd.f32 0.0, %v4236
    %v4238 = vpop.f32.mrb[0].mxu0
    %4239 = vmatprep.mubr.bf16.mxu0 0
    %4240 = vmatmul.mubr.bf16.gmra.mrb[0].mxu0 %v4064
    %v4241 = vpop.f32.mrb[0].mxu0
    %v4242 = vadd.f32 0.0, %v4241
    %v4243 = vpop.f32.mrb[0].mxu0
    %v4244 = vpop.f32.mrb[0].mxu0
    %v4245 = vadd.f32 0.0, %v4244
    %v4246 = vpop.f32.mrb[0].mxu0
    %4247 = vmatprep.mubr.bf16.mxu0 0
    %4248 = vmatmul.mubr.bf16.gmra.mrb[0].mxu0 %v4067
    %v4249 = vpop.f32.mrb[0].mxu0
    %v4250 = vadd.f32 0.0, %v4249
    %v4251 = vpop.f32.mrb[0].mxu0
    %v4252 = vpop.f32.mrb[0].mxu0
    %v4253 = vadd.f32 0.0, %v4252
    %v4254 = vpop.f32.mrb[0].mxu0
    %4255 = vmatprep.mubr.bf16.mxu0 0
    %4256 = vmatmul.mubr.bf16.gmra.mrb[0].mxu0 %v4070
    %v4257 = vpop.f32.mrb[0].mxu0
    %v4258 = vadd.f32 0.0, %v4257
    %v4259 = vpop.f32.mrb[0].mxu0
    %v4260 = vpop.f32.mrb[0].mxu0
    %v4261 = vadd.f32 0.0, %v4260
    %v4262 = vpop.f32.mrb[0].mxu0
    %4263 = vmatprep.mubr.bf16.mxu0 0
    %4264 = vmatmul.mubr.bf16.gmra.mrb[0].mxu0 %v4073
    %v4265 = vpop.f32.mrb[0].mxu0
    %v4266 = vadd.f32 0.0, %v4265
    %v4267 = vpop.f32.mrb[0].mxu0
    %v4268 = vpop.f32.mrb[0].mxu0
    %v4269 = vadd.f32 0.0, %v4268
    %v4270 = vpop.f32.mrb[0].mxu0
    %4271 = vmatprep.mubr.bf16.mxu0 0
    %4272 = vmatmul.mubr.bf16.gmra.mrb[0].mxu0 %v4076
    %v4273 = vpop.f32.mrb[0].mxu0
    %v4274 = vadd.f32 0.0, %v4273
    %v4275 = vpop.f32.mrb[0].mxu0
    %v4276 = vpop.f32.mrb[0].mxu0
    %v4277 = vadd.f32 0.0, %v4276
    %v4278 = vpop.f32.mrb[0].mxu0
    %4279 = vmatprep.mubr.bf16.mxu0 0
    %4280 = vmatmul.mubr.bf16.gmra.mrb[0].mxu0 %v4079
    %v4281 = vpop.f32.mrb[0].mxu0
    %v4282 = vadd.f32 0.0, %v4281
    %v4283 = vpop.f32.mrb[0].mxu0
    %v4284 = vpop.f32.mrb[0].mxu0
    %v4285 = vadd.f32 0.0, %v4284
    %v4286 = vpop.f32.mrb[0].mxu0
    %4287 = vmatprep.mubr.bf16.mxu0 0
    %4288 = vmatmul.mubr.bf16.gmra.mrb[0].mxu0 %v4082
    %v4289 = vpop.f32.mrb[0].mxu0
    %v4290 = vadd.f32 0.0, %v4289
    %v4291 = vpop.f32.mrb[0].mxu0
    %v4292 = vpop.f32.mrb[0].mxu0
    %v4293 = vadd.f32 0.0, %v4292
    %v4294 = vpop.f32.mrb[0].mxu0
    %4295 = vmatprep.mubr.bf16.mxu0 0
    %4296 = vmatmul.mubr.bf16.gmra.mrb[0].mxu0 %v4085
    %v4297 = vpop.f32.mrb[0].mxu0
    %v4298 = vadd.f32 0.0, %v4297
    %v4299 = vpop.f32.mrb[0].mxu0
    %v4300 = vpop.f32.mrb[0].mxu0
    %v4301 = vadd.f32 0.0, %v4300
    %v4302 = vpop.f32.mrb[0].mxu0
    %4303 = vmatprep.mubr.bf16.mxu0 0
    %4304 = vmatmul.mubr.bf16.gmra.mrb[0].mxu0 %v4088
    %v4305 = vpop.f32.mrb[0].mxu0
    %v4306 = vadd.f32 0.0, %v4305
    %v4307 = vpop.f32.mrb[0].mxu0
    %v4308 = vpop.f32.mrb[0].mxu0
    %v4309 = vadd.f32 0.0, %v4308
    %v4310 = vpop.f32.mrb[0].mxu0
    %4311 = vmatprep.mubr.bf16.mxu0 0
    %4312 = vmatmul.mubr.bf16.gmra.mrb[0].mxu0 %v4091
    %v4313 = vpop.f32.mrb[0].mxu0
    %v4314 = vadd.f32 0.0, %v4313
    %v4315 = vpop.f32.mrb[0].mxu0
    %v4316 = vpop.f32.mrb[0].mxu0
    %v4317 = vadd.f32 0.0, %v4316
    %v4318 = vpop.f32.mrb[0].mxu0
    %4319 = vmatprep.mubr.bf16.mxu0 0
    %4320 = vmatmul.mubr.bf16.gmra.mrb[0].mxu0 %v4094
    %v4321 = vpop.f32.mrb[0].mxu0
    %v4322 = vadd.f32 0.0, %v4321
    %v4323 = vpop.f32.mrb[0].mxu0
    %v4324 = vpop.f32.mrb[0].mxu0
    %v4325 = vadd.f32 0.0, %v4324
    %v4326 = vpop.f32.mrb[0].mxu0
    %4327 = vmatprep.mubr.bf16.mxu0 0
    %4328 = vmatmul.mubr.bf16.gmra.mrb[0].mxu0 %v4097
    %v4329 = vpop.f32.mrb[0].mxu0
    %v4330 = vadd.f32 0.0, %v4329
    %v4331 = vpop.f32.mrb[0].mxu0
    %v4332 = vpop.f32.mrb[0].mxu0
    %v4333 = vadd.f32 0.0, %v4332
    %v4334 = vpop.f32.mrb[0].mxu0
    %4335 = vmatprep.mubr.bf16.mxu0 0
    %4336 = vmatmul.mubr.bf16.gmra.mrb[0].mxu0 %v4100
    %v4337 = vpop.f32.mrb[0].mxu0
    %v4338 = vadd.f32 0.0, %v4337
    %v4339 = vpop.f32.mrb[0].mxu0
    %v4340 = vpop.f32.mrb[0].mxu0
    %v4341 = vadd.f32 0.0, %v4340
    %v4342 = vpop.f32.mrb[0].mxu0
    %4343 = vmatprep.mubr.bf16.mxu0 0
    %4344 = vmatmul.mubr.bf16.gmra.mrb[0].mxu0 %v4103
    %v4345 = vpop.f32.mrb[0].mxu0
    %v4346 = vadd.f32 0.0, %v4345
    %v4347 = vpop.f32.mrb[0].mxu0
    %v4348 = vpop.f32.mrb[0].mxu0
    %v4349 = vadd.f32 0.0, %v4348
    %v4350 = vpop.f32.mrb[0].mxu0
    %4351 = vmatprep.mubr.bf16.mxu0 0
    %4352 = vmatmul.mubr.bf16.gmra.mrb[0].mxu0 %v4106
    %v4353 = vpop.f32.mrb[0].mxu0
    %v4354 = vadd.f32 0.0, %v4353
    %v4355 = vpop.f32.mrb[0].mxu0
    %v4356 = vpop.f32.mrb[0].mxu0
    %v4357 = vadd.f32 0.0, %v4356
    %v4358 = vpop.f32.mrb[0].mxu0
    %4359 = vmatprep.mubr.bf16.mxu0 0
    %4360 = vmatmul.mubr.bf16.gmra.mrb[0].mxu0 %v4109
    %v4361 = vpop.f32.mrb[0].mxu0
    %v4362 = vadd.f32 0.0, %v4361
    %v4363 = vpop.f32.mrb[0].mxu0
    %v4364 = vpop.f32.mrb[0].mxu0
    %v4365 = vadd.f32 0.0, %v4364
    %v4366 = vpop.f32.mrb[0].mxu0
    %4367 = vmatprep.mubr.bf16.mxu0 0
    %4368 = vmatmul.mubr.bf16.gmra.mrb[0].mxu0 %v4112
    %v4369 = vpop.f32.mrb[0].mxu0
    %v4370 = vadd.f32 0.0, %v4369
    %v4371 = vpop.f32.mrb[0].mxu0
    %v4372 = vpop.f32.mrb[0].mxu0
    %v4373 = vadd.f32 0.0, %v4372
    %v4374 = vpop.f32.mrb[0].mxu0
    %4375 = vmatprep.mubr.bf16.mxu0 0
    %4376 = vmatmul.mubr.bf16.gmra.mrb[0].mxu0 %v4115
    %v4377 = vpop.f32.mrb[0].mxu0
    %v4378 = vadd.f32 0.0, %v4377
    %v4379 = vpop.f32.mrb[0].mxu0
    %v4380 = vpop.f32.mrb[0].mxu0
    %v4381 = vadd.f32 0.0, %v4380
    %v4382 = vpop.f32.mrb[0].mxu0
    %4383 = vmatprep.mubr.bf16.mxu0 0
    %4384 = vmatmul.mubr.bf16.gmra.mrb[0].mxu0 %v4118
    %v4385 = vpop.f32.mrb[0].mxu0
    %v4386 = vadd.f32 0.0, %v4385
    %v4387 = vpop.f32.mrb[0].mxu0
    %v4388 = vpop.f32.mrb[0].mxu0
    %v4389 = vadd.f32 0.0, %v4388
    %v4390 = vpop.f32.mrb[0].mxu0
    %4391 = vmatprep.mubr.bf16.mxu0 0
    %4392 = vmatmul.mubr.bf16.gmra.mrb[0].mxu0 %v4121
    %v4393 = vpop.f32.mrb[0].mxu0
    %v4394 = vadd.f32 0.0, %v4393
    %v4395 = vpop.f32.mrb[0].mxu0
    %v4396 = vpop.f32.mrb[0].mxu0
    %v4397 = vadd.f32 0.0, %v4396
    %v4398 = vpop.f32.mrb[0].mxu0
    %4399 = vmatprep.mubr.bf16.mxu0 0
    %4400 = vmatmul.mubr.bf16.gmra.mrb[0].mxu0 %v4124
    %v4401 = vpop.f32.mrb[0].mxu0
    %v4402 = vadd.f32 0.0, %v4401
    %v4403 = vpop.f32.mrb[0].mxu0
    %v4404 = vpop.f32.mrb[0].mxu0
    %v4405 = vadd.f32 0.0, %v4404
    %v4406 = vpop.f32.mrb[0].mxu0
    %4407 = vmatprep.mubr.bf16.mxu0 0
    %4408 = vmatmul.mubr.bf16.gmra.mrb[0].mxu0 %v4127
    %v4409 = vpop.f32.mrb[0].mxu0
    %v4410 = vadd.f32 0.0, %v4409
    %v4411 = vpop.f32.mrb[0].mxu0
    %v4412 = vpop.f32.mrb[0].mxu0
    %v4413 = vadd.f32 0.0, %v4412
    %v4414 = vpop.f32.mrb[0].mxu0
    %4415 = vmatprep.mubr.bf16.mxu0 0
    %4416 = vmatmul.mubr.bf16.gmra.mrb[0].mxu0 %v4130
    %v4417 = vpop.f32.mrb[0].mxu0
    %v4418 = vadd.f32 0.0, %v4417
    %v4419 = vpop.f32.mrb[0].mxu0
    %v4420 = vpop.f32.mrb[0].mxu0
    %v4421 = vadd.f32 0.0, %v4420
    %v4422 = vpop.f32.mrb[0].mxu0
    %4423 = vdwg.mxu0
    %v4424 = vld [vmem:[%s5] sm:$0x1]
    %v4425 = vld [vmem:[%s6] sm:$0x1]
    %vm4426 = vcmask 64512
    %v4427 = vsel %vm4426, %v4170, 0.0
    %v4428 = vsel %vm4426, %v4173, 0.0
    %v4429 = vadd.f32 %v4427, %v4428
    %v4430 = vsel %vm4426, %v4178, 0.0
    %v4431 = vadd.f32 %v4429, %v4430
    %v4432 = vsel %vm4426, %v4181, 0.0
    %v4433 = vadd.f32 %v4431, %v4432
    %v4434 = vsel %vm4426, %v4186, 0.0
    %v4435 = vadd.f32 %v4433, %v4434
    %v4436 = vsel %vm4426, %v4189, 0.0
    %v4437 = vadd.f32 %v4435, %v4436
    %v4438 = vsel %vm4426, %v4194, 0.0
    %v4439 = vadd.f32 %v4437, %v4438
    %v4440 = vsel %vm4426, %v4197, 0.0
    %v4441 = vadd.f32 %v4439, %v4440
    %v4442 = vsel %vm4426, %v4202, 0.0
    %v4443 = vadd.f32 %v4441, %v4442
    %v4444 = vsel %vm4426, %v4205, 0.0
    %v4445 = vadd.f32 %v4443, %v4444
    %v4446 = vsel %vm4426, %v4210, 0.0
    %v4447 = vadd.f32 %v4445, %v4446
    %v4448 = vsel %vm4426, %v4213, 0.0
    %v4449 = vadd.f32 %v4447, %v4448
    %v4450 = vsel %vm4426, %v4218, 0.0
    %v4451 = vadd.f32 %v4449, %v4450
    %v4452 = vsel %vm4426, %v4221, 0.0
    %v4453 = vadd.f32 %v4451, %v4452
    %v4454 = vsel %vm4426, %v4226, 0.0
    %v4455 = vadd.f32 %v4453, %v4454
    %v4456 = vsel %vm4426, %v4229, 0.0
    %v4457 = vadd.f32 %v4455, %v4456
    %v4458 = vsel %vm4426, %v4234, 0.0
    %v4459 = vadd.f32 %v4457, %v4458
    %v4460 = vsel %vm4426, %v4237, 0.0
    %v4461 = vadd.f32 %v4459, %v4460
    %v4462 = vsel %vm4426, %v4242, 0.0
    %v4463 = vadd.f32 %v4461, %v4462
    %v4464 = vsel %vm4426, %v4245, 0.0
    %v4465 = vadd.f32 %v4463, %v4464
    %v4466 = vsel %vm4426, %v4250, 0.0
    %v4467 = vadd.f32 %v4465, %v4466
    %v4468 = vsel %vm4426, %v4253, 0.0
    %v4469 = vadd.f32 %v4467, %v4468
    %v4470 = vsel %vm4426, %v4258, 0.0
    %v4471 = vadd.f32 %v4469, %v4470
    %v4472 = vsel %vm4426, %v4261, 0.0
    %v4473 = vadd.f32 %v4471, %v4472
    %v4474 = vsel %vm4426, %v4266, 0.0
    %v4475 = vadd.f32 %v4473, %v4474
    %v4476 = vsel %vm4426, %v4269, 0.0
    %v4477 = vadd.f32 %v4475, %v4476
    %v4478 = vsel %vm4426, %v4274, 0.0
    %v4479 = vadd.f32 %v4477, %v4478
    %v4480 = vsel %vm4426, %v4277, 0.0
    %v4481 = vadd.f32 %v4479, %v4480
    %v4482 = vsel %vm4426, %v4282, 0.0
    %v4483 = vadd.f32 %v4481, %v4482
    %v4484 = vsel %vm4426, %v4285, 0.0
    %v4485 = vadd.f32 %v4483, %v4484
    %v4486 = vsel %vm4426, %v4290, 0.0
    %v4487 = vadd.f32 %v4485, %v4486
    %v4488 = vsel %vm4426, %v4293, 0.0
    %v4489 = vadd.f32 %v4487, %v4488
    %v4490 = vsel %vm4426, %v4298, 0.0
    %v4491 = vadd.f32 %v4489, %v4490
    %v4492 = vsel %vm4426, %v4301, 0.0
    %v4493 = vadd.f32 %v4491, %v4492
    %v4494 = vsel %vm4426, %v4306, 0.0
    %v4495 = vadd.f32 %v4493, %v4494
    %v4496 = vsel %vm4426, %v4309, 0.0
    %v4497 = vadd.f32 %v4495, %v4496
    %v4498 = vsel %vm4426, %v4314, 0.0
    %v4499 = vadd.f32 %v4497, %v4498
    %v4500 = vsel %vm4426, %v4317, 0.0
    %v4501 = vadd.f32 %v4499, %v4500
    %v4502 = vsel %vm4426, %v4322, 0.0
    %v4503 = vadd.f32 %v4501, %v4502
    %v4504 = vsel %vm4426, %v4325, 0.0
    %v4505 = vadd.f32 %v4503, %v4504
    %v4506 = vsel %vm4426, %v4330, 0.0
    %v4507 = vadd.f32 %v4505, %v4506
    %v4508 = vsel %vm4426, %v4333, 0.0
    %v4509 = vadd.f32 %v4507, %v4508
    %v4510 = vsel %vm4426, %v4338, 0.0
    %v4511 = vadd.f32 %v4509, %v4510
    %v4512 = vsel %vm4426, %v4341, 0.0
    %v4513 = vadd.f32 %v4511, %v4512
    %v4514 = vsel %vm4426, %v4346, 0.0
    %v4515 = vadd.f32 %v4513, %v4514
    %v4516 = vsel %vm4426, %v4349, 0.0
    %v4517 = vadd.f32 %v4515, %v4516
    %v4518 = vsel %vm4426, %v4354, 0.0
    %v4519 = vadd.f32 %v4517, %v4518
    %v4520 = vsel %vm4426, %v4357, 0.0
    %v4521 = vadd.f32 %v4519, %v4520
    %v4522 = vsel %vm4426, %v4362, 0.0
    %v4523 = vadd.f32 %v4521, %v4522
    %v4524 = vsel %vm4426, %v4365, 0.0
    %v4525 = vadd.f32 %v4523, %v4524
    %v4526 = vsel %vm4426, %v4370, 0.0
    %v4527 = vadd.f32 %v4525, %v4526
    %v4528 = vsel %vm4426, %v4373, 0.0
    %v4529 = vadd.f32 %v4527, %v4528
    %v4530 = vsel %vm4426, %v4378, 0.0
    %v4531 = vadd.f32 %v4529, %v4530
    %v4532 = vsel %vm4426, %v4381, 0.0
    %v4533 = vadd.f32 %v4531, %v4532
    %v4534 = vsel %vm4426, %v4386, 0.0
    %v4535 = vadd.f32 %v4533, %v4534
    %v4536 = vsel %vm4426, %v4389, 0.0
    %v4537 = vadd.f32 %v4535, %v4536
    %v4538 = vsel %vm4426, %v4394, 0.0
    %v4539 = vadd.f32 %v4537, %v4538
    %v4540 = vsel %vm4426, %v4397, 0.0
    %v4541 = vadd.f32 %v4539, %v4540
    %v4542 = vsel %vm4426, %v4402, 0.0
    %v4543 = vadd.f32 %v4541, %v4542
    %v4544 = vsel %vm4426, %v4405, 0.0
    %v4545 = vadd.f32 %v4543, %v4544
    %v4546 = vsel %vm4426, %v4410, 0.0
    %v4547 = vadd.f32 %v4545, %v4546
    %v4548 = vsel %vm4426, %v4413, 0.0
    %v4549 = vadd.f32 %v4547, %v4548
    %v4550 = vsel %vm4426, %v4418, 0.0
    %v4551 = vadd.f32 %v4549, %v4550
    %v4552 = vsel %vm4426, %v4421, 0.0
    %v4553 = vadd.f32 %v4551, %v4552
    %v4554 = vrot.slane %v4553, 4
    %v4555 = vadd.f32 %v4553, %v4554
    %v4556 = vrot.slane %v4555, 2
    %v4557 = vadd.f32 %v4555, %v4556
    %v4558 = vrot.slane %v4557, 1
    %v4559 = vadd.f32 %v4557, %v4558
    %v4560 = vmul.f32 %v4559, %v801
    %v4561 = vsub.f32 %v4170, %v4560
    %v4562 = vsub.f32 %v4173, %v4560
    %v4563 = vsub.f32 %v4178, %v4560
    %v4564 = vsub.f32 %v4181, %v4560
    %v4565 = vsub.f32 %v4186, %v4560
    %v4566 = vsub.f32 %v4189, %v4560
    %v4567 = vsub.f32 %v4194, %v4560
    %v4568 = vsub.f32 %v4197, %v4560
    %v4569 = vsub.f32 %v4202, %v4560
    %v4570 = vsub.f32 %v4205, %v4560
    %v4571 = vsub.f32 %v4210, %v4560
    %v4572 = vsub.f32 %v4213, %v4560
    %v4573 = vsub.f32 %v4218, %v4560
    %v4574 = vsub.f32 %v4221, %v4560
    %v4575 = vsub.f32 %v4226, %v4560
    %v4576 = vsub.f32 %v4229, %v4560
    %v4577 = vsub.f32 %v4234, %v4560
    %v4578 = vsub.f32 %v4237, %v4560
    %v4579 = vsub.f32 %v4242, %v4560
    %v4580 = vsub.f32 %v4245, %v4560
    %v4581 = vsub.f32 %v4250, %v4560
    %v4582 = vsub.f32 %v4253, %v4560
    %v4583 = vsub.f32 %v4258, %v4560
    %v4584 = vsub.f32 %v4261, %v4560
    %v4585 = vsub.f32 %v4266, %v4560
    %v4586 = vsub.f32 %v4269, %v4560
    %v4587 = vsub.f32 %v4274, %v4560
    %v4588 = vsub.f32 %v4277, %v4560
    %v4589 = vsub.f32 %v4282, %v4560
    %v4590 = vsub.f32 %v4285, %v4560
    %v4591 = vsub.f32 %v4290, %v4560
    %v4592 = vsub.f32 %v4293, %v4560
    %v4593 = vsub.f32 %v4298, %v4560
    %v4594 = vsub.f32 %v4301, %v4560
    %v4595 = vsub.f32 %v4306, %v4560
    %v4596 = vsub.f32 %v4309, %v4560
    %v4597 = vsub.f32 %v4314, %v4560
    %v4598 = vsub.f32 %v4317, %v4560
    %v4599 = vsub.f32 %v4322, %v4560
    %v4600 = vsub.f32 %v4325, %v4560
    %v4601 = vsub.f32 %v4330, %v4560
    %v4602 = vsub.f32 %v4333, %v4560
    %v4603 = vsub.f32 %v4338, %v4560
    %v4604 = vsub.f32 %v4341, %v4560
    %v4605 = vsub.f32 %v4346, %v4560
    %v4606 = vsub.f32 %v4349, %v4560
    %v4607 = vsub.f32 %v4354, %v4560
    %v4608 = vsub.f32 %v4357, %v4560
    %v4609 = vsub.f32 %v4362, %v4560
    %v4610 = vsub.f32 %v4365, %v4560
    %v4611 = vsub.f32 %v4370, %v4560
    %v4612 = vsub.f32 %v4373, %v4560
    %v4613 = vsub.f32 %v4378, %v4560
    %v4614 = vsub.f32 %v4381, %v4560
    %v4615 = vsub.f32 %v4386, %v4560
    %v4616 = vsub.f32 %v4389, %v4560
    %v4617 = vsub.f32 %v4394, %v4560
    %v4618 = vsub.f32 %v4397, %v4560
    %v4619 = vsub.f32 %v4402, %v4560
    %v4620 = vsub.f32 %v4405, %v4560
    %v4621 = vsub.f32 %v4410, %v4560
    %v4622 = vsub.f32 %v4413, %v4560
    %v4623 = vsub.f32 %v4418, %v4560
    %v4624 = vsub.f32 %v4421, %v4560
    %v4625 = vmul.f32 %v4561, %v4561
    %v4626 = vmul.f32 %v4562, %v4562
    %v4627 = vmul.f32 %v4563, %v4563
    %v4628 = vmul.f32 %v4564, %v4564
    %v4629 = vmul.f32 %v4565, %v4565
    %v4630 = vmul.f32 %v4566, %v4566
    %v4631 = vmul.f32 %v4567, %v4567
    %v4632 = vmul.f32 %v4568, %v4568
    %v4633 = vmul.f32 %v4569, %v4569
    %v4634 = vmul.f32 %v4570, %v4570
    %v4635 = vmul.f32 %v4571, %v4571
    %v4636 = vmul.f32 %v4572, %v4572
    %v4637 = vmul.f32 %v4573, %v4573
    %v4638 = vmul.f32 %v4574, %v4574
    %v4639 = vmul.f32 %v4575, %v4575
    %v4640 = vmul.f32 %v4576, %v4576
    %v4641 = vmul.f32 %v4577, %v4577
    %v4642 = vmul.f32 %v4578, %v4578
    %v4643 = vmul.f32 %v4579, %v4579
    %v4644 = vmul.f32 %v4580, %v4580
    %v4645 = vmul.f32 %v4581, %v4581
    %v4646 = vmul.f32 %v4582, %v4582
    %v4647 = vmul.f32 %v4583, %v4583
    %v4648 = vmul.f32 %v4584, %v4584
    %v4649 = vmul.f32 %v4585, %v4585
    %v4650 = vmul.f32 %v4586, %v4586
    %v4651 = vmul.f32 %v4587, %v4587
    %v4652 = vmul.f32 %v4588, %v4588
    %v4653 = vmul.f32 %v4589, %v4589
    %v4654 = vmul.f32 %v4590, %v4590
    %v4655 = vmul.f32 %v4591, %v4591
    %v4656 = vmul.f32 %v4592, %v4592
    %v4657 = vmul.f32 %v4593, %v4593
    %v4658 = vmul.f32 %v4594, %v4594
    %v4659 = vmul.f32 %v4595, %v4595
    %v4660 = vmul.f32 %v4596, %v4596
    %v4661 = vmul.f32 %v4597, %v4597
    %v4662 = vmul.f32 %v4598, %v4598
    %v4663 = vmul.f32 %v4599, %v4599
    %v4664 = vmul.f32 %v4600, %v4600
    %v4665 = vmul.f32 %v4601, %v4601
    %v4666 = vmul.f32 %v4602, %v4602
    %v4667 = vmul.f32 %v4603, %v4603
    %v4668 = vmul.f32 %v4604, %v4604
    %v4669 = vmul.f32 %v4605, %v4605
    %v4670 = vmul.f32 %v4606, %v4606
    %v4671 = vmul.f32 %v4607, %v4607
    %v4672 = vmul.f32 %v4608, %v4608
    %v4673 = vmul.f32 %v4609, %v4609
    %v4674 = vmul.f32 %v4610, %v4610
    %v4675 = vmul.f32 %v4611, %v4611
    %v4676 = vmul.f32 %v4612, %v4612
    %v4677 = vmul.f32 %v4613, %v4613
    %v4678 = vmul.f32 %v4614, %v4614
    %v4679 = vmul.f32 %v4615, %v4615
    %v4680 = vmul.f32 %v4616, %v4616
    %v4681 = vmul.f32 %v4617, %v4617
    %v4682 = vmul.f32 %v4618, %v4618
    %v4683 = vmul.f32 %v4619, %v4619
    %v4684 = vmul.f32 %v4620, %v4620
    %v4685 = vmul.f32 %v4621, %v4621
    %v4686 = vmul.f32 %v4622, %v4622
    %v4687 = vmul.f32 %v4623, %v4623
    %v4688 = vmul.f32 %v4624, %v4624
    %v4689 = vsel %vm4426, %v4625, 0.0
    %v4690 = vsel %vm4426, %v4626, 0.0
    %v4691 = vadd.f32 %v4689, %v4690
    %v4692 = vsel %vm4426, %v4627, 0.0
    %v4693 = vadd.f32 %v4691, %v4692
    %v4694 = vsel %vm4426, %v4628, 0.0
    %v4695 = vadd.f32 %v4693, %v4694
    %v4696 = vsel %vm4426, %v4629, 0.0
    %v4697 = vadd.f32 %v4695, %v4696
    %v4698 = vsel %vm4426, %v4630, 0.0
    %v4699 = vadd.f32 %v4697, %v4698
    %v4700 = vsel %vm4426, %v4631, 0.0
    %v4701 = vadd.f32 %v4699, %v4700
    %v4702 = vsel %vm4426, %v4632, 0.0
    %v4703 = vadd.f32 %v4701, %v4702
    %v4704 = vsel %vm4426, %v4633, 0.0
    %v4705 = vadd.f32 %v4703, %v4704
    %v4706 = vsel %vm4426, %v4634, 0.0
    %v4707 = vadd.f32 %v4705, %v4706
    %v4708 = vsel %vm4426, %v4635, 0.0
    %v4709 = vadd.f32 %v4707, %v4708
    %v4710 = vsel %vm4426, %v4636, 0.0
    %v4711 = vadd.f32 %v4709, %v4710
    %v4712 = vsel %vm4426, %v4637, 0.0
    %v4713 = vadd.f32 %v4711, %v4712
    %v4714 = vsel %vm4426, %v4638, 0.0
    %v4715 = vadd.f32 %v4713, %v4714
    %v4716 = vsel %vm4426, %v4639, 0.0
    %v4717 = vadd.f32 %v4715, %v4716
    %v4718 = vsel %vm4426, %v4640, 0.0
    %v4719 = vadd.f32 %v4717, %v4718
    %v4720 = vsel %vm4426, %v4641, 0.0
    %v4721 = vadd.f32 %v4719, %v4720
    %v4722 = vsel %vm4426, %v4642, 0.0
    %v4723 = vadd.f32 %v4721, %v4722
    %v4724 = vsel %vm4426, %v4643, 0.0
    %v4725 = vadd.f32 %v4723, %v4724
    %v4726 = vsel %vm4426, %v4644, 0.0
    %v4727 = vadd.f32 %v4725, %v4726
    %v4728 = vsel %vm4426, %v4645, 0.0
    %v4729 = vadd.f32 %v4727, %v4728
    %v4730 = vsel %vm4426, %v4646, 0.0
    %v4731 = vadd.f32 %v4729, %v4730
    %v4732 = vsel %vm4426, %v4647, 0.0
    %v4733 = vadd.f32 %v4731, %v4732
    %v4734 = vsel %vm4426, %v4648, 0.0
    %v4735 = vadd.f32 %v4733, %v4734
    %v4736 = vsel %vm4426, %v4649, 0.0
    %v4737 = vadd.f32 %v4735, %v4736
    %v4738 = vsel %vm4426, %v4650, 0.0
    %v4739 = vadd.f32 %v4737, %v4738
    %v4740 = vsel %vm4426, %v4651, 0.0
    %v4741 = vadd.f32 %v4739, %v4740
    %v4742 = vsel %vm4426, %v4652, 0.0
    %v4743 = vadd.f32 %v4741, %v4742
    %v4744 = vsel %vm4426, %v4653, 0.0
    %v4745 = vadd.f32 %v4743, %v4744
    %v4746 = vsel %vm4426, %v4654, 0.0
    %v4747 = vadd.f32 %v4745, %v4746
    %v4748 = vsel %vm4426, %v4655, 0.0
    %v4749 = vadd.f32 %v4747, %v4748
    %v4750 = vsel %vm4426, %v4656, 0.0
    %v4751 = vadd.f32 %v4749, %v4750
    %v4752 = vsel %vm4426, %v4657, 0.0
    %v4753 = vadd.f32 %v4751, %v4752
    %v4754 = vsel %vm4426, %v4658, 0.0
    %v4755 = vadd.f32 %v4753, %v4754
    %v4756 = vsel %vm4426, %v4659, 0.0
    %v4757 = vadd.f32 %v4755, %v4756
    %v4758 = vsel %vm4426, %v4660, 0.0
    %v4759 = vadd.f32 %v4757, %v4758
    %v4760 = vsel %vm4426, %v4661, 0.0
    %v4761 = vadd.f32 %v4759, %v4760
    %v4762 = vsel %vm4426, %v4662, 0.0
    %v4763 = vadd.f32 %v4761, %v4762
    %v4764 = vsel %vm4426, %v4663, 0.0
    %v4765 = vadd.f32 %v4763, %v4764
    %v4766 = vsel %vm4426, %v4664, 0.0
    %v4767 = vadd.f32 %v4765, %v4766
    %v4768 = vsel %vm4426, %v4665, 0.0
    %v4769 = vadd.f32 %v4767, %v4768
    %v4770 = vsel %vm4426, %v4666, 0.0
    %v4771 = vadd.f32 %v4769, %v4770
    %v4772 = vsel %vm4426, %v4667, 0.0
    %v4773 = vadd.f32 %v4771, %v4772
    %v4774 = vsel %vm4426, %v4668, 0.0
    %v4775 = vadd.f32 %v4773, %v4774
    %v4776 = vsel %vm4426, %v4669, 0.0
    %v4777 = vadd.f32 %v4775, %v4776
    %v4778 = vsel %vm4426, %v4670, 0.0
    %v4779 = vadd.f32 %v4777, %v4778
    %v4780 = vsel %vm4426, %v4671, 0.0
    %v4781 = vadd.f32 %v4779, %v4780
    %v4782 = vsel %vm4426, %v4672, 0.0
    %v4783 = vadd.f32 %v4781, %v4782
    %v4784 = vsel %vm4426, %v4673, 0.0
    %v4785 = vadd.f32 %v4783, %v4784
    %v4786 = vsel %vm4426, %v4674, 0.0
    %v4787 = vadd.f32 %v4785, %v4786
    %v4788 = vsel %vm4426, %v4675, 0.0
    %v4789 = vadd.f32 %v4787, %v4788
    %v4790 = vsel %vm4426, %v4676, 0.0
    %v4791 = vadd.f32 %v4789, %v4790
    %v4792 = vsel %vm4426, %v4677, 0.0
    %v4793 = vadd.f32 %v4791, %v4792
    %v4794 = vsel %vm4426, %v4678, 0.0
    %v4795 = vadd.f32 %v4793, %v4794
    %v4796 = vsel %vm4426, %v4679, 0.0
    %v4797 = vadd.f32 %v4795, %v4796
    %v4798 = vsel %vm4426, %v4680, 0.0
    %v4799 = vadd.f32 %v4797, %v4798
    %v4800 = vsel %vm4426, %v4681, 0.0
    %v4801 = vadd.f32 %v4799, %v4800
    %v4802 = vsel %vm4426, %v4682, 0.0
    %v4803 = vadd.f32 %v4801, %v4802
    %v4804 = vsel %vm4426, %v4683, 0.0
    %v4805 = vadd.f32 %v4803, %v4804
    %v4806 = vsel %vm4426, %v4684, 0.0
    %v4807 = vadd.f32 %v4805, %v4806
    %v4808 = vsel %vm4426, %v4685, 0.0
    %v4809 = vadd.f32 %v4807, %v4808
    %v4810 = vsel %vm4426, %v4686, 0.0
    %v4811 = vadd.f32 %v4809, %v4810
    %v4812 = vsel %vm4426, %v4687, 0.0
    %v4813 = vadd.f32 %v4811, %v4812
    %v4814 = vsel %vm4426, %v4688, 0.0
    %v4815 = vadd.f32 %v4813, %v4814
    %v4816 = vrot.slane %v4815, 4
    %v4817 = vadd.f32 %v4815, %v4816
    %v4818 = vrot.slane %v4817, 2
    %v4819 = vadd.f32 %v4817, %v4818
    %v4820 = vrot.slane %v4819, 1
    %v4821 = vadd.f32 %v4819, %v4820
    %v4822 = vmul.f32 %v4821, %v801
    %v4823 = vadd.f32 %v4822, 0.001
    %v4824 = vrsqrt.pop %v4823
    %v4825 = vmul.f32 %v4424, %v4824
    %v4826 = vmul.f32 %v4560, %v4825
    %v4827 = vsub.f32 %v4425, %v4826
    %v4829 = vlaneseq
    %v4830 = vshrl.u32 %v4829, 7
    %v4831 = vsub.s32 0, %v4830
    %v4832 = vrot.slane %v4825, %v4831
    %v4834 = vmul.f32 %v4170, %v4832
    %v4835 = vmul.f32 %v4173, %v4832
    %v4836 = vmul.f32 %v4178, %v4832
    %v4837 = vmul.f32 %v4181, %v4832
    %v4838 = vmul.f32 %v4186, %v4832
    %v4839 = vmul.f32 %v4189, %v4832
    %v4840 = vmul.f32 %v4194, %v4832
    %v4841 = vmul.f32 %v4197, %v4832
    %v4842 = vmul.f32 %v4202, %v4832
    %v4843 = vmul.f32 %v4205, %v4832
    %v4844 = vmul.f32 %v4210, %v4832
    %v4845 = vmul.f32 %v4213, %v4832
    %v4846 = vmul.f32 %v4218, %v4832
    %v4847 = vmul.f32 %v4221, %v4832
    %v4848 = vmul.f32 %v4226, %v4832
    %v4849 = vmul.f32 %v4229, %v4832
    %v4850 = vmul.f32 %v4234, %v4832
    %v4851 = vmul.f32 %v4237, %v4832
    %v4852 = vmul.f32 %v4242, %v4832
    %v4853 = vmul.f32 %v4245, %v4832
    %v4854 = vmul.f32 %v4250, %v4832
    %v4855 = vmul.f32 %v4253, %v4832
    %v4856 = vmul.f32 %v4258, %v4832
    %v4857 = vmul.f32 %v4261, %v4832
    %v4858 = vmul.f32 %v4266, %v4832
    %v4859 = vmul.f32 %v4269, %v4832
    %v4860 = vmul.f32 %v4274, %v4832
    %v4861 = vmul.f32 %v4277, %v4832
    %v4862 = vmul.f32 %v4282, %v4832
    %v4863 = vmul.f32 %v4285, %v4832
    %v4864 = vmul.f32 %v4290, %v4832
    %v4865 = vmul.f32 %v4293, %v4832
    %v4866 = vmul.f32 %v4298, %v4832
    %v4867 = vmul.f32 %v4301, %v4832
    %v4868 = vmul.f32 %v4306, %v4832
    %v4869 = vmul.f32 %v4309, %v4832
    %v4870 = vmul.f32 %v4314, %v4832
    %v4871 = vmul.f32 %v4317, %v4832
    %v4872 = vmul.f32 %v4322, %v4832
    %v4873 = vmul.f32 %v4325, %v4832
    %v4874 = vmul.f32 %v4330, %v4832
    %v4875 = vmul.f32 %v4333, %v4832
    %v4876 = vmul.f32 %v4338, %v4832
    %v4877 = vmul.f32 %v4341, %v4832
    %v4878 = vmul.f32 %v4346, %v4832
    %v4879 = vmul.f32 %v4349, %v4832
    %v4880 = vmul.f32 %v4354, %v4832
    %v4881 = vmul.f32 %v4357, %v4832
    %v4882 = vmul.f32 %v4362, %v4832
    %v4883 = vmul.f32 %v4365, %v4832
    %v4884 = vmul.f32 %v4370, %v4832
    %v4885 = vmul.f32 %v4373, %v4832
    %v4886 = vmul.f32 %v4378, %v4832
    %v4887 = vmul.f32 %v4381, %v4832
    %v4888 = vmul.f32 %v4386, %v4832
    %v4889 = vmul.f32 %v4389, %v4832
    %v4890 = vmul.f32 %v4394, %v4832
    %v4891 = vmul.f32 %v4397, %v4832
    %v4892 = vmul.f32 %v4402, %v4832
    %v4893 = vmul.f32 %v4405, %v4832
    %v4894 = vmul.f32 %v4410, %v4832
    %v4895 = vmul.f32 %v4413, %v4832
    %v4896 = vmul.f32 %v4418, %v4832
    %v4897 = vmul.f32 %v4421, %v4832
    %v4899 = vlaneseq
    %v4900 = vshrl.u32 %v4899, 7
    %v4901 = vsub.s32 0, %v4900
    %v4902 = vrot.slane %v4827, %v4901
    %v4904 = vadd.f32 %v4834, %v4902
    %v4905 = vadd.f32 %v4835, %v4902
    %v4906 = vadd.f32 %v4836, %v4902
    %v4907 = vadd.f32 %v4837, %v4902
    %v4908 = vadd.f32 %v4838, %v4902
    %v4909 = vadd.f32 %v4839, %v4902
    %v4910 = vadd.f32 %v4840, %v4902
    %v4911 = vadd.f32 %v4841, %v4902
    %v4912 = vadd.f32 %v4842, %v4902
    %v4913 = vadd.f32 %v4843, %v4902
    %v4914 = vadd.f32 %v4844, %v4902
    %v4915 = vadd.f32 %v4845, %v4902
    %v4916 = vadd.f32 %v4846, %v4902
    %v4917 = vadd.f32 %v4847, %v4902
    %v4918 = vadd.f32 %v4848, %v4902
    %v4919 = vadd.f32 %v4849, %v4902
    %v4920 = vadd.f32 %v4850, %v4902
    %v4921 = vadd.f32 %v4851, %v4902
    %v4922 = vadd.f32 %v4852, %v4902
    %v4923 = vadd.f32 %v4853, %v4902
    %v4924 = vadd.f32 %v4854, %v4902
    %v4925 = vadd.f32 %v4855, %v4902
    %v4926 = vadd.f32 %v4856, %v4902
    %v4927 = vadd.f32 %v4857, %v4902
    %v4928 = vadd.f32 %v4858, %v4902
    %v4929 = vadd.f32 %v4859, %v4902
    %v4930 = vadd.f32 %v4860, %v4902
    %v4931 = vadd.f32 %v4861, %v4902
    %v4932 = vadd.f32 %v4862, %v4902
    %v4933 = vadd.f32 %v4863, %v4902
    %v4934 = vadd.f32 %v4864, %v4902
    %v4935 = vadd.f32 %v4865, %v4902
    %v4936 = vadd.f32 %v4866, %v4902
    %v4937 = vadd.f32 %v4867, %v4902
    %v4938 = vadd.f32 %v4868, %v4902
    %v4939 = vadd.f32 %v4869, %v4902
    %v4940 = vadd.f32 %v4870, %v4902
    %v4941 = vadd.f32 %v4871, %v4902
    %v4942 = vadd.f32 %v4872, %v4902
    %v4943 = vadd.f32 %v4873, %v4902
    %v4944 = vadd.f32 %v4874, %v4902
    %v4945 = vadd.f32 %v4875, %v4902
    %v4946 = vadd.f32 %v4876, %v4902
    %v4947 = vadd.f32 %v4877, %v4902
    %v4948 = vadd.f32 %v4878, %v4902
    %v4949 = vadd.f32 %v4879, %v4902
    %v4950 = vadd.f32 %v4880, %v4902
    %v4951 = vadd.f32 %v4881, %v4902
    %v4952 = vadd.f32 %v4882, %v4902
    %v4953 = vadd.f32 %v4883, %v4902
    %v4954 = vadd.f32 %v4884, %v4902
    %v4955 = vadd.f32 %v4885, %v4902
    %v4956 = vadd.f32 %v4886, %v4902
    %v4957 = vadd.f32 %v4887, %v4902
    %v4958 = vadd.f32 %v4888, %v4902
    %v4959 = vadd.f32 %v4889, %v4902
    %v4960 = vadd.f32 %v4890, %v4902
    %v4961 = vadd.f32 %v4891, %v4902
    %v4962 = vadd.f32 %v4892, %v4902
    %v4963 = vadd.f32 %v4893, %v4902
    %v4964 = vadd.f32 %v4894, %v4902
    %v4965 = vadd.f32 %v4895, %v4902
    %v4966 = vadd.f32 %v4896, %v4902
    %v4967 = vadd.f32 %v4897, %v4902
    %v4968 = vmax.f32 %v4904, 0.0
    %v4969 = vmax.f32 %v4905, 0.0
    %v4970 = vmax.f32 %v4906, 0.0
    %v4971 = vmax.f32 %v4907, 0.0
    %v4972 = vmax.f32 %v4908, 0.0
    %v4973 = vmax.f32 %v4909, 0.0
    %v4974 = vmax.f32 %v4910, 0.0
    %v4975 = vmax.f32 %v4911, 0.0
    %v4976 = vmax.f32 %v4912, 0.0
    %v4977 = vmax.f32 %v4913, 0.0
    %v4978 = vmax.f32 %v4914, 0.0
    %v4979 = vmax.f32 %v4915, 0.0
    %v4980 = vmax.f32 %v4916, 0.0
    %v4981 = vmax.f32 %v4917, 0.0
    %v4982 = vmax.f32 %v4918, 0.0
    %v4983 = vmax.f32 %v4919, 0.0
    %v4984 = vmax.f32 %v4920, 0.0
    %v4985 = vmax.f32 %v4921, 0.0
    %v4986 = vmax.f32 %v4922, 0.0
    %v4987 = vmax.f32 %v4923, 0.0
    %v4988 = vmax.f32 %v4924, 0.0
    %v4989 = vmax.f32 %v4925, 0.0
    %v4990 = vmax.f32 %v4926, 0.0
    %v4991 = vmax.f32 %v4927, 0.0
    %v4992 = vmax.f32 %v4928, 0.0
    %v4993 = vmax.f32 %v4929, 0.0
    %v4994 = vmax.f32 %v4930, 0.0
    %v4995 = vmax.f32 %v4931, 0.0
    %v4996 = vmax.f32 %v4932, 0.0
    %v4997 = vmax.f32 %v4933, 0.0
    %v4998 = vmax.f32 %v4934, 0.0
    %v4999 = vmax.f32 %v4935, 0.0
    %v5000 = vmax.f32 %v4936, 0.0
    %v5001 = vmax.f32 %v4937, 0.0
    %v5002 = vmax.f32 %v4938, 0.0
    %v5003 = vmax.f32 %v4939, 0.0
    %v5004 = vmax.f32 %v4940, 0.0
    %v5005 = vmax.f32 %v4941, 0.0
    %v5006 = vmax.f32 %v4942, 0.0
    %v5007 = vmax.f32 %v4943, 0.0
    %v5008 = vmax.f32 %v4944, 0.0
    %v5009 = vmax.f32 %v4945, 0.0
    %v5010 = vmax.f32 %v4946, 0.0
    %v5011 = vmax.f32 %v4947, 0.0
    %v5012 = vmax.f32 %v4948, 0.0
    %v5013 = vmax.f32 %v4949, 0.0
    %v5014 = vmax.f32 %v4950, 0.0
    %v5015 = vmax.f32 %v4951, 0.0
    %v5016 = vmax.f32 %v4952, 0.0
    %v5017 = vmax.f32 %v4953, 0.0
    %v5018 = vmax.f32 %v4954, 0.0
    %v5019 = vmax.f32 %v4955, 0.0
    %v5020 = vmax.f32 %v4956, 0.0
    %v5021 = vmax.f32 %v4957, 0.0
    %v5022 = vmax.f32 %v4958, 0.0
    %v5023 = vmax.f32 %v4959, 0.0
    %v5024 = vmax.f32 %v4960, 0.0
    %v5025 = vmax.f32 %v4961, 0.0
    %v5026 = vmax.f32 %v4962, 0.0
    %v5027 = vmax.f32 %v4963, 0.0
    %v5028 = vmax.f32 %v4964, 0.0
    %v5029 = vmax.f32 %v4965, 0.0
    %v5030 = vmax.f32 %v4966, 0.0
    %v5031 = vmax.f32 %v4967, 0.0
    %5032 = vst.msk [vmem:[%s10] sm:$0xff] %vm4426, %v4968
    %5033 = vst.msk [vmem:[%s10 + $0x8] sm:$0xff] %vm4426, %v4969
    %5034 = vst.msk [vmem:[%s10 + $0x10] sm:$0xff] %vm4426, %v4970
    %5035 = vst.msk [vmem:[%s10 + $0x18] sm:$0xff] %vm4426, %v4971
    %5036 = vst.msk [vmem:[%s10 + $0x20] sm:$0xff] %vm4426, %v4972
    %5037 = vst.msk [vmem:[%s10 + $0x28] sm:$0xff] %vm4426, %v4973
    %5038 = vst.msk [vmem:[%s10 + $0x30] sm:$0xff] %vm4426, %v4974
    %5039 = vst.msk [vmem:[%s10 + $0x38] sm:$0xff] %vm4426, %v4975
    %5040 = vst.msk [vmem:[%s10 + $0x40] sm:$0xff] %vm4426, %v4976
    %5041 = vst.msk [vmem:[%s10 + $0x48] sm:$0xff] %vm4426, %v4977
    %5042 = vst.msk [vmem:[%s10 + $0x50] sm:$0xff] %vm4426, %v4978
    %5043 = vst.msk [vmem:[%s10 + $0x58] sm:$0xff] %vm4426, %v4979
    %5044 = vst.msk [vmem:[%s10 + $0x60] sm:$0xff] %vm4426, %v4980
    %5045 = vst.msk [vmem:[%s10 + $0x68] sm:$0xff] %vm4426, %v4981
    %5046 = vst.msk [vmem:[%s10 + $0x70] sm:$0xff] %vm4426, %v4982
    %5047 = vst.msk [vmem:[%s10 + $0x78] sm:$0xff] %vm4426, %v4983
    %5048 = vst.msk [vmem:[%s10 + $0x80] sm:$0xff] %vm4426, %v4984
    %5049 = vst.msk [vmem:[%s10 + $0x88] sm:$0xff] %vm4426, %v4985
    %5050 = vst.msk [vmem:[%s10 + $0x90] sm:$0xff] %vm4426, %v4986
    %5051 = vst.msk [vmem:[%s10 + $0x98] sm:$0xff] %vm4426, %v4987
    %5052 = vst.msk [vmem:[%s10 + $0xa0] sm:$0xff] %vm4426, %v4988
    %5053 = vst.msk [vmem:[%s10 + $0xa8] sm:$0xff] %vm4426, %v4989
    %5054 = vst.msk [vmem:[%s10 + $0xb0] sm:$0xff] %vm4426, %v4990
    %5055 = vst.msk [vmem:[%s10 + $0xb8] sm:$0xff] %vm4426, %v4991
    %5056 = vst.msk [vmem:[%s10 + $0xc0] sm:$0xff] %vm4426, %v4992
    %5057 = vst.msk [vmem:[%s10 + $0xc8] sm:$0xff] %vm4426, %v4993
    %5058 = vst.msk [vmem:[%s10 + $0xd0] sm:$0xff] %vm4426, %v4994
    %5059 = vst.msk [vmem:[%s10 + $0xd8] sm:$0xff] %vm4426, %v4995
    %5060 = vst.msk [vmem:[%s10 + $0xe0] sm:$0xff] %vm4426, %v4996
    %5061 = vst.msk [vmem:[%s10 + $0xe8] sm:$0xff] %vm4426, %v4997
    %5062 = vst.msk [vmem:[%s10 + $0xf0] sm:$0xff] %vm4426, %v4998
    %5063 = vst.msk [vmem:[%s10 + $0xf8] sm:$0xff] %vm4426, %v4999
    %5064 = vst.msk [vmem:[%s10 + $0x100] sm:$0xff] %vm4426, %v5000
    %5065 = vst.msk [vmem:[%s10 + $0x108] sm:$0xff] %vm4426, %v5001
    %5066 = vst.msk [vmem:[%s10 + $0x110] sm:$0xff] %vm4426, %v5002
    %5067 = vst.msk [vmem:[%s10 + $0x118] sm:$0xff] %vm4426, %v5003
    %5068 = vst.msk [vmem:[%s10 + $0x120] sm:$0xff] %vm4426, %v5004
    %5069 = vst.msk [vmem:[%s10 + $0x128] sm:$0xff] %vm4426, %v5005
    %5070 = vst.msk [vmem:[%s10 + $0x130] sm:$0xff] %vm4426, %v5006
    %5071 = vst.msk [vmem:[%s10 + $0x138] sm:$0xff] %vm4426, %v5007
    %5072 = vst.msk [vmem:[%s10 + $0x140] sm:$0xff] %vm4426, %v5008
    %5073 = vst.msk [vmem:[%s10 + $0x148] sm:$0xff] %vm4426, %v5009
    %5074 = vst.msk [vmem:[%s10 + $0x150] sm:$0xff] %vm4426, %v5010
    %5075 = vst.msk [vmem:[%s10 + $0x158] sm:$0xff] %vm4426, %v5011
    %5076 = vst.msk [vmem:[%s10 + $0x160] sm:$0xff] %vm4426, %v5012
    %5077 = vst.msk [vmem:[%s10 + $0x168] sm:$0xff] %vm4426, %v5013
    %5078 = vst.msk [vmem:[%s10 + $0x170] sm:$0xff] %vm4426, %v5014
    %5079 = vst.msk [vmem:[%s10 + $0x178] sm:$0xff] %vm4426, %v5015
    %5080 = vst.msk [vmem:[%s10 + $0x180] sm:$0xff] %vm4426, %v5016
    %5081 = vst.msk [vmem:[%s10 + $0x188] sm:$0xff] %vm4426, %v5017
    %5082 = vst.msk [vmem:[%s10 + $0x190] sm:$0xff] %vm4426, %v5018
    %5083 = vst.msk [vmem:[%s10 + $0x198] sm:$0xff] %vm4426, %v5019
    %5084 = vst.msk [vmem:[%s10 + $0x1a0] sm:$0xff] %vm4426, %v5020
    %5085 = vst.msk [vmem:[%s10 + $0x1a8] sm:$0xff] %vm4426, %v5021
    %5086 = vst.msk [vmem:[%s10 + $0x1b0] sm:$0xff] %vm4426, %v5022
    %5087 = vst.msk [vmem:[%s10 + $0x1b8] sm:$0xff] %vm4426, %v5023
    %5088 = vst.msk [vmem:[%s10 + $0x1c0] sm:$0xff] %vm4426, %v5024
    %5089 = vst.msk [vmem:[%s10 + $0x1c8] sm:$0xff] %vm4426, %v5025
    %5090 = vst.msk [vmem:[%s10 + $0x1d0] sm:$0xff] %vm4426, %v5026
    %5091 = vst.msk [vmem:[%s10 + $0x1d8] sm:$0xff] %vm4426, %v5027
    %5092 = vst.msk [vmem:[%s10 + $0x1e0] sm:$0xff] %vm4426, %v5028
    %5093 = vst.msk [vmem:[%s10 + $0x1e8] sm:$0xff] %vm4426, %v5029
    %5094 = vst.msk [vmem:[%s10 + $0x1f0] sm:$0xff] %vm4426, %v5030
    %5095 = vst.msk [vmem:[%s10 + $0x1f8] sm:$0xff] %vm4426, %v5031
    // Predicated region
    $region30: #{tpu_custom_call.1} parent=1 // pred_check
      _
    $region31: #{tpu_custom_call.1} parent=1 // pred_check_branch
      %5097 = sbr.rel (0) target = $region33
    $region32: #{tpu_custom_call.1} parent=1 // pred_region
      %s5099 = ssub.s32 8192, 8192
      %5100 = vsyncadd [#allocation4], %s5099
      %s5101 = sshll.u32 [#allocation3], 4
      %s5102 = int_to_ptr.vmem [resolvable:$true] %s5101
      %5107 = dma.vmem_to_hbm [thread:$0]  %s5102, 8192, %s7, [#allocation4], 128, 128, 8
    $region33: #{tpu_custom_call.1} parent=1 // pred_fallthru
      _
    // Predicated region
    $region34: #{tpu_custom_call.1} parent=1 // pred_check
      _
    $region35: #{tpu_custom_call.1} parent=1 // pred_check_branch
      %5109 = sbr.rel (0) target = $region37
    $region36: #{tpu_custom_call.1} parent=1 // pred_region
      %s5111 = ssub.s32 8192, 8192
      %5112 = vsyncadd [#allocation6], %s5111
      %s5113 = sshll.u32 [#allocation5], 4
      %s5114 = int_to_ptr.vmem [resolvable:$true] %s5113
      %5119 = dma.vmem_to_hbm [thread:$0]  %s5114, 8192, %s8, [#allocation6], 128, 128, 8
    $region37: #{tpu_custom_call.1} parent=1 // pred_fallthru
      _
    // Predicated region
    $region38: #{tpu_custom_call.1} parent=1 // pred_check
      _
    $region39: #{tpu_custom_call.1} parent=1 // pred_check_branch
      %5121 = sbr.rel (0) target = $region41
    $region40: #{tpu_custom_call.1} parent=1 // pred_region
      %s5123 = ssub.s32 8192, 8192
      %5124 = vsyncadd [#allocation6], %s5123
      %s5125 = sshll.u32 [#allocation7], 4
      %s5126 = int_to_ptr.vmem [resolvable:$true] %s5125
      %5131 = dma.vmem_to_hbm [thread:$0]  %s5126, 8192, %s9, [#allocation6], 128, 128, 8
    $region41: #{tpu_custom_call.1} parent=1 // pred_fallthru
      _
    // Predicated region
    $region42: #{tpu_custom_call.1} parent=1 // pred_check
      _
    $region43: #{tpu_custom_call.1} parent=1 // pred_check_branch
      %5133 = sbr.rel (0) target = $region45
    $region44: #{tpu_custom_call.1} parent=1 // pred_region
      _
    $region45: #{tpu_custom_call.1} parent=1 // pred_fallthru
      _
    // Predicated region
    $region46: #{tpu_custom_call.1} parent=1 // pred_check
      _
    $region47: #{tpu_custom_call.1} parent=1 // pred_check_branch
      %5135 = sbr.rel (0) target = $region49
    $region48: #{tpu_custom_call.1} parent=1 // pred_region
      %5136 = dma.done [#allocation4], 8192
    $region49: #{tpu_custom_call.1} parent=1 // pred_fallthru
      _
    // Predicated region
    $region50: #{tpu_custom_call.1} parent=1 // pred_check
      _
    $region51: #{tpu_custom_call.1} parent=1 // pred_check_branch
      %5138 = sbr.rel (0) target = $region53
    $region52: #{tpu_custom_call.1} parent=1 // pred_region
      %5139 = dma.done [#allocation6], 8192
    $region53: #{tpu_custom_call.1} parent=1 // pred_fallthru
      _
    // Predicated region
    $region54: #{tpu_custom_call.1} parent=1 // pred_check
      _
    $region55: #{tpu_custom_call.1} parent=1 // pred_check_branch
      %5141 = sbr.rel (0) target = $region57
    $region56: #{tpu_custom_call.1} parent=1 // pred_region
      %5142 = dma.done [#allocation6], 8192
    $region57: #{tpu_custom_call.1} parent=1 // pred_fallthru
      _
    // Predicated region
    $region58: #{tpu_custom_call.1} parent=1 // pred_check
      _
    $region59: #{tpu_custom_call.1} parent=1 // pred_check_branch
      %5144 = sbr.rel (0) target = $region61
    $region60: #{tpu_custom_call.1} parent=1 // pred_region
      _
    $region61: #{tpu_custom_call.1} parent=1 // pred_fallthru
      _
    %5145 = vsyncpa [#allocation4], 1
    %5146 = vsyncpa [#allocation6], 1

</llo_original>
